<compile_context>
chip_gen: v6e
topology: v6e:2x2x1
jax: 0.10.0
libtpu: 0.0.40
codegen_flags: <defaults>
</compile_context>

<pallas_src>
import functools

import jax
import jax.numpy as jnp
from jax.experimental import pallas as pl
from jax.experimental.pallas import tpu as pltpu

HIDDEN = 8                  # hidden channel width of the synthetic UNet
PAD = 64                    # zero halo (lanes) on each side of each image
SLAB_COLS = 256             # lane-padded parameter slab width


def _unet_kernel(x_ref, p_ref, o_ref, pad_ref, im_ref, *, c, hid, h, w,
                 n_img, pad):
    """Fused mini U-Net, whole batch in one invocation.

    x_ref  : (N, c, h*w)             input, flattened spatial on lanes
    p_ref  : (3*hid, SLAB_COLS)      packed weights + biases
               rows [0,hid)       enc: W (hid,72)  cols [0,72),  bias col 72
               rows [hid,2*hid)   mid: W (hid,72)  cols [0,72),  bias col 72
               rows [2*hid,3*hid) dec: W (c,144)   cols [0,144), bias col 144
                                       (rows >= 2*hid+c are zero)
    o_ref  : (hid, N*h*w)            images side by side on lanes; rows [0,c)
                                     are the real output channels
    pad_ref: (2*hid, N*(h*w+2*pad))  zero-haloed flat staging buffer
    im_ref : (9*2*hid, N*h*w)        im2row stack (taps strided by 8/16 rows)
    """
    hw = h * w
    seg = hw + 2 * pad
    shift_bits = w.bit_length() - 1            # w is a power of two

    # Zero the staging buffer once (single grid step): halo columns give the
    # zero padding for every conv; rows [c, hid) give the zero Cin-padding
    # channels for the encoder conv.
    pad_ref[...] = jnp.zeros_like(pad_ref)

    # ---- masks, hoisted & pre-broadcast (computed exactly once) ----------
    f = jax.lax.broadcasted_iota(jnp.int32, (1, hw), 1)
    col = f & (w - 1)

    def lane_masks(dil, rows):
        return (jnp.broadcast_to(col >= dil, (rows, hw)),       # dx = -1 ok
                jnp.broadcast_to(col < w - dil, (rows, hw)))    # dx = +1 ok

    tap_masks = {(1, hid): lane_masks(1, hid),
                 (2, hid): lane_masks(2, hid),
                 (1, 2 * hid): lane_masks(1, 2 * hid)}
    col_even = jnp.broadcast_to((f & 1) == 0, (hid, hw))
    row_even = jnp.broadcast_to(((f >> shift_bits) & 1) == 0, (hid, hw))

    def put(val, r0, n):
        # stage a (rows, hw) activation into image n's segment (never touches
        # the halo columns, so they stay zero for the whole kernel).
        pad_ref[r0:r0 + val.shape[0],
                n * seg + pad:n * seg + pad + hw] = val

    def conv(n_pad, dil, wr0, relu):
        """3x3 conv (dilation `dil`, zero padding) of whatever activation is
        staged at pad_ref[0:n_pad]; ONE MXU matmul over the whole batch."""
        left, right = tap_masks[(dil, n_pad)]
        for ky in range(3):
            for kx in range(3):
                dy, dx = ky - 1, kx - 1
                k = dil * (dy * w + dx)
                t = ky * 3 + kx
                for n in range(n_img):
                    v = pad_ref[0:n_pad,
                                n * seg + pad + k:n * seg + pad + k + hw]
                    if dx < 0:
                        v = jnp.where(left, v, 0.0)    # column wrap of left taps
                    elif dx > 0:
                        v = jnp.where(right, v, 0.0)   # column wrap of right taps
                    # vertical out-of-image taps read the zero halo: no mask.
                    im_ref[t * n_pad:(t + 1) * n_pad,
                           n * hw:(n + 1) * hw] = v
        wmat = p_ref[wr0:wr0 + hid, 0:9 * n_pad]
        bias = p_ref[wr0:wr0 + hid, 9 * n_pad:9 * n_pad + 1]
        acc = jnp.dot(wmat, im_ref[0:9 * n_pad, :],
                      preferred_element_type=jnp.float32) + bias
        return jnp.maximum(acc, 0.0) if relu else acc

    # ---- encoder conv ----------------------------------------------------
    for n in range(n_img):
        put(x_ref[n].astype(jnp.float32), 0, n)       # rows [c,hid) stay zero
    e = conv(hid, 1, 0, relu=True)                            # (hid, N*hw)

    # ---- stage e once (reused later by the decoder skip concat), then do
    #      the fused 2x2 max pool + nearest 2x replicate from shifted reads.
    #      Halo / row-wrapped reads only land in the branch that the parity
    #      selects discard, so the result is the exact block max everywhere.
    for n in range(n_img):
        put(e[:, n * hw:(n + 1) * hw], hid, n)
    for n in range(n_img):
        base = n * seg + pad

        def sh(k, _base=base):
            return pad_ref[hid:2 * hid, _base + k:_base + k + hw]

        e_n = e[:, n * hw:(n + 1) * hw]
        hmax = jnp.where(col_even, jnp.maximum(e_n, sh(1)),
                         jnp.maximum(e_n, sh(-1)))
        hmax_dn = jnp.where(col_even, jnp.maximum(sh(w), sh(w + 1)),
                            jnp.maximum(sh(w), sh(w - 1)))
        hmax_up = jnp.where(col_even, jnp.maximum(sh(-w), sh(-w + 1)),
                            jnp.maximum(sh(-w), sh(-w - 1)))
        p_up = jnp.where(row_even, jnp.maximum(hmax, hmax_dn),
                         jnp.maximum(hmax, hmax_up))   # block max, replicated
        put(p_up, 0, n)

    # ---- mid conv: conv(pad=1) on the pooled grid followed by nearest 2x
    #      upsample == dilation-2 conv on the block-replicated map ----------
    u = conv(hid, 2, hid, relu=True)                          # (hid, N*hw)

    # ---- decoder conv on concat([u, e], channels): u -> rows [0,hid);
    #      e is still staged at rows [hid, 2*hid) from the pool step ---------
    for n in range(n_img):
        put(u[:, n * hw:(n + 1) * hw], 0, n)
    out = conv(2 * hid, 1, 2 * hid, relu=False)               # (hid, N*hw)

    o_ref[...] = out.astype(o_ref.dtype)


def _pack_params(params, c, hid):
    """Pack all conv weights + biases into one (3*hid, SLAB_COLS) f32 slab."""
    def flat(wt, cin_pad):
        cin = wt.shape[1]
        wt = jnp.transpose(wt, (0, 2, 3, 1))                 # (Cout,ky,kx,Cin)
        wt = jnp.pad(wt, ((0, 0), (0, 0), (0, 0), (0, cin_pad - cin)))
        return wt.reshape(wt.shape[0], 9 * cin_pad)          # tap-major

    we, be = params["enc"]
    wm, bm = params["mid"]
    wd, bd = params["dec"]
    slab = jnp.zeros((3 * hid, SLAB_COLS), jnp.float32)
    slab = slab.at[0:hid, 0:9 * hid].set(flat(we, hid))
    slab = slab.at[0:hid, 9 * hid].set(be)
    slab = slab.at[hid:2 * hid, 0:9 * hid].set(flat(wm, hid))
    slab = slab.at[hid:2 * hid, 9 * hid].set(bm)
    slab = slab.at[2 * hid:2 * hid + c, 0:9 * 2 * hid].set(flat(wd, 2 * hid))
    slab = slab.at[2 * hid:2 * hid + c, 9 * 2 * hid].set(bd)
    return slab


def unet_forward(params, x_flat, h, w):
    """x_flat: (N, C, H*W) float32 -> (C, N*H*W), images side by side."""
    n, c, hw = x_flat.shape
    hid = HIDDEN
    assert hw == h * w and (w & (w - 1)) == 0
    assert h % 2 == 0 and w % 2 == 0
    assert c <= hid and hid % 8 == 0
    assert 2 * (w + 1) <= PAD                 # halo covers all vertical taps
    assert 9 * 2 * hid + 1 <= SLAB_COLS

    slab = _pack_params(params, c, hid)
    seg = hw + 2 * PAD
    kernel = functools.partial(_unet_kernel, c=c, hid=hid, h=h, w=w,
                               n_img=n, pad=PAD)
    out = pl.pallas_call(
        kernel,
        out_shape=jax.ShapeDtypeStruct((hid, n * hw), jnp.float32),
        grid_spec=pltpu.PrefetchScalarGridSpec(
            num_scalar_prefetch=0,
            grid=(1,),                        # whole batch in one step
            in_specs=[
                pl.BlockSpec((n, c, hw), lambda i: (0, 0, 0)),
                pl.BlockSpec((3 * hid, SLAB_COLS), lambda i: (0, 0)),
            ],
            out_specs=pl.BlockSpec((hid, n * hw), lambda i: (0, 0)),
            scratch_shapes=[
                pltpu.VMEM((2 * hid, n * seg), jnp.float32),       # pad_ref
                pltpu.VMEM((9 * 2 * hid, n * hw), jnp.float32),    # im_ref
            ],
        ),
        compiler_params=pltpu.CompilerParams(
            dimension_semantics=("arbitrary",)),
    )(x_flat, slab)
    return out[0:c]                            # (c, N*hw)


def init_unet_params(key, c, hidden=HIDDEN):
    def conv_init(k, cin, cout):
        kw, kb = jax.random.split(k)
        wt = (jax.random.normal(kw, (cout, cin, 3, 3), jnp.float32)
              / jnp.sqrt(9.0 * cin))
        bs = 0.01 * jax.random.normal(kb, (cout,), jnp.float32)
        return wt, bs

    k1, k2, k3 = jax.random.split(key, 3)
    return {"enc": conv_init(k1, c, hidden),
            "mid": conv_init(k2, hidden, hidden),
            "dec": conv_init(k3, 2 * hidden, c)}


@jax.jit
def model2_forward(params, x_nchw):
    """Matches Model2.forward: out1 = U1(x); return [out1]."""
    n, c, h, w = x_nchw.shape
    x_flat = x_nchw.reshape(n, c, h * w)       # NCHW-flattened kernel layout
    out = unet_forward(params["U1"], x_flat, h, w)          # (c, N*h*w)
    out1 = jnp.transpose(out.reshape(c, n, h, w), (1, 0, 2, 3))
    return [out1]


# ------------------------- pure-JAX reference -------------------------------
def _unet_reference(params, x):
    def conv(v, wt, b):
        y = jax.lax.conv_general_dilated(
            v, wt, window_strides=(1, 1), padding="SAME",
            dimension_numbers=("NCHW", "OIHW", "NCHW"),
            precision=jax.lax.Precision.HIGHEST)
        return y + b[None, :, None, None]

    we, be = params["enc"]
    wm, bm = params["mid"]
    wd, bd = params["dec"]
    e = jax.nn.relu(conv(x, we, be))
    n, ch, hh, ww = e.shape
    p = e.reshape(n, ch, hh // 2, 2, ww // 2, 2).max(axis=(3, 5))
    m = jax.nn.relu(conv(p, wm, bm))
    u = jnp.repeat(jnp.repeat(m, 2, axis=2), 2, axis=3)     # nearest 2x
    return conv(jnp.concatenate([u, e], axis=1), wd, bd)


def model2_reference(params, x):
    return [_unet_reference(params["U1"], x)]


if __name__ == "__main__":
    key = jax.random.PRNGKey(0)
    kx, k1 = jax.random.split(key)
    c = 4
    x = jax.random.normal(kx, (2, c, 16, 16), jnp.float32)  # NCHW like PyTorch
    params = {"U1": init_unet_params(k1, c)}

    (out1,) = model2_forward(params, x)
    jax.block_until_ready(out1)

    assert out1.shape == (2, c, 16, 16), out1.shape
    assert out1.dtype == jnp.float32
    assert bool(jnp.all(jnp.isfinite(out1)))

    (ref1,) = model2_reference(params, x)
    assert bool(jnp.allclose(out1, ref1, rtol=5e-2, atol=5e-2)), \
        float(jnp.max(jnp.abs(out1 - ref1)))
    print("KERNEL_OK")
</pallas_src>

<mosaic_0001>
module attributes {stable_mosaic.version = 11 : i64} {
  func.func @_unet_kernel(%arg0: i32, %arg1: memref<2x4x256xf32, #tpu.memory_space<vmem>>, %arg2: memref<24x256xf32, #tpu.memory_space<vmem>>, %arg3: memref<8x512xf32, #tpu.memory_space<vmem>>, %arg4: memref<16x768xf32, #tpu.memory_space<vmem>>, %arg5: memref<144x512xf32, #tpu.memory_space<vmem>>) attributes {dimension_semantics = [#tpu.dimension_semantics<arbitrary>], iteration_bounds = array<i64: 1>, scalar_prefetch = 0 : i64, scratch_operands = 2 : i64, tpu.core_type = #tpu.core_type<tc>, window_params = [{pipeline_mode = #tpu.pipeline_mode<synchronous>, transform_indices = @transform_0, window_bounds = array<i64: 2, 4, 256>}, {pipeline_mode = #tpu.pipeline_mode<synchronous>, transform_indices = @transform_1, window_bounds = array<i64: 24, 256>}, {pipeline_mode = #tpu.pipeline_mode<synchronous>, transform_indices = @transform_2, window_bounds = array<i64: 8, 512>}]} {
    %cst = arith.constant 0.000000e+00 : f32
    %0 = vector.broadcast %cst : f32 to vector<16x768xf32>
    %c0 = arith.constant 0 : index
    %c0_0 = arith.constant 0 : index
    %1 = vector.load %arg4[%c0, %c0_0] : memref<16x768xf32, #tpu.memory_space<vmem>>, vector<16x768xf32>
    tpu.vector_store %arg4[%c0, %c0_0], %0 {strides = array<i32>} : memref<16x768xf32, #tpu.memory_space<vmem>>, vector<16x768xf32>,
    %2 = tpu.iota {dimensions = array<i32: 1>} : vector<1x256xi32>
    %c15_i32 = arith.constant 15 : i32
    %3 = vector.broadcast %c15_i32 : i32 to vector<1x256xi32>
    %4 = arith.andi %2, %3 : vector<1x256xi32>
    %c1_i32 = arith.constant 1 : i32
    %5 = vector.broadcast %c1_i32 : i32 to vector<1x256xi32>
    %6 = arith.cmpi sge, %4, %5 : vector<1x256xi32>
    %7 = vector.shape_cast %6 : vector<1x256xi1> to vector<1x256xi1>
    %8 = vector.broadcast %7 : vector<1x256xi1> to vector<8x256xi1>
    %c15_i32_1 = arith.constant 15 : i32
    %9 = vector.broadcast %c15_i32_1 : i32 to vector<1x256xi32>
    %10 = arith.cmpi slt, %4, %9 : vector<1x256xi32>
    %11 = vector.shape_cast %10 : vector<1x256xi1> to vector<1x256xi1>
    %12 = vector.broadcast %11 : vector<1x256xi1> to vector<8x256xi1>
    %c2_i32 = arith.constant 2 : i32
    %13 = vector.broadcast %c2_i32 : i32 to vector<1x256xi32>
    %14 = arith.cmpi sge, %4, %13 : vector<1x256xi32>
    %15 = vector.shape_cast %14 : vector<1x256xi1> to vector<1x256xi1>
    %16 = vector.broadcast %15 : vector<1x256xi1> to vector<8x256xi1>
    %c14_i32 = arith.constant 14 : i32
    %17 = vector.broadcast %c14_i32 : i32 to vector<1x256xi32>
    %18 = arith.cmpi slt, %4, %17 : vector<1x256xi32>
    %19 = vector.shape_cast %18 : vector<1x256xi1> to vector<1x256xi1>
    %20 = vector.broadcast %19 : vector<1x256xi1> to vector<8x256xi1>
    %c1_i32_2 = arith.constant 1 : i32
    %21 = vector.broadcast %c1_i32_2 : i32 to vector<1x256xi32>
    %22 = arith.cmpi sge, %4, %21 : vector<1x256xi32>
    %23 = vector.shape_cast %22 : vector<1x256xi1> to vector<1x256xi1>
    %24 = vector.broadcast %23 : vector<1x256xi1> to vector<16x256xi1>
    %c15_i32_3 = arith.constant 15 : i32
    %25 = vector.broadcast %c15_i32_3 : i32 to vector<1x256xi32>
    %26 = arith.cmpi slt, %4, %25 : vector<1x256xi32>
    %27 = vector.shape_cast %26 : vector<1x256xi1> to vector<1x256xi1>
    %28 = vector.broadcast %27 : vector<1x256xi1> to vector<16x256xi1>
    %c1_i32_4 = arith.constant 1 : i32
    %29 = vector.broadcast %c1_i32_4 : i32 to vector<1x256xi32>
    %30 = arith.andi %2, %29 : vector<1x256xi32>
    %c0_i32 = arith.constant 0 : i32
    %31 = vector.broadcast %c0_i32 : i32 to vector<1x256xi32>
    %32 = arith.cmpi eq, %30, %31 : vector<1x256xi32>
    %33 = vector.shape_cast %32 : vector<1x256xi1> to vector<1x256xi1>
    %34 = vector.broadcast %33 : vector<1x256xi1> to vector<8x256xi1>
    %c4_i32 = arith.constant 4 : i32
    %35 = vector.broadcast %c4_i32 : i32 to vector<1x256xi32>
    %36 = arith.shrsi %2, %35 : vector<1x256xi32>
    %c1_i32_5 = arith.constant 1 : i32
    %37 = vector.broadcast %c1_i32_5 : i32 to vector<1x256xi32>
    %38 = arith.andi %36, %37 : vector<1x256xi32>
    %c0_i32_6 = arith.constant 0 : i32
    %39 = vector.broadcast %c0_i32_6 : i32 to vector<1x256xi32>
    %40 = arith.cmpi eq, %38, %39 : vector<1x256xi32>
    %41 = vector.shape_cast %40 : vector<1x256xi1> to vector<1x256xi1>
    %42 = vector.broadcast %41 : vector<1x256xi1> to vector<8x256xi1>
    %c0_7 = arith.constant 0 : index
    %c0_8 = arith.constant 0 : index
    %c0_9 = arith.constant 0 : index
    %43 = vector.load %arg1[%c0_7, %c0_8, %c0_9] : memref<2x4x256xf32, #tpu.memory_space<vmem>>, vector<1x4x256xf32>
    %44 = vector.shape_cast %43 : vector<1x4x256xf32> to vector<4x256xf32>
    %c0_10 = arith.constant 0 : index
    %c64 = arith.constant 64 : index
    %45 = vector.load %arg4[%c0_10, %c64] : memref<16x768xf32, #tpu.memory_space<vmem>>, vector<4x256xf32>
    tpu.vector_store %arg4[%c0_10, %c64], %44 {strides = array<i32>} : memref<16x768xf32, #tpu.memory_space<vmem>>, vector<4x256xf32>,
    %c1 = arith.constant 1 : index
    %c0_11 = arith.constant 0 : index
    %c0_12 = arith.constant 0 : index
    %46 = vector.load %arg1[%c1, %c0_11, %c0_12] : memref<2x4x256xf32, #tpu.memory_space<vmem>>, vector<1x4x256xf32>
    %47 = vector.shape_cast %46 : vector<1x4x256xf32> to vector<4x256xf32>
    %c0_13 = arith.constant 0 : index
    %c448 = arith.constant 448 : index
    %48 = vector.load %arg4[%c0_13, %c448] : memref<16x768xf32, #tpu.memory_space<vmem>>, vector<4x256xf32>
    tpu.vector_store %arg4[%c0_13, %c448], %47 {strides = array<i32>} : memref<16x768xf32, #tpu.memory_space<vmem>>, vector<4x256xf32>,
    %c0_14 = arith.constant 0 : index
    %c47 = arith.constant 47 : index
    %49 = vector.load %arg4[%c0_14, %c47] : memref<16x768xf32, #tpu.memory_space<vmem>>, vector<8x256xf32>
    %cst_15 = arith.constant 0.000000e+00 : f32
    %50 = vector.broadcast %cst_15 : f32 to vector<8x256xf32>
    %51 = arith.select %8, %49, %50 : vector<8x256xi1>, vector<8x256xf32>
    %c0_16 = arith.constant 0 : index
    %c0_17 = arith.constant 0 : index
    %52 = vector.load %arg5[%c0_16, %c0_17] : memref<144x512xf32, #tpu.memory_space<vmem>>, vector<8x256xf32>
    tpu.vector_store %arg5[%c0_16, %c0_17], %51 {strides = array<i32>} : memref<144x512xf32, #tpu.memory_space<vmem>>, vector<8x256xf32>,
    %c0_18 = arith.constant 0 : index
    %c431 = arith.constant 431 : index
    %53 = vector.load %arg4[%c0_18, %c431] : memref<16x768xf32, #tpu.memory_space<vmem>>, vector<8x256xf32>
    %cst_19 = arith.constant 0.000000e+00 : f32
    %54 = vector.broadcast %cst_19 : f32 to vector<8x256xf32>
    %55 = arith.select %8, %53, %54 : vector<8x256xi1>, vector<8x256xf32>
    %c0_20 = arith.constant 0 : index
    %c256 = arith.constant 256 : index
    %56 = vector.load %arg5[%c0_20, %c256] : memref<144x512xf32, #tpu.memory_space<vmem>>, vector<8x256xf32>
    tpu.vector_store %arg5[%c0_20, %c256], %55 {strides = array<i32>} : memref<144x512xf32, #tpu.memory_space<vmem>>, vector<8x256xf32>,
    %c0_21 = arith.constant 0 : index
    %c48 = arith.constant 48 : index
    %57 = vector.load %arg4[%c0_21, %c48] : memref<16x768xf32, #tpu.memory_space<vmem>>, vector<8x256xf32>
    %c8 = arith.constant 8 : index
    %c0_22 = arith.constant 0 : index
    %58 = vector.load %arg5[%c8, %c0_22] : memref<144x512xf32, #tpu.memory_space<vmem>>, vector<8x256xf32>
    tpu.vector_store %arg5[%c8, %c0_22], %57 {strides = array<i32>} : memref<144x512xf32, #tpu.memory_space<vmem>>, vector<8x256xf32>,
    %c0_23 = arith.constant 0 : index
    %c432 = arith.constant 432 : index
    %59 = vector.load %arg4[%c0_23, %c432] : memref<16x768xf32, #tpu.memory_space<vmem>>, vector<8x256xf32>
    %c8_24 = arith.constant 8 : index
    %c256_25 = arith.constant 256 : index
    %60 = vector.load %arg5[%c8_24, %c256_25] : memref<144x512xf32, #tpu.memory_space<vmem>>, vector<8x256xf32>
    tpu.vector_store %arg5[%c8_24, %c256_25], %59 {strides = array<i32>} : memref<144x512xf32, #tpu.memory_space<vmem>>, vector<8x256xf32>,
    %c0_26 = arith.constant 0 : index
    %c49 = arith.constant 49 : index
    %61 = vector.load %arg4[%c0_26, %c49] : memref<16x768xf32, #tpu.memory_space<vmem>>, vector<8x256xf32>
    %cst_27 = arith.constant 0.000000e+00 : f32
    %62 = vector.broadcast %cst_27 : f32 to vector<8x256xf32>
    %63 = arith.select %12, %61, %62 : vector<8x256xi1>, vector<8x256xf32>
    %c16 = arith.constant 16 : index
    %c0_28 = arith.constant 0 : index
    %64 = vector.load %arg5[%c16, %c0_28] : memref<144x512xf32, #tpu.memory_space<vmem>>, vector<8x256xf32>
    tpu.vector_store %arg5[%c16, %c0_28], %63 {strides = array<i32>} : memref<144x512xf32, #tpu.memory_space<vmem>>, vector<8x256xf32>,
    %c0_29 = arith.constant 0 : index
    %c433 = arith.constant 433 : index
    %65 = vector.load %arg4[%c0_29, %c433] : memref<16x768xf32, #tpu.memory_space<vmem>>, vector<8x256xf32>
    %cst_30 = arith.constant 0.000000e+00 : f32
    %66 = vector.broadcast %cst_30 : f32 to vector<8x256xf32>
    %67 = arith.select %12, %65, %66 : vector<8x256xi1>, vector<8x256xf32>
    %c16_31 = arith.constant 16 : index
    %c256_32 = arith.constant 256 : index
    %68 = vector.load %arg5[%c16_31, %c256_32] : memref<144x512xf32, #tpu.memory_space<vmem>>, vector<8x256xf32>
    tpu.vector_store %arg5[%c16_31, %c256_32], %67 {strides = array<i32>} : memref<144x512xf32, #tpu.memory_space<vmem>>, vector<8x256xf32>,
    %c0_33 = arith.constant 0 : index
    %c63 = arith.constant 63 : index
    %69 = vector.load %arg4[%c0_33, %c63] : memref<16x768xf32, #tpu.memory_space<vmem>>, vector<8x256xf32>
    %cst_34 = arith.constant 0.000000e+00 : f32
    %70 = vector.broadcast %cst_34 : f32 to vector<8x256xf32>
    %71 = arith.select %8, %69, %70 : vector<8x256xi1>, vector<8x256xf32>
    %c24 = arith.constant 24 : index
    %c0_35 = arith.constant 0 : index
    %72 = vector.load %arg5[%c24, %c0_35] : memref<144x512xf32, #tpu.memory_space<vmem>>, vector<8x256xf32>
    tpu.vector_store %arg5[%c24, %c0_35], %71 {strides = array<i32>} : memref<144x512xf32, #tpu.memory_space<vmem>>, vector<8x256xf32>,
    %c0_36 = arith.constant 0 : index
    %c447 = arith.constant 447 : index
    %73 = vector.load %arg4[%c0_36, %c447] : memref<16x768xf32, #tpu.memory_space<vmem>>, vector<8x256xf32>
    %cst_37 = arith.constant 0.000000e+00 : f32
    %74 = vector.broadcast %cst_37 : f32 to vector<8x256xf32>
    %75 = arith.select %8, %73, %74 : vector<8x256xi1>, vector<8x256xf32>
    %c24_38 = arith.constant 24 : index
    %c256_39 = arith.constant 256 : index
    %76 = vector.load %arg5[%c24_38, %c256_39] : memref<144x512xf32, #tpu.memory_space<vmem>>, vector<8x256xf32>
    tpu.vector_store %arg5[%c24_38, %c256_39], %75 {strides = array<i32>} : memref<144x512xf32, #tpu.memory_space<vmem>>, vector<8x256xf32>,
    %c0_40 = arith.constant 0 : index
    %c64_41 = arith.constant 64 : index
    %77 = vector.load %arg4[%c0_40, %c64_41] : memref<16x768xf32, #tpu.memory_space<vmem>>, vector<8x256xf32>
    %c32 = arith.constant 32 : index
    %c0_42 = arith.constant 0 : index
    %78 = vector.load %arg5[%c32, %c0_42] : memref<144x512xf32, #tpu.memory_space<vmem>>, vector<8x256xf32>
    tpu.vector_store %arg5[%c32, %c0_42], %77 {strides = array<i32>} : memref<144x512xf32, #tpu.memory_space<vmem>>, vector<8x256xf32>,
    %c0_43 = arith.constant 0 : index
    %c448_44 = arith.constant 448 : index
    %79 = vector.load %arg4[%c0_43, %c448_44] : memref<16x768xf32, #tpu.memory_space<vmem>>, vector<8x256xf32>
    %c32_45 = arith.constant 32 : index
    %c256_46 = arith.constant 256 : index
    %80 = vector.load %arg5[%c32_45, %c256_46] : memref<144x512xf32, #tpu.memory_space<vmem>>, vector<8x256xf32>
    tpu.vector_store %arg5[%c32_45, %c256_46], %79 {strides = array<i32>} : memref<144x512xf32, #tpu.memory_space<vmem>>, vector<8x256xf32>,
    %c0_47 = arith.constant 0 : index
    %c65 = arith.constant 65 : index
    %81 = vector.load %arg4[%c0_47, %c65] : memref<16x768xf32, #tpu.memory_space<vmem>>, vector<8x256xf32>
    %cst_48 = arith.constant 0.000000e+00 : f32
    %82 = vector.broadcast %cst_48 : f32 to vector<8x256xf32>
    %83 = arith.select %12, %81, %82 : vector<8x256xi1>, vector<8x256xf32>
    %c40 = arith.constant 40 : index
    %c0_49 = arith.constant 0 : index
    %84 = vector.load %arg5[%c40, %c0_49] : memref<144x512xf32, #tpu.memory_space<vmem>>, vector<8x256xf32>
    tpu.vector_store %arg5[%c40, %c0_49], %83 {strides = array<i32>} : memref<144x512xf32, #tpu.memory_space<vmem>>, vector<8x256xf32>,
    %c0_50 = arith.constant 0 : index
    %c449 = arith.constant 449 : index
    %85 = vector.load %arg4[%c0_50, %c449] : memref<16x768xf32, #tpu.memory_space<vmem>>, vector<8x256xf32>
    %cst_51 = arith.constant 0.000000e+00 : f32
    %86 = vector.broadcast %cst_51 : f32 to vector<8x256xf32>
    %87 = arith.select %12, %85, %86 : vector<8x256xi1>, vector<8x256xf32>
    %c40_52 = arith.constant 40 : index
    %c256_53 = arith.constant 256 : index
    %88 = vector.load %arg5[%c40_52, %c256_53] : memref<144x512xf32, #tpu.memory_space<vmem>>, vector<8x256xf32>
    tpu.vector_store %arg5[%c40_52, %c256_53], %87 {strides = array<i32>} : memref<144x512xf32, #tpu.memory_space<vmem>>, vector<8x256xf32>,
    %c0_54 = arith.constant 0 : index
    %c79 = arith.constant 79 : index
    %89 = vector.load %arg4[%c0_54, %c79] : memref<16x768xf32, #tpu.memory_space<vmem>>, vector<8x256xf32>
    %cst_55 = arith.constant 0.000000e+00 : f32
    %90 = vector.broadcast %cst_55 : f32 to vector<8x256xf32>
    %91 = arith.select %8, %89, %90 : vector<8x256xi1>, vector<8x256xf32>
    %c48_56 = arith.constant 48 : index
    %c0_57 = arith.constant 0 : index
    %92 = vector.load %arg5[%c48_56, %c0_57] : memref<144x512xf32, #tpu.memory_space<vmem>>, vector<8x256xf32>
    tpu.vector_store %arg5[%c48_56, %c0_57], %91 {strides = array<i32>} : memref<144x512xf32, #tpu.memory_space<vmem>>, vector<8x256xf32>,
    %c0_58 = arith.constant 0 : index
    %c463 = arith.constant 463 : index
    %93 = vector.load %arg4[%c0_58, %c463] : memref<16x768xf32, #tpu.memory_space<vmem>>, vector<8x256xf32>
    %cst_59 = arith.constant 0.000000e+00 : f32
    %94 = vector.broadcast %cst_59 : f32 to vector<8x256xf32>
    %95 = arith.select %8, %93, %94 : vector<8x256xi1>, vector<8x256xf32>
    %c48_60 = arith.constant 48 : index
    %c256_61 = arith.constant 256 : index
    %96 = vector.load %arg5[%c48_60, %c256_61] : memref<144x512xf32, #tpu.memory_space<vmem>>, vector<8x256xf32>
    tpu.vector_store %arg5[%c48_60, %c256_61], %95 {strides = array<i32>} : memref<144x512xf32, #tpu.memory_space<vmem>>, vector<8x256xf32>,
    %c0_62 = arith.constant 0 : index
    %c80 = arith.constant 80 : index
    %97 = vector.load %arg4[%c0_62, %c80] : memref<16x768xf32, #tpu.memory_space<vmem>>, vector<8x256xf32>
    %c56 = arith.constant 56 : index
    %c0_63 = arith.constant 0 : index
    %98 = vector.load %arg5[%c56, %c0_63] : memref<144x512xf32, #tpu.memory_space<vmem>>, vector<8x256xf32>
    tpu.vector_store %arg5[%c56, %c0_63], %97 {strides = array<i32>} : memref<144x512xf32, #tpu.memory_space<vmem>>, vector<8x256xf32>,
    %c0_64 = arith.constant 0 : index
    %c464 = arith.constant 464 : index
    %99 = vector.load %arg4[%c0_64, %c464] : memref<16x768xf32, #tpu.memory_space<vmem>>, vector<8x256xf32>
    %c56_65 = arith.constant 56 : index
    %c256_66 = arith.constant 256 : index
    %100 = vector.load %arg5[%c56_65, %c256_66] : memref<144x512xf32, #tpu.memory_space<vmem>>, vector<8x256xf32>
    tpu.vector_store %arg5[%c56_65, %c256_66], %99 {strides = array<i32>} : memref<144x512xf32, #tpu.memory_space<vmem>>, vector<8x256xf32>,
    %c0_67 = arith.constant 0 : index
    %c81 = arith.constant 81 : index
    %101 = vector.load %arg4[%c0_67, %c81] : memref<16x768xf32, #tpu.memory_space<vmem>>, vector<8x256xf32>
    %cst_68 = arith.constant 0.000000e+00 : f32
    %102 = vector.broadcast %cst_68 : f32 to vector<8x256xf32>
    %103 = arith.select %12, %101, %102 : vector<8x256xi1>, vector<8x256xf32>
    %c64_69 = arith.constant 64 : index
    %c0_70 = arith.constant 0 : index
    %104 = vector.load %arg5[%c64_69, %c0_70] : memref<144x512xf32, #tpu.memory_space<vmem>>, vector<8x256xf32>
    tpu.vector_store %arg5[%c64_69, %c0_70], %103 {strides = array<i32>} : memref<144x512xf32, #tpu.memory_space<vmem>>, vector<8x256xf32>,
    %c0_71 = arith.constant 0 : index
    %c465 = arith.constant 465 : index
    %105 = vector.load %arg4[%c0_71, %c465] : memref<16x768xf32, #tpu.memory_space<vmem>>, vector<8x256xf32>
    %cst_72 = arith.constant 0.000000e+00 : f32
    %106 = vector.broadcast %cst_72 : f32 to vector<8x256xf32>
    %107 = arith.select %12, %105, %106 : vector<8x256xi1>, vector<8x256xf32>
    %c64_73 = arith.constant 64 : index
    %c256_74 = arith.constant 256 : index
    %108 = vector.load %arg5[%c64_73, %c256_74] : memref<144x512xf32, #tpu.memory_space<vmem>>, vector<8x256xf32>
    tpu.vector_store %arg5[%c64_73, %c256_74], %107 {strides = array<i32>} : memref<144x512xf32, #tpu.memory_space<vmem>>, vector<8x256xf32>,
    %c0_75 = arith.constant 0 : index
    %c0_76 = arith.constant 0 : index
    %109 = vector.load %arg2[%c0_75, %c0_76] : memref<24x256xf32, #tpu.memory_space<vmem>>, vector<8x72xf32>
    %c0_77 = arith.constant 0 : index
    %c72 = arith.constant 72 : index
    %110 = vector.load %arg2[%c0_77, %c72] : memref<24x256xf32, #tpu.memory_space<vmem>>, vector<8x1xf32>
    %c0_78 = arith.constant 0 : index
    %c0_79 = arith.constant 0 : index
    %111 = vector.load %arg5[%c0_78, %c0_79] : memref<144x512xf32, #tpu.memory_space<vmem>>, vector<72x512xf32>
    %cst_80 = arith.constant dense<0.000000e+00> : vector<8x512xf32>
    %112 = tpu.matmul %109, %111, %cst_80 {dimension_numbers = #tpu.dot_dimension_numbers<[1], [0], [0], [1], [0, 0, 1, 1], [], []>} : vector<8x72xf32>, vector<72x512xf32>, vector<8x512xf32> -> vector<8x512xf32>
    %113 = vector.broadcast %110 : vector<8x1xf32> to vector<8x512xf32>
    %114 = arith.addf %112, %113 : vector<8x512xf32>
    %cst_81 = arith.constant 0.000000e+00 : f32
    %115 = vector.broadcast %cst_81 : f32 to vector<8x512xf32>
    %116 = arith.maximumf %114, %115 : vector<8x512xf32>
    %117 = vector.extract_strided_slice %116 {offsets = [0, 0], sizes = [8, 256], strides = [1, 1]} : vector<8x512xf32> to vector<8x256xf32>
    %c8_82 = arith.constant 8 : index
    %c64_83 = arith.constant 64 : index
    %118 = vector.load %arg4[%c8_82, %c64_83] : memref<16x768xf32, #tpu.memory_space<vmem>>, vector<8x256xf32>
    tpu.vector_store %arg4[%c8_82, %c64_83], %117 {strides = array<i32>} : memref<16x768xf32, #tpu.memory_space<vmem>>, vector<8x256xf32>,
    %119 = vector.extract_strided_slice %116 {offsets = [0, 256], sizes = [8, 256], strides = [1, 1]} : vector<8x512xf32> to vector<8x256xf32>
    %c8_84 = arith.constant 8 : index
    %c448_85 = arith.constant 448 : index
    %120 = vector.load %arg4[%c8_84, %c448_85] : memref<16x768xf32, #tpu.memory_space<vmem>>, vector<8x256xf32>
    tpu.vector_store %arg4[%c8_84, %c448_85], %119 {strides = array<i32>} : memref<16x768xf32, #tpu.memory_space<vmem>>, vector<8x256xf32>,
    %121 = vector.extract_strided_slice %116 {offsets = [0, 0], sizes = [8, 256], strides = [1, 1]} : vector<8x512xf32> to vector<8x256xf32>
    %c8_86 = arith.constant 8 : index
    %c65_87 = arith.constant 65 : index
    %122 = vector.load %arg4[%c8_86, %c65_87] : memref<16x768xf32, #tpu.memory_space<vmem>>, vector<8x256xf32>
    %123 = arith.maximumf %121, %122 : vector<8x256xf32>
    %c8_88 = arith.constant 8 : index
    %c63_89 = arith.constant 63 : index
    %124 = vector.load %arg4[%c8_88, %c63_89] : memref<16x768xf32, #tpu.memory_space<vmem>>, vector<8x256xf32>
    %125 = arith.maximumf %121, %124 : vector<8x256xf32>
    %126 = arith.select %34, %123, %125 : vector<8x256xi1>, vector<8x256xf32>
    %c8_90 = arith.constant 8 : index
    %c80_91 = arith.constant 80 : index
    %127 = vector.load %arg4[%c8_90, %c80_91] : memref<16x768xf32, #tpu.memory_space<vmem>>, vector<8x256xf32>
    %c8_92 = arith.constant 8 : index
    %c81_93 = arith.constant 81 : index
    %128 = vector.load %arg4[%c8_92, %c81_93] : memref<16x768xf32, #tpu.memory_space<vmem>>, vector<8x256xf32>
    %129 = arith.maximumf %127, %128 : vector<8x256xf32>
    %c8_94 = arith.constant 8 : index
    %c80_95 = arith.constant 80 : index
    %130 = vector.load %arg4[%c8_94, %c80_95] : memref<16x768xf32, #tpu.memory_space<vmem>>, vector<8x256xf32>
    %c8_96 = arith.constant 8 : index
    %c79_97 = arith.constant 79 : index
    %131 = vector.load %arg4[%c8_96, %c79_97] : memref<16x768xf32, #tpu.memory_space<vmem>>, vector<8x256xf32>
    %132 = arith.maximumf %130, %131 : vector<8x256xf32>
    %133 = arith.select %34, %129, %132 : vector<8x256xi1>, vector<8x256xf32>
    %c8_98 = arith.constant 8 : index
    %c48_99 = arith.constant 48 : index
    %134 = vector.load %arg4[%c8_98, %c48_99] : memref<16x768xf32, #tpu.memory_space<vmem>>, vector<8x256xf32>
    %c8_100 = arith.constant 8 : index
    %c49_101 = arith.constant 49 : index
    %135 = vector.load %arg4[%c8_100, %c49_101] : memref<16x768xf32, #tpu.memory_space<vmem>>, vector<8x256xf32>
    %136 = arith.maximumf %134, %135 : vector<8x256xf32>
    %c8_102 = arith.constant 8 : index
    %c48_103 = arith.constant 48 : index
    %137 = vector.load %arg4[%c8_102, %c48_103] : memref<16x768xf32, #tpu.memory_space<vmem>>, vector<8x256xf32>
    %c8_104 = arith.constant 8 : index
    %c47_105 = arith.constant 47 : index
    %138 = vector.load %arg4[%c8_104, %c47_105] : memref<16x768xf32, #tpu.memory_space<vmem>>, vector<8x256xf32>
    %139 = arith.maximumf %137, %138 : vector<8x256xf32>
    %140 = arith.select %34, %136, %139 : vector<8x256xi1>, vector<8x256xf32>
    %141 = arith.maximumf %126, %133 : vector<8x256xf32>
    %142 = arith.maximumf %126, %140 : vector<8x256xf32>
    %143 = arith.select %42, %141, %142 : vector<8x256xi1>, vector<8x256xf32>
    %c0_106 = arith.constant 0 : index
    %c64_107 = arith.constant 64 : index
    %144 = vector.load %arg4[%c0_106, %c64_107] : memref<16x768xf32, #tpu.memory_space<vmem>>, vector<8x256xf32>
    tpu.vector_store %arg4[%c0_106, %c64_107], %143 {strides = array<i32>} : memref<16x768xf32, #tpu.memory_space<vmem>>, vector<8x256xf32>,
    %145 = vector.extract_strided_slice %116 {offsets = [0, 256], sizes = [8, 256], strides = [1, 1]} : vector<8x512xf32> to vector<8x256xf32>
    %c8_108 = arith.constant 8 : index
    %c449_109 = arith.constant 449 : index
    %146 = vector.load %arg4[%c8_108, %c449_109] : memref<16x768xf32, #tpu.memory_space<vmem>>, vector<8x256xf32>
    %147 = arith.maximumf %145, %146 : vector<8x256xf32>
    %c8_110 = arith.constant 8 : index
    %c447_111 = arith.constant 447 : index
    %148 = vector.load %arg4[%c8_110, %c447_111] : memref<16x768xf32, #tpu.memory_space<vmem>>, vector<8x256xf32>
    %149 = arith.maximumf %145, %148 : vector<8x256xf32>
    %150 = arith.select %34, %147, %149 : vector<8x256xi1>, vector<8x256xf32>
    %c8_112 = arith.constant 8 : index
    %c464_113 = arith.constant 464 : index
    %151 = vector.load %arg4[%c8_112, %c464_113] : memref<16x768xf32, #tpu.memory_space<vmem>>, vector<8x256xf32>
    %c8_114 = arith.constant 8 : index
    %c465_115 = arith.constant 465 : index
    %152 = vector.load %arg4[%c8_114, %c465_115] : memref<16x768xf32, #tpu.memory_space<vmem>>, vector<8x256xf32>
    %153 = arith.maximumf %151, %152 : vector<8x256xf32>
    %c8_116 = arith.constant 8 : index
    %c464_117 = arith.constant 464 : index
    %154 = vector.load %arg4[%c8_116, %c464_117] : memref<16x768xf32, #tpu.memory_space<vmem>>, vector<8x256xf32>
    %c8_118 = arith.constant 8 : index
    %c463_119 = arith.constant 463 : index
    %155 = vector.load %arg4[%c8_118, %c463_119] : memref<16x768xf32, #tpu.memory_space<vmem>>, vector<8x256xf32>
    %156 = arith.maximumf %154, %155 : vector<8x256xf32>
    %157 = arith.select %34, %153, %156 : vector<8x256xi1>, vector<8x256xf32>
    %c8_120 = arith.constant 8 : index
    %c432_121 = arith.constant 432 : index
    %158 = vector.load %arg4[%c8_120, %c432_121] : memref<16x768xf32, #tpu.memory_space<vmem>>, vector<8x256xf32>
    %c8_122 = arith.constant 8 : index
    %c433_123 = arith.constant 433 : index
    %159 = vector.load %arg4[%c8_122, %c433_123] : memref<16x768xf32, #tpu.memory_space<vmem>>, vector<8x256xf32>
    %160 = arith.maximumf %158, %159 : vector<8x256xf32>
    %c8_124 = arith.constant 8 : index
    %c432_125 = arith.constant 432 : index
    %161 = vector.load %arg4[%c8_124, %c432_125] : memref<16x768xf32, #tpu.memory_space<vmem>>, vector<8x256xf32>
    %c8_126 = arith.constant 8 : index
    %c431_127 = arith.constant 431 : index
    %162 = vector.load %arg4[%c8_126, %c431_127] : memref<16x768xf32, #tpu.memory_space<vmem>>, vector<8x256xf32>
    %163 = arith.maximumf %161, %162 : vector<8x256xf32>
    %164 = arith.select %34, %160, %163 : vector<8x256xi1>, vector<8x256xf32>
    %165 = arith.maximumf %150, %157 : vector<8x256xf32>
    %166 = arith.maximumf %150, %164 : vector<8x256xf32>
    %167 = arith.select %42, %165, %166 : vector<8x256xi1>, vector<8x256xf32>
    %c0_128 = arith.constant 0 : index
    %c448_129 = arith.constant 448 : index
    %168 = vector.load %arg4[%c0_128, %c448_129] : memref<16x768xf32, #tpu.memory_space<vmem>>, vector<8x256xf32>
    tpu.vector_store %arg4[%c0_128, %c448_129], %167 {strides = array<i32>} : memref<16x768xf32, #tpu.memory_space<vmem>>, vector<8x256xf32>,
    %c0_130 = arith.constant 0 : index
    %c30 = arith.constant 30 : index
    %169 = vector.load %arg4[%c0_130, %c30] : memref<16x768xf32, #tpu.memory_space<vmem>>, vector<8x256xf32>
    %cst_131 = arith.constant 0.000000e+00 : f32
    %170 = vector.broadcast %cst_131 : f32 to vector<8x256xf32>
    %171 = arith.select %16, %169, %170 : vector<8x256xi1>, vector<8x256xf32>
    %c0_132 = arith.constant 0 : index
    %c0_133 = arith.constant 0 : index
    %172 = vector.load %arg5[%c0_132, %c0_133] : memref<144x512xf32, #tpu.memory_space<vmem>>, vector<8x256xf32>
    tpu.vector_store %arg5[%c0_132, %c0_133], %171 {strides = array<i32>} : memref<144x512xf32, #tpu.memory_space<vmem>>, vector<8x256xf32>,
    %c0_134 = arith.constant 0 : index
    %c414 = arith.constant 414 : index
    %173 = vector.load %arg4[%c0_134, %c414] : memref<16x768xf32, #tpu.memory_space<vmem>>, vector<8x256xf32>
    %cst_135 = arith.constant 0.000000e+00 : f32
    %174 = vector.broadcast %cst_135 : f32 to vector<8x256xf32>
    %175 = arith.select %16, %173, %174 : vector<8x256xi1>, vector<8x256xf32>
    %c0_136 = arith.constant 0 : index
    %c256_137 = arith.constant 256 : index
    %176 = vector.load %arg5[%c0_136, %c256_137] : memref<144x512xf32, #tpu.memory_space<vmem>>, vector<8x256xf32>
    tpu.vector_store %arg5[%c0_136, %c256_137], %175 {strides = array<i32>} : memref<144x512xf32, #tpu.memory_space<vmem>>, vector<8x256xf32>,
    %c0_138 = arith.constant 0 : index
    %c32_139 = arith.constant 32 : index
    %177 = vector.load %arg4[%c0_138, %c32_139] : memref<16x768xf32, #tpu.memory_space<vmem>>, vector<8x256xf32>
    %c8_140 = arith.constant 8 : index
    %c0_141 = arith.constant 0 : index
    %178 = vector.load %arg5[%c8_140, %c0_141] : memref<144x512xf32, #tpu.memory_space<vmem>>, vector<8x256xf32>
    tpu.vector_store %arg5[%c8_140, %c0_141], %177 {strides = array<i32>} : memref<144x512xf32, #tpu.memory_space<vmem>>, vector<8x256xf32>,
    %c0_142 = arith.constant 0 : index
    %c416 = arith.constant 416 : index
    %179 = vector.load %arg4[%c0_142, %c416] : memref<16x768xf32, #tpu.memory_space<vmem>>, vector<8x256xf32>
    %c8_143 = arith.constant 8 : index
    %c256_144 = arith.constant 256 : index
    %180 = vector.load %arg5[%c8_143, %c256_144] : memref<144x512xf32, #tpu.memory_space<vmem>>, vector<8x256xf32>
    tpu.vector_store %arg5[%c8_143, %c256_144], %179 {strides = array<i32>} : memref<144x512xf32, #tpu.memory_space<vmem>>, vector<8x256xf32>,
    %c0_145 = arith.constant 0 : index
    %c34 = arith.constant 34 : index
    %181 = vector.load %arg4[%c0_145, %c34] : memref<16x768xf32, #tpu.memory_space<vmem>>, vector<8x256xf32>
    %cst_146 = arith.constant 0.000000e+00 : f32
    %182 = vector.broadcast %cst_146 : f32 to vector<8x256xf32>
    %183 = arith.select %20, %181, %182 : vector<8x256xi1>, vector<8x256xf32>
    %c16_147 = arith.constant 16 : index
    %c0_148 = arith.constant 0 : index
    %184 = vector.load %arg5[%c16_147, %c0_148] : memref<144x512xf32, #tpu.memory_space<vmem>>, vector<8x256xf32>
    tpu.vector_store %arg5[%c16_147, %c0_148], %183 {strides = array<i32>} : memref<144x512xf32, #tpu.memory_space<vmem>>, vector<8x256xf32>,
    %c0_149 = arith.constant 0 : index
    %c418 = arith.constant 418 : index
    %185 = vector.load %arg4[%c0_149, %c418] : memref<16x768xf32, #tpu.memory_space<vmem>>, vector<8x256xf32>
    %cst_150 = arith.constant 0.000000e+00 : f32
    %186 = vector.broadcast %cst_150 : f32 to vector<8x256xf32>
    %187 = arith.select %20, %185, %186 : vector<8x256xi1>, vector<8x256xf32>
    %c16_151 = arith.constant 16 : index
    %c256_152 = arith.constant 256 : index
    %188 = vector.load %arg5[%c16_151, %c256_152] : memref<144x512xf32, #tpu.memory_space<vmem>>, vector<8x256xf32>
    tpu.vector_store %arg5[%c16_151, %c256_152], %187 {strides = array<i32>} : memref<144x512xf32, #tpu.memory_space<vmem>>, vector<8x256xf32>,
    %c0_153 = arith.constant 0 : index
    %c62 = arith.constant 62 : index
    %189 = vector.load %arg4[%c0_153, %c62] : memref<16x768xf32, #tpu.memory_space<vmem>>, vector<8x256xf32>
    %cst_154 = arith.constant 0.000000e+00 : f32
    %190 = vector.broadcast %cst_154 : f32 to vector<8x256xf32>
    %191 = arith.select %16, %189, %190 : vector<8x256xi1>, vector<8x256xf32>
    %c24_155 = arith.constant 24 : index
    %c0_156 = arith.constant 0 : index
    %192 = vector.load %arg5[%c24_155, %c0_156] : memref<144x512xf32, #tpu.memory_space<vmem>>, vector<8x256xf32>
    tpu.vector_store %arg5[%c24_155, %c0_156], %191 {strides = array<i32>} : memref<144x512xf32, #tpu.memory_space<vmem>>, vector<8x256xf32>,
    %c0_157 = arith.constant 0 : index
    %c446 = arith.constant 446 : index
    %193 = vector.load %arg4[%c0_157, %c446] : memref<16x768xf32, #tpu.memory_space<vmem>>, vector<8x256xf32>
    %cst_158 = arith.constant 0.000000e+00 : f32
    %194 = vector.broadcast %cst_158 : f32 to vector<8x256xf32>
    %195 = arith.select %16, %193, %194 : vector<8x256xi1>, vector<8x256xf32>
    %c24_159 = arith.constant 24 : index
    %c256_160 = arith.constant 256 : index
    %196 = vector.load %arg5[%c24_159, %c256_160] : memref<144x512xf32, #tpu.memory_space<vmem>>, vector<8x256xf32>
    tpu.vector_store %arg5[%c24_159, %c256_160], %195 {strides = array<i32>} : memref<144x512xf32, #tpu.memory_space<vmem>>, vector<8x256xf32>,
    %c0_161 = arith.constant 0 : index
    %c64_162 = arith.constant 64 : index
    %197 = vector.load %arg4[%c0_161, %c64_162] : memref<16x768xf32, #tpu.memory_space<vmem>>, vector<8x256xf32>
    %c32_163 = arith.constant 32 : index
    %c0_164 = arith.constant 0 : index
    %198 = vector.load %arg5[%c32_163, %c0_164] : memref<144x512xf32, #tpu.memory_space<vmem>>, vector<8x256xf32>
    tpu.vector_store %arg5[%c32_163, %c0_164], %197 {strides = array<i32>} : memref<144x512xf32, #tpu.memory_space<vmem>>, vector<8x256xf32>,
    %c0_165 = arith.constant 0 : index
    %c448_166 = arith.constant 448 : index
    %199 = vector.load %arg4[%c0_165, %c448_166] : memref<16x768xf32, #tpu.memory_space<vmem>>, vector<8x256xf32>
    %c32_167 = arith.constant 32 : index
    %c256_168 = arith.constant 256 : index
    %200 = vector.load %arg5[%c32_167, %c256_168] : memref<144x512xf32, #tpu.memory_space<vmem>>, vector<8x256xf32>
    tpu.vector_store %arg5[%c32_167, %c256_168], %199 {strides = array<i32>} : memref<144x512xf32, #tpu.memory_space<vmem>>, vector<8x256xf32>,
    %c0_169 = arith.constant 0 : index
    %c66 = arith.constant 66 : index
    %201 = vector.load %arg4[%c0_169, %c66] : memref<16x768xf32, #tpu.memory_space<vmem>>, vector<8x256xf32>
    %cst_170 = arith.constant 0.000000e+00 : f32
    %202 = vector.broadcast %cst_170 : f32 to vector<8x256xf32>
    %203 = arith.select %20, %201, %202 : vector<8x256xi1>, vector<8x256xf32>
    %c40_171 = arith.constant 40 : index
    %c0_172 = arith.constant 0 : index
    %204 = vector.load %arg5[%c40_171, %c0_172] : memref<144x512xf32, #tpu.memory_space<vmem>>, vector<8x256xf32>
    tpu.vector_store %arg5[%c40_171, %c0_172], %203 {strides = array<i32>} : memref<144x512xf32, #tpu.memory_space<vmem>>, vector<8x256xf32>,
    %c0_173 = arith.constant 0 : index
    %c450 = arith.constant 450 : index
    %205 = vector.load %arg4[%c0_173, %c450] : memref<16x768xf32, #tpu.memory_space<vmem>>, vector<8x256xf32>
    %cst_174 = arith.constant 0.000000e+00 : f32
    %206 = vector.broadcast %cst_174 : f32 to vector<8x256xf32>
    %207 = arith.select %20, %205, %206 : vector<8x256xi1>, vector<8x256xf32>
    %c40_175 = arith.constant 40 : index
    %c256_176 = arith.constant 256 : index
    %208 = vector.load %arg5[%c40_175, %c256_176] : memref<144x512xf32, #tpu.memory_space<vmem>>, vector<8x256xf32>
    tpu.vector_store %arg5[%c40_175, %c256_176], %207 {strides = array<i32>} : memref<144x512xf32, #tpu.memory_space<vmem>>, vector<8x256xf32>,
    %c0_177 = arith.constant 0 : index
    %c94 = arith.constant 94 : index
    %209 = vector.load %arg4[%c0_177, %c94] : memref<16x768xf32, #tpu.memory_space<vmem>>, vector<8x256xf32>
    %cst_178 = arith.constant 0.000000e+00 : f32
    %210 = vector.broadcast %cst_178 : f32 to vector<8x256xf32>
    %211 = arith.select %16, %209, %210 : vector<8x256xi1>, vector<8x256xf32>
    %c48_179 = arith.constant 48 : index
    %c0_180 = arith.constant 0 : index
    %212 = vector.load %arg5[%c48_179, %c0_180] : memref<144x512xf32, #tpu.memory_space<vmem>>, vector<8x256xf32>
    tpu.vector_store %arg5[%c48_179, %c0_180], %211 {strides = array<i32>} : memref<144x512xf32, #tpu.memory_space<vmem>>, vector<8x256xf32>,
    %c0_181 = arith.constant 0 : index
    %c478 = arith.constant 478 : index
    %213 = vector.load %arg4[%c0_181, %c478] : memref<16x768xf32, #tpu.memory_space<vmem>>, vector<8x256xf32>
    %cst_182 = arith.constant 0.000000e+00 : f32
    %214 = vector.broadcast %cst_182 : f32 to vector<8x256xf32>
    %215 = arith.select %16, %213, %214 : vector<8x256xi1>, vector<8x256xf32>
    %c48_183 = arith.constant 48 : index
    %c256_184 = arith.constant 256 : index
    %216 = vector.load %arg5[%c48_183, %c256_184] : memref<144x512xf32, #tpu.memory_space<vmem>>, vector<8x256xf32>
    tpu.vector_store %arg5[%c48_183, %c256_184], %215 {strides = array<i32>} : memref<144x512xf32, #tpu.memory_space<vmem>>, vector<8x256xf32>,
    %c0_185 = arith.constant 0 : index
    %c96 = arith.constant 96 : index
    %217 = vector.load %arg4[%c0_185, %c96] : memref<16x768xf32, #tpu.memory_space<vmem>>, vector<8x256xf32>
    %c56_186 = arith.constant 56 : index
    %c0_187 = arith.constant 0 : index
    %218 = vector.load %arg5[%c56_186, %c0_187] : memref<144x512xf32, #tpu.memory_space<vmem>>, vector<8x256xf32>
    tpu.vector_store %arg5[%c56_186, %c0_187], %217 {strides = array<i32>} : memref<144x512xf32, #tpu.memory_space<vmem>>, vector<8x256xf32>,
    %c0_188 = arith.constant 0 : index
    %c480 = arith.constant 480 : index
    %219 = vector.load %arg4[%c0_188, %c480] : memref<16x768xf32, #tpu.memory_space<vmem>>, vector<8x256xf32>
    %c56_189 = arith.constant 56 : index
    %c256_190 = arith.constant 256 : index
    %220 = vector.load %arg5[%c56_189, %c256_190] : memref<144x512xf32, #tpu.memory_space<vmem>>, vector<8x256xf32>
    tpu.vector_store %arg5[%c56_189, %c256_190], %219 {strides = array<i32>} : memref<144x512xf32, #tpu.memory_space<vmem>>, vector<8x256xf32>,
    %c0_191 = arith.constant 0 : index
    %c98 = arith.constant 98 : index
    %221 = vector.load %arg4[%c0_191, %c98] : memref<16x768xf32, #tpu.memory_space<vmem>>, vector<8x256xf32>
    %cst_192 = arith.constant 0.000000e+00 : f32
    %222 = vector.broadcast %cst_192 : f32 to vector<8x256xf32>
    %223 = arith.select %20, %221, %222 : vector<8x256xi1>, vector<8x256xf32>
    %c64_193 = arith.constant 64 : index
    %c0_194 = arith.constant 0 : index
    %224 = vector.load %arg5[%c64_193, %c0_194] : memref<144x512xf32, #tpu.memory_space<vmem>>, vector<8x256xf32>
    tpu.vector_store %arg5[%c64_193, %c0_194], %223 {strides = array<i32>} : memref<144x512xf32, #tpu.memory_space<vmem>>, vector<8x256xf32>,
    %c0_195 = arith.constant 0 : index
    %c482 = arith.constant 482 : index
    %225 = vector.load %arg4[%c0_195, %c482] : memref<16x768xf32, #tpu.memory_space<vmem>>, vector<8x256xf32>
    %cst_196 = arith.constant 0.000000e+00 : f32
    %226 = vector.broadcast %cst_196 : f32 to vector<8x256xf32>
    %227 = arith.select %20, %225, %226 : vector<8x256xi1>, vector<8x256xf32>
    %c64_197 = arith.constant 64 : index
    %c256_198 = arith.constant 256 : index
    %228 = vector.load %arg5[%c64_197, %c256_198] : memref<144x512xf32, #tpu.memory_space<vmem>>, vector<8x256xf32>
    tpu.vector_store %arg5[%c64_197, %c256_198], %227 {strides = array<i32>} : memref<144x512xf32, #tpu.memory_space<vmem>>, vector<8x256xf32>,
    %c8_199 = arith.constant 8 : index
    %c0_200 = arith.constant 0 : index
    %229 = vector.load %arg2[%c8_199, %c0_200] : memref<24x256xf32, #tpu.memory_space<vmem>>, vector<8x72xf32>
    %c8_201 = arith.constant 8 : index
    %c72_202 = arith.constant 72 : index
    %230 = vector.load %arg2[%c8_201, %c72_202] : memref<24x256xf32, #tpu.memory_space<vmem>>, vector<8x1xf32>
    %c0_203 = arith.constant 0 : index
    %c0_204 = arith.constant 0 : index
    %231 = vector.load %arg5[%c0_203, %c0_204] : memref<144x512xf32, #tpu.memory_space<vmem>>, vector<72x512xf32>
    %cst_205 = arith.constant dense<0.000000e+00> : vector<8x512xf32>
    %232 = tpu.matmul %229, %231, %cst_205 {dimension_numbers = #tpu.dot_dimension_numbers<[1], [0], [0], [1], [0, 0, 1, 1], [], []>} : vector<8x72xf32>, vector<72x512xf32>, vector<8x512xf32> -> vector<8x512xf32>
    %233 = vector.broadcast %230 : vector<8x1xf32> to vector<8x512xf32>
    %234 = arith.addf %232, %233 : vector<8x512xf32>
    %cst_206 = arith.constant 0.000000e+00 : f32
    %235 = vector.broadcast %cst_206 : f32 to vector<8x512xf32>
    %236 = arith.maximumf %234, %235 : vector<8x512xf32>
    %237 = vector.extract_strided_slice %236 {offsets = [0, 0], sizes = [8, 256], strides = [1, 1]} : vector<8x512xf32> to vector<8x256xf32>
    %c0_207 = arith.constant 0 : index
    %c64_208 = arith.constant 64 : index
    %238 = vector.load %arg4[%c0_207, %c64_208] : memref<16x768xf32, #tpu.memory_space<vmem>>, vector<8x256xf32>
    tpu.vector_store %arg4[%c0_207, %c64_208], %237 {strides = array<i32>} : memref<16x768xf32, #tpu.memory_space<vmem>>, vector<8x256xf32>,
    %239 = vector.extract_strided_slice %236 {offsets = [0, 256], sizes = [8, 256], strides = [1, 1]} : vector<8x512xf32> to vector<8x256xf32>
    %c0_209 = arith.constant 0 : index
    %c448_210 = arith.constant 448 : index
    %240 = vector.load %arg4[%c0_209, %c448_210] : memref<16x768xf32, #tpu.memory_space<vmem>>, vector<8x256xf32>
    tpu.vector_store %arg4[%c0_209, %c448_210], %239 {strides = array<i32>} : memref<16x768xf32, #tpu.memory_space<vmem>>, vector<8x256xf32>,
    %c0_211 = arith.constant 0 : index
    %c47_212 = arith.constant 47 : index
    %241 = vector.load %arg4[%c0_211, %c47_212] : memref<16x768xf32, #tpu.memory_space<vmem>>, vector<16x256xf32>
    %cst_213 = arith.constant 0.000000e+00 : f32
    %242 = vector.broadcast %cst_213 : f32 to vector<16x256xf32>
    %243 = arith.select %24, %241, %242 : vector<16x256xi1>, vector<16x256xf32>
    %c0_214 = arith.constant 0 : index
    %c0_215 = arith.constant 0 : index
    %244 = vector.load %arg5[%c0_214, %c0_215] : memref<144x512xf32, #tpu.memory_space<vmem>>, vector<16x256xf32>
    tpu.vector_store %arg5[%c0_214, %c0_215], %243 {strides = array<i32>} : memref<144x512xf32, #tpu.memory_space<vmem>>, vector<16x256xf32>,
    %c0_216 = arith.constant 0 : index
    %c431_217 = arith.constant 431 : index
    %245 = vector.load %arg4[%c0_216, %c431_217] : memref<16x768xf32, #tpu.memory_space<vmem>>, vector<16x256xf32>
    %cst_218 = arith.constant 0.000000e+00 : f32
    %246 = vector.broadcast %cst_218 : f32 to vector<16x256xf32>
    %247 = arith.select %24, %245, %246 : vector<16x256xi1>, vector<16x256xf32>
    %c0_219 = arith.constant 0 : index
    %c256_220 = arith.constant 256 : index
    %248 = vector.load %arg5[%c0_219, %c256_220] : memref<144x512xf32, #tpu.memory_space<vmem>>, vector<16x256xf32>
    tpu.vector_store %arg5[%c0_219, %c256_220], %247 {strides = array<i32>} : memref<144x512xf32, #tpu.memory_space<vmem>>, vector<16x256xf32>,
    %c0_221 = arith.constant 0 : index
    %c48_222 = arith.constant 48 : index
    %249 = vector.load %arg4[%c0_221, %c48_222] : memref<16x768xf32, #tpu.memory_space<vmem>>, vector<16x256xf32>
    %c16_223 = arith.constant 16 : index
    %c0_224 = arith.constant 0 : index
    %250 = vector.load %arg5[%c16_223, %c0_224] : memref<144x512xf32, #tpu.memory_space<vmem>>, vector<16x256xf32>
    tpu.vector_store %arg5[%c16_223, %c0_224], %249 {strides = array<i32>} : memref<144x512xf32, #tpu.memory_space<vmem>>, vector<16x256xf32>,
    %c0_225 = arith.constant 0 : index
    %c432_226 = arith.constant 432 : index
    %251 = vector.load %arg4[%c0_225, %c432_226] : memref<16x768xf32, #tpu.memory_space<vmem>>, vector<16x256xf32>
    %c16_227 = arith.constant 16 : index
    %c256_228 = arith.constant 256 : index
    %252 = vector.load %arg5[%c16_227, %c256_228] : memref<144x512xf32, #tpu.memory_space<vmem>>, vector<16x256xf32>
    tpu.vector_store %arg5[%c16_227, %c256_228], %251 {strides = array<i32>} : memref<144x512xf32, #tpu.memory_space<vmem>>, vector<16x256xf32>,
    %c0_229 = arith.constant 0 : index
    %c49_230 = arith.constant 49 : index
    %253 = vector.load %arg4[%c0_229, %c49_230] : memref<16x768xf32, #tpu.memory_space<vmem>>, vector<16x256xf32>
    %cst_231 = arith.constant 0.000000e+00 : f32
    %254 = vector.broadcast %cst_231 : f32 to vector<16x256xf32>
    %255 = arith.select %28, %253, %254 : vector<16x256xi1>, vector<16x256xf32>
    %c32_232 = arith.constant 32 : index
    %c0_233 = arith.constant 0 : index
    %256 = vector.load %arg5[%c32_232, %c0_233] : memref<144x512xf32, #tpu.memory_space<vmem>>, vector<16x256xf32>
    tpu.vector_store %arg5[%c32_232, %c0_233], %255 {strides = array<i32>} : memref<144x512xf32, #tpu.memory_space<vmem>>, vector<16x256xf32>,
    %c0_234 = arith.constant 0 : index
    %c433_235 = arith.constant 433 : index
    %257 = vector.load %arg4[%c0_234, %c433_235] : memref<16x768xf32, #tpu.memory_space<vmem>>, vector<16x256xf32>
    %cst_236 = arith.constant 0.000000e+00 : f32
    %258 = vector.broadcast %cst_236 : f32 to vector<16x256xf32>
    %259 = arith.select %28, %257, %258 : vector<16x256xi1>, vector<16x256xf32>
    %c32_237 = arith.constant 32 : index
    %c256_238 = arith.constant 256 : index
    %260 = vector.load %arg5[%c32_237, %c256_238] : memref<144x512xf32, #tpu.memory_space<vmem>>, vector<16x256xf32>
    tpu.vector_store %arg5[%c32_237, %c256_238], %259 {strides = array<i32>} : memref<144x512xf32, #tpu.memory_space<vmem>>, vector<16x256xf32>,
    %c0_239 = arith.constant 0 : index
    %c63_240 = arith.constant 63 : index
    %261 = vector.load %arg4[%c0_239, %c63_240] : memref<16x768xf32, #tpu.memory_space<vmem>>, vector<16x256xf32>
    %cst_241 = arith.constant 0.000000e+00 : f32
    %262 = vector.broadcast %cst_241 : f32 to vector<16x256xf32>
    %263 = arith.select %24, %261, %262 : vector<16x256xi1>, vector<16x256xf32>
    %c48_242 = arith.constant 48 : index
    %c0_243 = arith.constant 0 : index
    %264 = vector.load %arg5[%c48_242, %c0_243] : memref<144x512xf32, #tpu.memory_space<vmem>>, vector<16x256xf32>
    tpu.vector_store %arg5[%c48_242, %c0_243], %263 {strides = array<i32>} : memref<144x512xf32, #tpu.memory_space<vmem>>, vector<16x256xf32>,
    %c0_244 = arith.constant 0 : index
    %c447_245 = arith.constant 447 : index
    %265 = vector.load %arg4[%c0_244, %c447_245] : memref<16x768xf32, #tpu.memory_space<vmem>>, vector<16x256xf32>
    %cst_246 = arith.constant 0.000000e+00 : f32
    %266 = vector.broadcast %cst_246 : f32 to vector<16x256xf32>
    %267 = arith.select %24, %265, %266 : vector<16x256xi1>, vector<16x256xf32>
    %c48_247 = arith.constant 48 : index
    %c256_248 = arith.constant 256 : index
    %268 = vector.load %arg5[%c48_247, %c256_248] : memref<144x512xf32, #tpu.memory_space<vmem>>, vector<16x256xf32>
    tpu.vector_store %arg5[%c48_247, %c256_248], %267 {strides = array<i32>} : memref<144x512xf32, #tpu.memory_space<vmem>>, vector<16x256xf32>,
    %c0_249 = arith.constant 0 : index
    %c64_250 = arith.constant 64 : index
    %269 = vector.load %arg4[%c0_249, %c64_250] : memref<16x768xf32, #tpu.memory_space<vmem>>, vector<16x256xf32>
    %c64_251 = arith.constant 64 : index
    %c0_252 = arith.constant 0 : index
    %270 = vector.load %arg5[%c64_251, %c0_252] : memref<144x512xf32, #tpu.memory_space<vmem>>, vector<16x256xf32>
    tpu.vector_store %arg5[%c64_251, %c0_252], %269 {strides = array<i32>} : memref<144x512xf32, #tpu.memory_space<vmem>>, vector<16x256xf32>,
    %c0_253 = arith.constant 0 : index
    %c448_254 = arith.constant 448 : index
    %271 = vector.load %arg4[%c0_253, %c448_254] : memref<16x768xf32, #tpu.memory_space<vmem>>, vector<16x256xf32>
    %c64_255 = arith.constant 64 : index
    %c256_256 = arith.constant 256 : index
    %272 = vector.load %arg5[%c64_255, %c256_256] : memref<144x512xf32, #tpu.memory_space<vmem>>, vector<16x256xf32>
    tpu.vector_store %arg5[%c64_255, %c256_256], %271 {strides = array<i32>} : memref<144x512xf32, #tpu.memory_space<vmem>>, vector<16x256xf32>,
    %c0_257 = arith.constant 0 : index
    %c65_258 = arith.constant 65 : index
    %273 = vector.load %arg4[%c0_257, %c65_258] : memref<16x768xf32, #tpu.memory_space<vmem>>, vector<16x256xf32>
    %cst_259 = arith.constant 0.000000e+00 : f32
    %274 = vector.broadcast %cst_259 : f32 to vector<16x256xf32>
    %275 = arith.select %28, %273, %274 : vector<16x256xi1>, vector<16x256xf32>
    %c80_260 = arith.constant 80 : index
    %c0_261 = arith.constant 0 : index
    %276 = vector.load %arg5[%c80_260, %c0_261] : memref<144x512xf32, #tpu.memory_space<vmem>>, vector<16x256xf32>
    tpu.vector_store %arg5[%c80_260, %c0_261], %275 {strides = array<i32>} : memref<144x512xf32, #tpu.memory_space<vmem>>, vector<16x256xf32>,
    %c0_262 = arith.constant 0 : index
    %c449_263 = arith.constant 449 : index
    %277 = vector.load %arg4[%c0_262, %c449_263] : memref<16x768xf32, #tpu.memory_space<vmem>>, vector<16x256xf32>
    %cst_264 = arith.constant 0.000000e+00 : f32
    %278 = vector.broadcast %cst_264 : f32 to vector<16x256xf32>
    %279 = arith.select %28, %277, %278 : vector<16x256xi1>, vector<16x256xf32>
    %c80_265 = arith.constant 80 : index
    %c256_266 = arith.constant 256 : index
    %280 = vector.load %arg5[%c80_265, %c256_266] : memref<144x512xf32, #tpu.memory_space<vmem>>, vector<16x256xf32>
    tpu.vector_store %arg5[%c80_265, %c256_266], %279 {strides = array<i32>} : memref<144x512xf32, #tpu.memory_space<vmem>>, vector<16x256xf32>,
    %c0_267 = arith.constant 0 : index
    %c79_268 = arith.constant 79 : index
    %281 = vector.load %arg4[%c0_267, %c79_268] : memref<16x768xf32, #tpu.memory_space<vmem>>, vector<16x256xf32>
    %cst_269 = arith.constant 0.000000e+00 : f32
    %282 = vector.broadcast %cst_269 : f32 to vector<16x256xf32>
    %283 = arith.select %24, %281, %282 : vector<16x256xi1>, vector<16x256xf32>
    %c96_270 = arith.constant 96 : index
    %c0_271 = arith.constant 0 : index
    %284 = vector.load %arg5[%c96_270, %c0_271] : memref<144x512xf32, #tpu.memory_space<vmem>>, vector<16x256xf32>
    tpu.vector_store %arg5[%c96_270, %c0_271], %283 {strides = array<i32>} : memref<144x512xf32, #tpu.memory_space<vmem>>, vector<16x256xf32>,
    %c0_272 = arith.constant 0 : index
    %c463_273 = arith.constant 463 : index
    %285 = vector.load %arg4[%c0_272, %c463_273] : memref<16x768xf32, #tpu.memory_space<vmem>>, vector<16x256xf32>
    %cst_274 = arith.constant 0.000000e+00 : f32
    %286 = vector.broadcast %cst_274 : f32 to vector<16x256xf32>
    %287 = arith.select %24, %285, %286 : vector<16x256xi1>, vector<16x256xf32>
    %c96_275 = arith.constant 96 : index
    %c256_276 = arith.constant 256 : index
    %288 = vector.load %arg5[%c96_275, %c256_276] : memref<144x512xf32, #tpu.memory_space<vmem>>, vector<16x256xf32>
    tpu.vector_store %arg5[%c96_275, %c256_276], %287 {strides = array<i32>} : memref<144x512xf32, #tpu.memory_space<vmem>>, vector<16x256xf32>,
    %c0_277 = arith.constant 0 : index
    %c80_278 = arith.constant 80 : index
    %289 = vector.load %arg4[%c0_277, %c80_278] : memref<16x768xf32, #tpu.memory_space<vmem>>, vector<16x256xf32>
    %c112 = arith.constant 112 : index
    %c0_279 = arith.constant 0 : index
    %290 = vector.load %arg5[%c112, %c0_279] : memref<144x512xf32, #tpu.memory_space<vmem>>, vector<16x256xf32>
    tpu.vector_store %arg5[%c112, %c0_279], %289 {strides = array<i32>} : memref<144x512xf32, #tpu.memory_space<vmem>>, vector<16x256xf32>,
    %c0_280 = arith.constant 0 : index
    %c464_281 = arith.constant 464 : index
    %291 = vector.load %arg4[%c0_280, %c464_281] : memref<16x768xf32, #tpu.memory_space<vmem>>, vector<16x256xf32>
    %c112_282 = arith.constant 112 : index
    %c256_283 = arith.constant 256 : index
    %292 = vector.load %arg5[%c112_282, %c256_283] : memref<144x512xf32, #tpu.memory_space<vmem>>, vector<16x256xf32>
    tpu.vector_store %arg5[%c112_282, %c256_283], %291 {strides = array<i32>} : memref<144x512xf32, #tpu.memory_space<vmem>>, vector<16x256xf32>,
    %c0_284 = arith.constant 0 : index
    %c81_285 = arith.constant 81 : index
    %293 = vector.load %arg4[%c0_284, %c81_285] : memref<16x768xf32, #tpu.memory_space<vmem>>, vector<16x256xf32>
    %cst_286 = arith.constant 0.000000e+00 : f32
    %294 = vector.broadcast %cst_286 : f32 to vector<16x256xf32>
    %295 = arith.select %28, %293, %294 : vector<16x256xi1>, vector<16x256xf32>
    %c128 = arith.constant 128 : index
    %c0_287 = arith.constant 0 : index
    %296 = vector.load %arg5[%c128, %c0_287] : memref<144x512xf32, #tpu.memory_space<vmem>>, vector<16x256xf32>
    tpu.vector_store %arg5[%c128, %c0_287], %295 {strides = array<i32>} : memref<144x512xf32, #tpu.memory_space<vmem>>, vector<16x256xf32>,
    %c0_288 = arith.constant 0 : index
    %c465_289 = arith.constant 465 : index
    %297 = vector.load %arg4[%c0_288, %c465_289] : memref<16x768xf32, #tpu.memory_space<vmem>>, vector<16x256xf32>
    %cst_290 = arith.constant 0.000000e+00 : f32
    %298 = vector.broadcast %cst_290 : f32 to vector<16x256xf32>
    %299 = arith.select %28, %297, %298 : vector<16x256xi1>, vector<16x256xf32>
    %c128_291 = arith.constant 128 : index
    %c256_292 = arith.constant 256 : index
    %300 = vector.load %arg5[%c128_291, %c256_292] : memref<144x512xf32, #tpu.memory_space<vmem>>, vector<16x256xf32>
    tpu.vector_store %arg5[%c128_291, %c256_292], %299 {strides = array<i32>} : memref<144x512xf32, #tpu.memory_space<vmem>>, vector<16x256xf32>,
    %c16_293 = arith.constant 16 : index
    %c0_294 = arith.constant 0 : index
    %301 = vector.load %arg2[%c16_293, %c0_294] : memref<24x256xf32, #tpu.memory_space<vmem>>, vector<8x144xf32>
    %c16_295 = arith.constant 16 : index
    %c144 = arith.constant 144 : index
    %302 = vector.load %arg2[%c16_295, %c144] : memref<24x256xf32, #tpu.memory_space<vmem>>, vector<8x1xf32>
    %c0_296 = arith.constant 0 : index
    %c0_297 = arith.constant 0 : index
    %303 = vector.load %arg5[%c0_296, %c0_297] : memref<144x512xf32, #tpu.memory_space<vmem>>, vector<144x512xf32>
    %cst_298 = arith.constant dense<0.000000e+00> : vector<8x512xf32>
    %304 = tpu.matmul %301, %303, %cst_298 {dimension_numbers = #tpu.dot_dimension_numbers<[1], [0], [0], [1], [0, 0, 1, 1], [], []>} : vector<8x144xf32>, vector<144x512xf32>, vector<8x512xf32> -> vector<8x512xf32>
    %305 = vector.broadcast %302 : vector<8x1xf32> to vector<8x512xf32>
    %306 = arith.addf %304, %305 : vector<8x512xf32>
    %c0_299 = arith.constant 0 : index
    %c0_300 = arith.constant 0 : index
    %307 = vector.load %arg3[%c0_299, %c0_300] : memref<8x512xf32, #tpu.memory_space<vmem>>, vector<8x512xf32>
    tpu.vector_store %arg3[%c0_299, %c0_300], %306 {strides = array<i32>} : memref<8x512xf32, #tpu.memory_space<vmem>>, vector<8x512xf32>,
    return
  }
  func.func @transform_0(%arg0: i32) -> (i32, i32, i32) {
    %c0_i32 = arith.constant 0 : i32
    %c0_i32_0 = arith.constant 0 : i32
    %c0_i32_1 = arith.constant 0 : i32
    %c0_i32_2 = arith.constant 0 : i32
    return %c0_i32, %c0_i32_0, %c0_i32_1 : i32, i32, i32
  }
  func.func @transform_1(%arg0: i32) -> (i32, i32) {
    %c0_i32 = arith.constant 0 : i32
    %c0_i32_0 = arith.constant 0 : i32
    %c0_i32_1 = arith.constant 0 : i32
    return %c0_i32, %c0_i32_0 : i32, i32
  }
  func.func @transform_2(%arg0: i32) -> (i32, i32) {
    %c0_i32 = arith.constant 0 : i32
    %c0_i32_0 = arith.constant 0 : i32
    %c0_i32_1 = arith.constant 0 : i32
    return %c0_i32, %c0_i32_0 : i32, i32
  }
}

</mosaic_0001>

<llo_original>
// kernel: model2_forward.1
$region0: #{model2_forward.1}
  #allocation0 [shape = 'u32[]', space=smem, size = 0x4, offset = 0x4, fixed_abs, tag = 'smem constant byte address 0x4 - core index']
  #allocation1 [shape = 'u32[144,128]{1,0:T(1,128)}', space=vmem, size = 0x12000, scoped, tag = 'internal scratch']
  #allocation2 [shape = 'f32[16,768]{1,0:T(8,128)}', space=vmem, size = 0xc000, scoped, tag = 'scratch operand']
  #allocation3 [shape = 'f32[144,512]{1,0:T(8,128)}', space=vmem, size = 0x48000, scoped, tag = 'scratch operand']
  %s0 = inlined_call_operand.vmem [shape: f32[2,4,256], index: 0, kind: input, shape index: {}]
  %s1 = inlined_call_operand.vmem [shape: f32[24,256], index: 1, kind: input, shape index: {}]
  %s2 = inlined_call_operand.vmem [shape: f32[8,512], index: 2, kind: output, shape index: {}]
  %s3 = sld [smem:[#allocation0]]
  $region18: #{model2_forward.1} parent=0
    _
  %s5 = ssub.s32 1, %s3
  %s6 = scalar_select 0, %s5, %s3
  // Predicated region
  $region2: #{model2_forward.1} parent=0 // pred_check
    _
  $region3: #{model2_forward.1} parent=0 // pred_check_branch
    %8 = sbr.rel (0) target = $region5
  $region4: #{model2_forward.1} parent=0 // pred_region
    _
  $region5: #{model2_forward.1} parent=0 // pred_fallthru
    _
  // Predicated region
  $region6: #{model2_forward.1} parent=0 // pred_check
    _
  $region7: #{model2_forward.1} parent=0 // pred_check_branch
    %10 = sbr.rel (0) target = $region9
  $region8: #{model2_forward.1} parent=0 // pred_region
    _
  $region9: #{model2_forward.1} parent=0 // pred_fallthru
    _
  %11 = vst [vmem:[#allocation2] sm:$0xff] 0.0
  %12 = vst [vmem:[#allocation2 + $0x8] sm:$0xff] 0.0
  %13 = vst [vmem:[#allocation2 + $0x10] sm:$0xff] 0.0
  %14 = vst [vmem:[#allocation2 + $0x18] sm:$0xff] 0.0
  %15 = vst [vmem:[#allocation2 + $0x20] sm:$0xff] 0.0
  %16 = vst [vmem:[#allocation2 + $0x28] sm:$0xff] 0.0
  %17 = vst [vmem:[#allocation2 + $0x30] sm:$0xff] 0.0
  %18 = vst [vmem:[#allocation2 + $0x38] sm:$0xff] 0.0
  %19 = vst [vmem:[#allocation2 + $0x40] sm:$0xff] 0.0
  %20 = vst [vmem:[#allocation2 + $0x48] sm:$0xff] 0.0
  %21 = vst [vmem:[#allocation2 + $0x50] sm:$0xff] 0.0
  %22 = vst [vmem:[#allocation2 + $0x58] sm:$0xff] 0.0
  %v23 = vlaneseq
  %v24 = vand.u32 %v23, 127
  %v25 = vadd.s32 %v24, 128
  %v26 = vand.u32 %v24, 15
  %v27 = vand.u32 %v25, 15
  %vm28 = vcmp.ge.s32.totalorder %v26, 1
  %vm29 = vcmp.ge.s32.totalorder %v27, 1
  %v30 = vsel %vm28, 1, 0
  %v31 = vsel %vm29, 1, 0
  %vm32 = vcmp.eq.s32.totalorder %v30, 1
  %vm33 = vcmp.eq.s32.totalorder %v31, 1
  %vm34 = vcmp.lt.s32.totalorder %v26, 15
  %vm35 = vcmp.lt.s32.totalorder %v27, 15
  %v36 = vsel %vm34, 1, 0
  %v37 = vsel %vm35, 1, 0
  %vm38 = vcmp.eq.s32.totalorder %v36, 1
  %vm39 = vcmp.eq.s32.totalorder %v37, 1
  %vm40 = vcmp.ge.s32.totalorder %v26, 2
  %vm41 = vcmp.ge.s32.totalorder %v27, 2
  %v42 = vsel %vm40, 1, 0
  %v43 = vsel %vm41, 1, 0
  %vm44 = vcmp.eq.s32.totalorder %v42, 1
  %vm45 = vcmp.eq.s32.totalorder %v43, 1
  %vm46 = vcmp.lt.s32.totalorder %v26, 14
  %vm47 = vcmp.lt.s32.totalorder %v27, 14
  %v48 = vsel %vm46, 1, 0
  %v49 = vsel %vm47, 1, 0
  %vm50 = vcmp.eq.s32.totalorder %v48, 1
  %vm51 = vcmp.eq.s32.totalorder %v49, 1
  %v52 = vand.u32 %v24, 1
  %v53 = vand.u32 %v25, 1
  %vm54 = vcmp.eq.s32.totalorder %v52, 0
  %vm55 = vcmp.eq.s32.totalorder %v53, 0
  %v56 = vsel %vm54, 1, 0
  %v57 = vsel %vm55, 1, 0
  %vm58 = vcmp.eq.s32.totalorder %v56, 1
  %vm59 = vcmp.eq.s32.totalorder %v57, 1
  %v60 = vshra.s32 %v24, 4
  %v61 = vshra.s32 %v25, 4
  %v62 = vand.u32 %v60, 1
  %v63 = vand.u32 %v61, 1
  %vm64 = vcmp.eq.s32.totalorder %v62, 0
  %vm65 = vcmp.eq.s32.totalorder %v63, 0
  %v66 = vsel %vm64, 1, 0
  %v67 = vsel %vm65, 1, 0
  %vm68 = vcmp.eq.s32.totalorder %v66, 1
  %vm69 = vcmp.eq.s32.totalorder %v67, 1
  %v70 = vld [vmem:[%s0] sm:$0xff]
  %v72 = vcombine.high %v70, %v70
  %73 = vrot.lane.b32.xlu0 %v70, 64
  %v74 = vpop.permute.xlu0 %73
  %75 = vrot.lane.b32.xlu0 %v72, 64
  %v76 = vpop.permute.xlu0 %75
  %vm77 = vcmask 523264
  %v78 = vsel %vm77, %v74, %v76
  %vm82 = vcmask 1043968
  %83 = vst.msk [vmem:[#allocation2] sm:$0xf] %vm82, %v74
  %84 = vst [vmem:[#allocation2 + $0x8] sm:$0xf] %v78
  %vm85 = vcmask 519168
  %86 = vst.msk [vmem:[#allocation2 + $0x10] sm:$0xf] %vm85, %v76
  %s87 = scalar_lea.vmem %s0, 8
  %v88 = vld [vmem:[%s87] sm:$0xff]
  %v90 = vcombine.high %v88, %v88
  %91 = vrot.lane.b32.xlu0 %v88, 64
  %v92 = vpop.permute.xlu0 %91
  %93 = vrot.lane.b32.xlu0 %v90, 64
  %v94 = vpop.permute.xlu0 %93
  %v95 = vsel %vm77, %v92, %v94
  %99 = vst.msk [vmem:[#allocation2 + $0x18] sm:$0xf] %vm82, %v92
  %100 = vst [vmem:[#allocation2 + $0x20] sm:$0xf] %v95
  %101 = vst.msk [vmem:[#allocation2 + $0x28] sm:$0xf] %vm85, %v94
  %v102 = vld [vmem:[#allocation2] sm:$0xff]
  %v103 = vld [vmem:[#allocation2 + $0x8] sm:$0xff]
  %v104 = vld [vmem:[#allocation2 + $0x10] sm:$0xff]
  %108 = vrot.lane.b32.xlu0 %v102, 81
  %v109 = vpop.permute.xlu0 %108
  %110 = vrot.lane.b32.xlu0 %v103, 81
  %v111 = vpop.permute.xlu0 %110
  %112 = vrot.lane.b32.xlu0 %v104, 81
  %v113 = vpop.permute.xlu0 %112
  %vm114 = vcmask 662528
  %v115 = vsel %vm114, %v109, %v111
  %v116 = vsel %vm114, %v111, %v113
  %v119 = vsel %vm32, %v115, 0.0
  %v120 = vsel %vm33, %v116, 0.0
  %121 = vst [vmem:[#allocation3] sm:$0xff] %v119
  %122 = vst [vmem:[#allocation3 + $0x8] sm:$0xff] %v120
  %v123 = vld [vmem:[#allocation2 + $0x18] sm:$0xff]
  %v124 = vld [vmem:[#allocation2 + $0x20] sm:$0xff]
  %v125 = vld [vmem:[#allocation2 + $0x28] sm:$0xff]
  %129 = vrot.lane.b32.xlu0 %v123, 81
  %v130 = vpop.permute.xlu0 %129
  %131 = vrot.lane.b32.xlu0 %v124, 81
  %v132 = vpop.permute.xlu0 %131
  %133 = vrot.lane.b32.xlu0 %v125, 81
  %v134 = vpop.permute.xlu0 %133
  %v135 = vsel %vm114, %v130, %v132
  %v136 = vsel %vm114, %v132, %v134
  %v139 = vsel %vm32, %v135, 0.0
  %v140 = vsel %vm33, %v136, 0.0
  %141 = vst [vmem:[#allocation3 + $0x10] sm:$0xff] %v139
  %142 = vst [vmem:[#allocation3 + $0x18] sm:$0xff] %v140
  %v143 = vld [vmem:[#allocation2] sm:$0xff]
  %v144 = vld [vmem:[#allocation2 + $0x8] sm:$0xff]
  %v145 = vld [vmem:[#allocation2 + $0x10] sm:$0xff]
  %149 = vrot.lane.b32.xlu0 %v143, 80
  %v150 = vpop.permute.xlu0 %149
  %151 = vrot.lane.b32.xlu0 %v144, 80
  %v152 = vpop.permute.xlu0 %151
  %153 = vrot.lane.b32.xlu0 %v145, 80
  %v154 = vpop.permute.xlu0 %153
  %vm155 = vcmask 654336
  %v156 = vsel %vm155, %v150, %v152
  %v157 = vsel %vm155, %v152, %v154
  %160 = vst [vmem:[#allocation3 + $0x20] sm:$0xff] %v156
  %161 = vst [vmem:[#allocation3 + $0x28] sm:$0xff] %v157
  %v162 = vld [vmem:[#allocation2 + $0x18] sm:$0xff]
  %v163 = vld [vmem:[#allocation2 + $0x20] sm:$0xff]
  %v164 = vld [vmem:[#allocation2 + $0x28] sm:$0xff]
  %168 = vrot.lane.b32.xlu0 %v162, 80
  %v169 = vpop.permute.xlu0 %168
  %170 = vrot.lane.b32.xlu0 %v163, 80
  %v171 = vpop.permute.xlu0 %170
  %172 = vrot.lane.b32.xlu0 %v164, 80
  %v173 = vpop.permute.xlu0 %172
  %v174 = vsel %vm155, %v169, %v171
  %v175 = vsel %vm155, %v171, %v173
  %178 = vst [vmem:[#allocation3 + $0x30] sm:$0xff] %v174
  %179 = vst [vmem:[#allocation3 + $0x38] sm:$0xff] %v175
  %v180 = vld [vmem:[#allocation2] sm:$0xff]
  %v181 = vld [vmem:[#allocation2 + $0x8] sm:$0xff]
  %v182 = vld [vmem:[#allocation2 + $0x10] sm:$0xff]
  %186 = vrot.lane.b32.xlu0 %v180, 79
  %v187 = vpop.permute.xlu0 %186
  %188 = vrot.lane.b32.xlu0 %v181, 79
  %v189 = vpop.permute.xlu0 %188
  %190 = vrot.lane.b32.xlu0 %v182, 79
  %v191 = vpop.permute.xlu0 %190
  %vm192 = vcmask 646144
  %v193 = vsel %vm192, %v187, %v189
  %v194 = vsel %vm192, %v189, %v191
  %v197 = vsel %vm38, %v193, 0.0
  %v198 = vsel %vm39, %v194, 0.0
  %199 = vst [vmem:[#allocation3 + $0x40] sm:$0xff] %v197
  %200 = vst [vmem:[#allocation3 + $0x48] sm:$0xff] %v198
  %v201 = vld [vmem:[#allocation2 + $0x18] sm:$0xff]
  %v202 = vld [vmem:[#allocation2 + $0x20] sm:$0xff]
  %v203 = vld [vmem:[#allocation2 + $0x28] sm:$0xff]
  %207 = vrot.lane.b32.xlu0 %v201, 79
  %v208 = vpop.permute.xlu0 %207
  %209 = vrot.lane.b32.xlu0 %v202, 79
  %v210 = vpop.permute.xlu0 %209
  %211 = vrot.lane.b32.xlu0 %v203, 79
  %v212 = vpop.permute.xlu0 %211
  %v213 = vsel %vm192, %v208, %v210
  %v214 = vsel %vm192, %v210, %v212
  %v217 = vsel %vm38, %v213, 0.0
  %v218 = vsel %vm39, %v214, 0.0
  %219 = vst [vmem:[#allocation3 + $0x50] sm:$0xff] %v217
  %220 = vst [vmem:[#allocation3 + $0x58] sm:$0xff] %v218
  %v221 = vld [vmem:[#allocation2] sm:$0xff]
  %v222 = vld [vmem:[#allocation2 + $0x8] sm:$0xff]
  %v223 = vld [vmem:[#allocation2 + $0x10] sm:$0xff]
  %227 = vrot.lane.b32.xlu0 %v221, 65
  %v228 = vpop.permute.xlu0 %227
  %229 = vrot.lane.b32.xlu0 %v222, 65
  %v230 = vpop.permute.xlu0 %229
  %231 = vrot.lane.b32.xlu0 %v223, 65
  %v232 = vpop.permute.xlu0 %231
  %vm233 = vcmask 531456
  %v234 = vsel %vm233, %v228, %v230
  %v235 = vsel %vm233, %v230, %v232
  %v238 = vsel %vm32, %v234, 0.0
  %v239 = vsel %vm33, %v235, 0.0
  %240 = vst [vmem:[#allocation3 + $0x60] sm:$0xff] %v238
  %241 = vst [vmem:[#allocation3 + $0x68] sm:$0xff] %v239
  %v242 = vld [vmem:[#allocation2 + $0x18] sm:$0xff]
  %v243 = vld [vmem:[#allocation2 + $0x20] sm:$0xff]
  %v244 = vld [vmem:[#allocation2 + $0x28] sm:$0xff]
  %248 = vrot.lane.b32.xlu0 %v242, 65
  %v249 = vpop.permute.xlu0 %248
  %250 = vrot.lane.b32.xlu0 %v243, 65
  %v251 = vpop.permute.xlu0 %250
  %252 = vrot.lane.b32.xlu0 %v244, 65
  %v253 = vpop.permute.xlu0 %252
  %v254 = vsel %vm233, %v249, %v251
  %v255 = vsel %vm233, %v251, %v253
  %v258 = vsel %vm32, %v254, 0.0
  %v259 = vsel %vm33, %v255, 0.0
  %260 = vst [vmem:[#allocation3 + $0x70] sm:$0xff] %v258
  %261 = vst [vmem:[#allocation3 + $0x78] sm:$0xff] %v259
  %v262 = vld [vmem:[#allocation2] sm:$0xff]
  %v263 = vld [vmem:[#allocation2 + $0x8] sm:$0xff]
  %v264 = vld [vmem:[#allocation2 + $0x10] sm:$0xff]
  %268 = vrot.lane.b32.xlu0 %v262, 64
  %v269 = vpop.permute.xlu0 %268
  %270 = vrot.lane.b32.xlu0 %v263, 64
  %v271 = vpop.permute.xlu0 %270
  %272 = vrot.lane.b32.xlu0 %v264, 64
  %v273 = vpop.permute.xlu0 %272
  %v274 = vsel %vm77, %v269, %v271
  %v275 = vsel %vm77, %v271, %v273
  %278 = vst [vmem:[#allocation3 + $0x80] sm:$0xff] %v274
  %279 = vst [vmem:[#allocation3 + $0x88] sm:$0xff] %v275
  %v280 = vld [vmem:[#allocation2 + $0x18] sm:$0xff]
  %v281 = vld [vmem:[#allocation2 + $0x20] sm:$0xff]
  %v282 = vld [vmem:[#allocation2 + $0x28] sm:$0xff]
  %286 = vrot.lane.b32.xlu0 %v280, 64
  %v287 = vpop.permute.xlu0 %286
  %288 = vrot.lane.b32.xlu0 %v281, 64
  %v289 = vpop.permute.xlu0 %288
  %290 = vrot.lane.b32.xlu0 %v282, 64
  %v291 = vpop.permute.xlu0 %290
  %v292 = vsel %vm77, %v287, %v289
  %v293 = vsel %vm77, %v289, %v291
  %296 = vst [vmem:[#allocation3 + $0x90] sm:$0xff] %v292
  %297 = vst [vmem:[#allocation3 + $0x98] sm:$0xff] %v293
  %v298 = vld [vmem:[#allocation2] sm:$0xff]
  %v299 = vld [vmem:[#allocation2 + $0x8] sm:$0xff]
  %v300 = vld [vmem:[#allocation2 + $0x10] sm:$0xff]
  %304 = vrot.lane.b32.xlu0 %v298, 63
  %v305 = vpop.permute.xlu0 %304
  %306 = vrot.lane.b32.xlu0 %v299, 63
  %v307 = vpop.permute.xlu0 %306
  %308 = vrot.lane.b32.xlu0 %v300, 63
  %v309 = vpop.permute.xlu0 %308
  %vm310 = vcmask 515072
  %v311 = vsel %vm310, %v305, %v307
  %v312 = vsel %vm310, %v307, %v309
  %v315 = vsel %vm38, %v311, 0.0
  %v316 = vsel %vm39, %v312, 0.0
  %317 = vst [vmem:[#allocation3 + $0xa0] sm:$0xff] %v315
  %318 = vst [vmem:[#allocation3 + $0xa8] sm:$0xff] %v316
  %v319 = vld [vmem:[#allocation2 + $0x18] sm:$0xff]
  %v320 = vld [vmem:[#allocation2 + $0x20] sm:$0xff]
  %v321 = vld [vmem:[#allocation2 + $0x28] sm:$0xff]
  %325 = vrot.lane.b32.xlu0 %v319, 63
  %v326 = vpop.permute.xlu0 %325
  %327 = vrot.lane.b32.xlu0 %v320, 63
  %v328 = vpop.permute.xlu0 %327
  %329 = vrot.lane.b32.xlu0 %v321, 63
  %v330 = vpop.permute.xlu0 %329
  %v331 = vsel %vm310, %v326, %v328
  %v332 = vsel %vm310, %v328, %v330
  %v335 = vsel %vm38, %v331, 0.0
  %v336 = vsel %vm39, %v332, 0.0
  %337 = vst [vmem:[#allocation3 + $0xb0] sm:$0xff] %v335
  %338 = vst [vmem:[#allocation3 + $0xb8] sm:$0xff] %v336
  %v339 = vld [vmem:[#allocation2] sm:$0xff]
  %v340 = vld [vmem:[#allocation2 + $0x8] sm:$0xff]
  %v341 = vld [vmem:[#allocation2 + $0x10] sm:$0xff]
  %345 = vrot.lane.b32.xlu0 %v339, 49
  %v346 = vpop.permute.xlu0 %345
  %347 = vrot.lane.b32.xlu0 %v340, 49
  %v348 = vpop.permute.xlu0 %347
  %349 = vrot.lane.b32.xlu0 %v341, 49
  %v350 = vpop.permute.xlu0 %349
  %vm351 = vcmask 400384
  %v352 = vsel %vm351, %v346, %v348
  %v353 = vsel %vm351, %v348, %v350
  %v356 = vsel %vm32, %v352, 0.0
  %v357 = vsel %vm33, %v353, 0.0
  %358 = vst [vmem:[#allocation3 + $0xc0] sm:$0xff] %v356
  %359 = vst [vmem:[#allocation3 + $0xc8] sm:$0xff] %v357
  %v360 = vld [vmem:[#allocation2 + $0x18] sm:$0xff]
  %v361 = vld [vmem:[#allocation2 + $0x20] sm:$0xff]
  %v362 = vld [vmem:[#allocation2 + $0x28] sm:$0xff]
  %366 = vrot.lane.b32.xlu0 %v360, 49
  %v367 = vpop.permute.xlu0 %366
  %368 = vrot.lane.b32.xlu0 %v361, 49
  %v369 = vpop.permute.xlu0 %368
  %370 = vrot.lane.b32.xlu0 %v362, 49
  %v371 = vpop.permute.xlu0 %370
  %v372 = vsel %vm351, %v367, %v369
  %v373 = vsel %vm351, %v369, %v371
  %v376 = vsel %vm32, %v372, 0.0
  %v377 = vsel %vm33, %v373, 0.0
  %378 = vst [vmem:[#allocation3 + $0xd0] sm:$0xff] %v376
  %379 = vst [vmem:[#allocation3 + $0xd8] sm:$0xff] %v377
  %v380 = vld [vmem:[#allocation2] sm:$0xff]
  %v381 = vld [vmem:[#allocation2 + $0x8] sm:$0xff]
  %v382 = vld [vmem:[#allocation2 + $0x10] sm:$0xff]
  %386 = vrot.lane.b32.xlu0 %v380, 48
  %v387 = vpop.permute.xlu0 %386
  %388 = vrot.lane.b32.xlu0 %v381, 48
  %v389 = vpop.permute.xlu0 %388
  %390 = vrot.lane.b32.xlu0 %v382, 48
  %v391 = vpop.permute.xlu0 %390
  %vm392 = vcmask 392192
  %v393 = vsel %vm392, %v387, %v389
  %v394 = vsel %vm392, %v389, %v391
  %397 = vst [vmem:[#allocation3 + $0xe0] sm:$0xff] %v393
  %398 = vst [vmem:[#allocation3 + $0xe8] sm:$0xff] %v394
  %v399 = vld [vmem:[#allocation2 + $0x18] sm:$0xff]
  %v400 = vld [vmem:[#allocation2 + $0x20] sm:$0xff]
  %v401 = vld [vmem:[#allocation2 + $0x28] sm:$0xff]
  %405 = vrot.lane.b32.xlu0 %v399, 48
  %v406 = vpop.permute.xlu0 %405
  %407 = vrot.lane.b32.xlu0 %v400, 48
  %v408 = vpop.permute.xlu0 %407
  %409 = vrot.lane.b32.xlu0 %v401, 48
  %v410 = vpop.permute.xlu0 %409
  %v411 = vsel %vm392, %v406, %v408
  %v412 = vsel %vm392, %v408, %v410
  %415 = vst [vmem:[#allocation3 + $0xf0] sm:$0xff] %v411
  %416 = vst [vmem:[#allocation3 + $0xf8] sm:$0xff] %v412
  %v417 = vld [vmem:[#allocation2] sm:$0xff]
  %v418 = vld [vmem:[#allocation2 + $0x8] sm:$0xff]
  %v419 = vld [vmem:[#allocation2 + $0x10] sm:$0xff]
  %423 = vrot.lane.b32.xlu0 %v417, 47
  %v424 = vpop.permute.xlu0 %423
  %425 = vrot.lane.b32.xlu0 %v418, 47
  %v426 = vpop.permute.xlu0 %425
  %427 = vrot.lane.b32.xlu0 %v419, 47
  %v428 = vpop.permute.xlu0 %427
  %vm429 = vcmask 384000
  %v430 = vsel %vm429, %v424, %v426
  %v431 = vsel %vm429, %v426, %v428
  %v434 = vsel %vm38, %v430, 0.0
  %v435 = vsel %vm39, %v431, 0.0
  %436 = vst [vmem:[#allocation3 + $0x100] sm:$0xff] %v434
  %437 = vst [vmem:[#allocation3 + $0x108] sm:$0xff] %v435
  %v438 = vld [vmem:[#allocation2 + $0x18] sm:$0xff]
  %v439 = vld [vmem:[#allocation2 + $0x20] sm:$0xff]
  %v440 = vld [vmem:[#allocation2 + $0x28] sm:$0xff]
  %444 = vrot.lane.b32.xlu0 %v438, 47
  %v445 = vpop.permute.xlu0 %444
  %446 = vrot.lane.b32.xlu0 %v439, 47
  %v447 = vpop.permute.xlu0 %446
  %448 = vrot.lane.b32.xlu0 %v440, 47
  %v449 = vpop.permute.xlu0 %448
  %v450 = vsel %vm429, %v445, %v447
  %v451 = vsel %vm429, %v447, %v449
  %v454 = vsel %vm38, %v450, 0.0
  %v455 = vsel %vm39, %v451, 0.0
  %456 = vst [vmem:[#allocation3 + $0x110] sm:$0xff] %v454
  %457 = vst [vmem:[#allocation3 + $0x118] sm:$0xff] %v455
  %v458 = vld [vmem:[%s1] sm:$0xff]
  %v459 = vld [vmem:[#allocation3] sm:$0xff]
  %v460 = vld [vmem:[#allocation3 + $0x8] sm:$0xff]
  %v461 = vld [vmem:[#allocation3 + $0x10] sm:$0xff]
  %v462 = vld [vmem:[#allocation3 + $0x18] sm:$0xff]
  %v463 = vld [vmem:[#allocation3 + $0x20] sm:$0xff]
  %v464 = vld [vmem:[#allocation3 + $0x28] sm:$0xff]
  %v465 = vld [vmem:[#allocation3 + $0x30] sm:$0xff]
  %v466 = vld [vmem:[#allocation3 + $0x38] sm:$0xff]
  %v467 = vld [vmem:[#allocation3 + $0x40] sm:$0xff]
  %v468 = vld [vmem:[#allocation3 + $0x48] sm:$0xff]
  %v469 = vld [vmem:[#allocation3 + $0x50] sm:$0xff]
  %v470 = vld [vmem:[#allocation3 + $0x58] sm:$0xff]
  %v471 = vld [vmem:[#allocation3 + $0x60] sm:$0xff]
  %v472 = vld [vmem:[#allocation3 + $0x68] sm:$0xff]
  %v473 = vld [vmem:[#allocation3 + $0x70] sm:$0xff]
  %v474 = vld [vmem:[#allocation3 + $0x78] sm:$0xff]
  %v475 = vld [vmem:[#allocation3 + $0x80] sm:$0xff]
  %v476 = vld [vmem:[#allocation3 + $0x88] sm:$0xff]
  %v477 = vld [vmem:[#allocation3 + $0x90] sm:$0xff]
  %v478 = vld [vmem:[#allocation3 + $0x98] sm:$0xff]
  %v479 = vld [vmem:[#allocation3 + $0xa0] sm:$0xff]
  %v480 = vld [vmem:[#allocation3 + $0xa8] sm:$0xff]
  %v481 = vld [vmem:[#allocation3 + $0xb0] sm:$0xff]
  %v482 = vld [vmem:[#allocation3 + $0xb8] sm:$0xff]
  %v483 = vld [vmem:[#allocation3 + $0xc0] sm:$0xff]
  %v484 = vld [vmem:[#allocation3 + $0xc8] sm:$0xff]
  %v485 = vld [vmem:[#allocation3 + $0xd0] sm:$0xff]
  %v486 = vld [vmem:[#allocation3 + $0xd8] sm:$0xff]
  %v487 = vld [vmem:[#allocation3 + $0xe0] sm:$0xff]
  %v488 = vld [vmem:[#allocation3 + $0xe8] sm:$0xff]
  %v489 = vld [vmem:[#allocation3 + $0xf0] sm:$0xff]
  %v490 = vld [vmem:[#allocation3 + $0xf8] sm:$0xff]
  %v491 = vld [vmem:[#allocation3 + $0x100] sm:$0xff]
  %v492 = vld [vmem:[#allocation3 + $0x108] sm:$0xff]
  %v493 = vld [vmem:[#allocation3 + $0x110] sm:$0xff]
  %v494 = vld [vmem:[#allocation3 + $0x118] sm:$0xff]
  %496 = vset.pattern.permute.xlu0 72
  %497 = vperm.xlu0 %496, %v458
  %v498 = vpop.permute.xlu0 %497
  %vm500 = vcmask 588800
  %v501 = vsel %vm500, %v458, 0
  %503 = vmatprep.subr.mxu0 0.0
  %504 = vmatpush1.msra.mxu0 0.0
  %505 = vmatprep.subr.mxu0 0.0
  %506 = vmatpush1.msra.mxu0 0.0
  %507 = vmatprep.subr.mxu0 0.0
  %508 = vmatpush1.msra.mxu0 0.0
  %509 = vmatprep.subr.mxu0 0.0
  %510 = vmatpush1.msra.mxu0 0.0
  %511 = vmatprep.subr.mxu0 0.0
  %512 = vmatpush1.msra.mxu0 0.0
  %513 = vmatprep.subr.mxu0 0.0
  %514 = vmatpush1.msra.mxu0 0.0
  %515 = vmatprep.subr.mxu0 0.0
  %516 = vmatpush1.msra.mxu0 0.0
  %517 = vmatprep.subr.mxu0 %v492
  %518 = vmatpush1.msra.mxu0 %v491
  %519 = vmatprep.subr.mxu0 %v488
  %520 = vmatpush1.msra.mxu0 %v487
  %521 = vmatprep.subr.mxu0 %v484
  %522 = vmatpush1.msra.mxu0 %v483
  %523 = vmatprep.subr.mxu0 %v480
  %524 = vmatpush1.msra.mxu0 %v479
  %525 = vmatprep.subr.mxu0 %v476
  %526 = vmatpush1.msra.mxu0 %v475
  %527 = vmatprep.subr.mxu0 %v472
  %528 = vmatpush1.msra.mxu0 %v471
  %529 = vmatprep.subr.mxu0 %v468
  %530 = vmatpush1.msra.mxu0 %v467
  %531 = vmatprep.subr.mxu0 %v464
  %532 = vmatpush1.msra.mxu0 %v463
  %533 = vmatprep.subr.mxu0 %v460
  %534 = vmatpush1.msra.mxu0 %v459
  %535 = vmatprep.subr.mxu0 0.0
  %536 = vmatpush2.msra.mxu0 0.0
  %537 = vmatprep.subr.mxu0 0.0
  %538 = vmatpush2.msra.mxu0 0.0
  %539 = vmatprep.subr.mxu0 0.0
  %540 = vmatpush2.msra.mxu0 0.0
  %541 = vmatprep.subr.mxu0 0.0
  %542 = vmatpush2.msra.mxu0 0.0
  %543 = vmatprep.subr.mxu0 0.0
  %544 = vmatpush2.msra.mxu0 0.0
  %545 = vmatprep.subr.mxu0 0.0
  %546 = vmatpush2.msra.mxu0 0.0
  %547 = vmatprep.subr.mxu0 0.0
  %548 = vmatpush2.msra.mxu0 0.0
  %549 = vmatprep.subr.mxu0 0.0
  %550 = vmatpush2.msra.mxu0 0.0
  %551 = vmatprep.subr.mxu0 0.0
  %552 = vmatpush2.msra.mxu0 0.0
  %553 = vmatprep.subr.mxu0 0.0
  %554 = vmatpush2.msra.mxu0 0.0
  %555 = vmatprep.subr.mxu0 0.0
  %556 = vmatpush2.msra.mxu0 0.0
  %557 = vmatprep.subr.mxu0 0.0
  %558 = vmatpush2.msra.mxu0 0.0
  %559 = vmatprep.subr.mxu0 0.0
  %560 = vmatpush2.msra.mxu0 0.0
  %561 = vmatprep.subr.mxu0 0.0
  %562 = vmatpush2.msra.mxu0 0.0
  %563 = vmatprep.subr.mxu0 0.0
  %564 = vmatpush2.msra.mxu0 0.0
  %565 = vmatprep.subr.mxu0 0.0
  %566 = vmatpush2.msra.mxu0 0.0
  %567 = vmatprep.mubr.f32.mxu0 0.0
  %568 = vmatmul.mubr.f32.gmra.mxu0 %v501
  %v569 = vpop.f32.mrf.mxu0
  %v570 = vadd.f32 %v498, %v569
  %v571 = vpop.f32.mrf.mxu0
  %v572 = vadd.f32 %v498, %v571
  %573 = vdwg.mxu0
  %574 = vmatprep.subr.mxu0 0.0
  %575 = vmatpush1.msra.mxu0 0.0
  %576 = vmatprep.subr.mxu0 0.0
  %577 = vmatpush1.msra.mxu0 0.0
  %578 = vmatprep.subr.mxu0 0.0
  %579 = vmatpush1.msra.mxu0 0.0
  %580 = vmatprep.subr.mxu0 0.0
  %581 = vmatpush1.msra.mxu0 0.0
  %582 = vmatprep.subr.mxu0 0.0
  %583 = vmatpush1.msra.mxu0 0.0
  %584 = vmatprep.subr.mxu0 0.0
  %585 = vmatpush1.msra.mxu0 0.0
  %586 = vmatprep.subr.mxu0 0.0
  %587 = vmatpush1.msra.mxu0 0.0
  %588 = vmatprep.subr.mxu0 %v494
  %589 = vmatpush1.msra.mxu0 %v493
  %590 = vmatprep.subr.mxu0 %v490
  %591 = vmatpush1.msra.mxu0 %v489
  %592 = vmatprep.subr.mxu0 %v486
  %593 = vmatpush1.msra.mxu0 %v485
  %594 = vmatprep.subr.mxu0 %v482
  %595 = vmatpush1.msra.mxu0 %v481
  %596 = vmatprep.subr.mxu0 %v478
  %597 = vmatpush1.msra.mxu0 %v477
  %598 = vmatprep.subr.mxu0 %v474
  %599 = vmatpush1.msra.mxu0 %v473
  %600 = vmatprep.subr.mxu0 %v470
  %601 = vmatpush1.msra.mxu0 %v469
  %602 = vmatprep.subr.mxu0 %v466
  %603 = vmatpush1.msra.mxu0 %v465
  %604 = vmatprep.subr.mxu0 %v462
  %605 = vmatpush1.msra.mxu0 %v461
  %606 = vmatprep.subr.mxu0 0.0
  %607 = vmatpush2.msra.mxu0 0.0
  %608 = vmatprep.subr.mxu0 0.0
  %609 = vmatpush2.msra.mxu0 0.0
  %610 = vmatprep.subr.mxu0 0.0
  %611 = vmatpush2.msra.mxu0 0.0
  %612 = vmatprep.subr.mxu0 0.0
  %613 = vmatpush2.msra.mxu0 0.0
  %614 = vmatprep.subr.mxu0 0.0
  %615 = vmatpush2.msra.mxu0 0.0
  %616 = vmatprep.subr.mxu0 0.0
  %617 = vmatpush2.msra.mxu0 0.0
  %618 = vmatprep.subr.mxu0 0.0
  %619 = vmatpush2.msra.mxu0 0.0
  %620 = vmatprep.subr.mxu0 0.0
  %621 = vmatpush2.msra.mxu0 0.0
  %622 = vmatprep.subr.mxu0 0.0
  %623 = vmatpush2.msra.mxu0 0.0
  %624 = vmatprep.subr.mxu0 0.0
  %625 = vmatpush2.msra.mxu0 0.0
  %626 = vmatprep.subr.mxu0 0.0
  %627 = vmatpush2.msra.mxu0 0.0
  %628 = vmatprep.subr.mxu0 0.0
  %629 = vmatpush2.msra.mxu0 0.0
  %630 = vmatprep.subr.mxu0 0.0
  %631 = vmatpush2.msra.mxu0 0.0
  %632 = vmatprep.subr.mxu0 0.0
  %633 = vmatpush2.msra.mxu0 0.0
  %634 = vmatprep.subr.mxu0 0.0
  %635 = vmatpush2.msra.mxu0 0.0
  %636 = vmatprep.subr.mxu0 0.0
  %637 = vmatpush2.msra.mxu0 0.0
  %638 = vmatprep.mubr.f32.mxu0 0.0
  %639 = vmatmul.mubr.f32.gmra.mxu0 %v501
  %v640 = vpop.f32.mrf.mxu0
  %v641 = vadd.f32 %v498, %v640
  %v642 = vpop.f32.mrf.mxu0
  %v643 = vadd.f32 %v498, %v642
  %644 = vdwg.mxu0
  %v645 = vmax.f32 %v570, 0.0
  %v646 = vmax.f32 %v572, 0.0
  %v647 = vmax.f32 %v641, 0.0
  %v648 = vmax.f32 %v643, 0.0
  %651 = vrot.lane.b32.xlu0 %v645, 64
  %v652 = vpop.permute.xlu0 %651
  %653 = vrot.lane.b32.xlu0 %v646, 64
  %v654 = vpop.permute.xlu0 %653
  %v655 = vsel %vm77, %v652, %v654
  %vm659 = vcmask 1048064
  %660 = vst.msk [vmem:[#allocation2 + $0x30] sm:$0xff] %vm659, %v652
  %661 = vst [vmem:[#allocation2 + $0x38] sm:$0xff] %v655
  %662 = vst.msk [vmem:[#allocation2 + $0x40] sm:$0xff] %vm77, %v654
  %665 = vrot.lane.b32.xlu0 %v647, 64
  %v666 = vpop.permute.xlu0 %665
  %667 = vrot.lane.b32.xlu0 %v648, 64
  %v668 = vpop.permute.xlu0 %667
  %v669 = vsel %vm77, %v666, %v668
  %673 = vst.msk [vmem:[#allocation2 + $0x48] sm:$0xff] %vm659, %v666
  %674 = vst [vmem:[#allocation2 + $0x50] sm:$0xff] %v669
  %675 = vst.msk [vmem:[#allocation2 + $0x58] sm:$0xff] %vm77, %v668
  %v676 = vld [vmem:[#allocation2 + $0x30] sm:$0xff]
  %v677 = vld [vmem:[#allocation2 + $0x38] sm:$0xff]
  %v678 = vld [vmem:[#allocation2 + $0x40] sm:$0xff]
  %682 = vrot.lane.b32.xlu0 %v676, 63
  %v683 = vpop.permute.xlu0 %682
  %684 = vrot.lane.b32.xlu0 %v677, 63
  %v685 = vpop.permute.xlu0 %684
  %686 = vrot.lane.b32.xlu0 %v678, 63
  %v687 = vpop.permute.xlu0 %686
  %v688 = vsel %vm310, %v683, %v685
  %v689 = vsel %vm310, %v685, %v687
  %v692 = vmax.f32 %v645, %v688
  %v693 = vmax.f32 %v646, %v689
  %694 = vrot.lane.b32.xlu0 %v676, 65
  %v695 = vpop.permute.xlu0 %694
  %696 = vrot.lane.b32.xlu0 %v677, 65
  %v697 = vpop.permute.xlu0 %696
  %698 = vrot.lane.b32.xlu0 %v678, 65
  %v699 = vpop.permute.xlu0 %698
  %v700 = vsel %vm233, %v695, %v697
  %v701 = vsel %vm233, %v697, %v699
  %v704 = vmax.f32 %v645, %v700
  %v705 = vmax.f32 %v646, %v701
  %v706 = vsel %vm58, %v692, %v704
  %v707 = vsel %vm59, %v693, %v705
  %708 = vrot.lane.b32.xlu0 %v676, 127
  %v709 = vpop.permute.xlu0 %708
  %710 = vrot.lane.b32.xlu0 %v677, 127
  %v711 = vpop.permute.xlu0 %710
  %712 = vrot.lane.b32.xlu0 %v678, 127
  %v713 = vpop.permute.xlu0 %712
  %vm714 = vcmask 1039360
  %v715 = vsel %vm714, %v709, %v711
  %v716 = vsel %vm714, %v711, %v713
  %v720 = vmax.f32 %v676, %v715
  %v721 = vmax.f32 %v677, %v716
  %v722 = vmax.f32 %v678, %v713
  %723 = vrot.lane.b32.xlu0 %v676, 1
  %v724 = vpop.permute.xlu0 %723
  %725 = vrot.lane.b32.xlu0 %v677, 1
  %v726 = vpop.permute.xlu0 %725
  %727 = vrot.lane.b32.xlu0 %v678, 1
  %v728 = vpop.permute.xlu0 %727
  %vm729 = vcmask 7168
  %v730 = vsel %vm729, %v724, %v726
  %v731 = vsel %vm729, %v726, %v728
  %v735 = vmax.f32 %v676, %v724
  %v736 = vmax.f32 %v677, %v730
  %v737 = vmax.f32 %v678, %v731
  %741 = vrot.lane.b32.xlu0 %v720, 48
  %v742 = vpop.permute.xlu0 %741
  %743 = vrot.lane.b32.xlu0 %v721, 48
  %v744 = vpop.permute.xlu0 %743
  %745 = vrot.lane.b32.xlu0 %v722, 48
  %v746 = vpop.permute.xlu0 %745
  %v747 = vsel %vm392, %v742, %v744
  %v748 = vsel %vm392, %v744, %v746
  %754 = vrot.lane.b32.xlu0 %v735, 48
  %v755 = vpop.permute.xlu0 %754
  %756 = vrot.lane.b32.xlu0 %v736, 48
  %v757 = vpop.permute.xlu0 %756
  %758 = vrot.lane.b32.xlu0 %v737, 48
  %v759 = vpop.permute.xlu0 %758
  %v760 = vsel %vm392, %v755, %v757
  %v761 = vsel %vm392, %v757, %v759
  %v764 = vsel %vm58, %v747, %v760
  %v765 = vsel %vm59, %v748, %v761
  %766 = vrot.lane.b32.xlu0 %v720, 80
  %v767 = vpop.permute.xlu0 %766
  %768 = vrot.lane.b32.xlu0 %v721, 80
  %v769 = vpop.permute.xlu0 %768
  %770 = vrot.lane.b32.xlu0 %v722, 80
  %v771 = vpop.permute.xlu0 %770
  %v772 = vsel %vm155, %v767, %v769
  %v773 = vsel %vm155, %v769, %v771
  %776 = vrot.lane.b32.xlu0 %v735, 80
  %v777 = vpop.permute.xlu0 %776
  %778 = vrot.lane.b32.xlu0 %v736, 80
  %v779 = vpop.permute.xlu0 %778
  %780 = vrot.lane.b32.xlu0 %v737, 80
  %v781 = vpop.permute.xlu0 %780
  %v782 = vsel %vm155, %v777, %v779
  %v783 = vsel %vm155, %v779, %v781
  %v786 = vsel %vm58, %v772, %v782
  %v787 = vsel %vm59, %v773, %v783
  %v788 = vmax.f32 %v706, %v764
  %v789 = vmax.f32 %v707, %v765
  %v790 = vmax.f32 %v706, %v786
  %v791 = vmax.f32 %v707, %v787
  %v792 = vsel %vm68, %v788, %v790
  %v793 = vsel %vm69, %v789, %v791
  %796 = vrot.lane.b32.xlu0 %v792, 64
  %v797 = vpop.permute.xlu0 %796
  %798 = vrot.lane.b32.xlu0 %v793, 64
  %v799 = vpop.permute.xlu0 %798
  %v800 = vsel %vm77, %v797, %v799
  %804 = vst.msk [vmem:[#allocation2] sm:$0xff] %vm659, %v797
  %805 = vst [vmem:[#allocation2 + $0x8] sm:$0xff] %v800
  %806 = vst.msk [vmem:[#allocation2 + $0x10] sm:$0xff] %vm77, %v799
  %v807 = vld [vmem:[#allocation2 + $0x48] sm:$0xff]
  %v808 = vld [vmem:[#allocation2 + $0x50] sm:$0xff]
  %v809 = vld [vmem:[#allocation2 + $0x58] sm:$0xff]
  %813 = vrot.lane.b32.xlu0 %v807, 63
  %v814 = vpop.permute.xlu0 %813
  %815 = vrot.lane.b32.xlu0 %v808, 63
  %v816 = vpop.permute.xlu0 %815
  %817 = vrot.lane.b32.xlu0 %v809, 63
  %v818 = vpop.permute.xlu0 %817
  %v819 = vsel %vm310, %v814, %v816
  %v820 = vsel %vm310, %v816, %v818
  %v823 = vmax.f32 %v647, %v819
  %v824 = vmax.f32 %v648, %v820
  %825 = vrot.lane.b32.xlu0 %v807, 65
  %v826 = vpop.permute.xlu0 %825
  %827 = vrot.lane.b32.xlu0 %v808, 65
  %v828 = vpop.permute.xlu0 %827
  %829 = vrot.lane.b32.xlu0 %v809, 65
  %v830 = vpop.permute.xlu0 %829
  %v831 = vsel %vm233, %v826, %v828
  %v832 = vsel %vm233, %v828, %v830
  %v835 = vmax.f32 %v647, %v831
  %v836 = vmax.f32 %v648, %v832
  %v837 = vsel %vm58, %v823, %v835
  %v838 = vsel %vm59, %v824, %v836
  %839 = vrot.lane.b32.xlu0 %v807, 127
  %v840 = vpop.permute.xlu0 %839
  %841 = vrot.lane.b32.xlu0 %v808, 127
  %v842 = vpop.permute.xlu0 %841
  %843 = vrot.lane.b32.xlu0 %v809, 127
  %v844 = vpop.permute.xlu0 %843
  %v845 = vsel %vm714, %v840, %v842
  %v846 = vsel %vm714, %v842, %v844
  %v850 = vmax.f32 %v807, %v845
  %v851 = vmax.f32 %v808, %v846
  %v852 = vmax.f32 %v809, %v844
  %853 = vrot.lane.b32.xlu0 %v807, 1
  %v854 = vpop.permute.xlu0 %853
  %855 = vrot.lane.b32.xlu0 %v808, 1
  %v856 = vpop.permute.xlu0 %855
  %857 = vrot.lane.b32.xlu0 %v809, 1
  %v858 = vpop.permute.xlu0 %857
  %v859 = vsel %vm729, %v854, %v856
  %v860 = vsel %vm729, %v856, %v858
  %v864 = vmax.f32 %v807, %v854
  %v865 = vmax.f32 %v808, %v859
  %v866 = vmax.f32 %v809, %v860
  %870 = vrot.lane.b32.xlu0 %v850, 48
  %v871 = vpop.permute.xlu0 %870
  %872 = vrot.lane.b32.xlu0 %v851, 48
  %v873 = vpop.permute.xlu0 %872
  %874 = vrot.lane.b32.xlu0 %v852, 48
  %v875 = vpop.permute.xlu0 %874
  %v876 = vsel %vm392, %v871, %v873
  %v877 = vsel %vm392, %v873, %v875
  %883 = vrot.lane.b32.xlu0 %v864, 48
  %v884 = vpop.permute.xlu0 %883
  %885 = vrot.lane.b32.xlu0 %v865, 48
  %v886 = vpop.permute.xlu0 %885
  %887 = vrot.lane.b32.xlu0 %v866, 48
  %v888 = vpop.permute.xlu0 %887
  %v889 = vsel %vm392, %v884, %v886
  %v890 = vsel %vm392, %v886, %v888
  %v893 = vsel %vm58, %v876, %v889
  %v894 = vsel %vm59, %v877, %v890
  %895 = vrot.lane.b32.xlu0 %v850, 80
  %v896 = vpop.permute.xlu0 %895
  %897 = vrot.lane.b32.xlu0 %v851, 80
  %v898 = vpop.permute.xlu0 %897
  %899 = vrot.lane.b32.xlu0 %v852, 80
  %v900 = vpop.permute.xlu0 %899
  %v901 = vsel %vm155, %v896, %v898
  %v902 = vsel %vm155, %v898, %v900
  %905 = vrot.lane.b32.xlu0 %v864, 80
  %v906 = vpop.permute.xlu0 %905
  %907 = vrot.lane.b32.xlu0 %v865, 80
  %v908 = vpop.permute.xlu0 %907
  %909 = vrot.lane.b32.xlu0 %v866, 80
  %v910 = vpop.permute.xlu0 %909
  %v911 = vsel %vm155, %v906, %v908
  %v912 = vsel %vm155, %v908, %v910
  %v915 = vsel %vm58, %v901, %v911
  %v916 = vsel %vm59, %v902, %v912
  %v917 = vmax.f32 %v837, %v893
  %v918 = vmax.f32 %v838, %v894
  %v919 = vmax.f32 %v837, %v915
  %v920 = vmax.f32 %v838, %v916
  %v921 = vsel %vm68, %v917, %v919
  %v922 = vsel %vm69, %v918, %v920
  %925 = vrot.lane.b32.xlu0 %v921, 64
  %v926 = vpop.permute.xlu0 %925
  %927 = vrot.lane.b32.xlu0 %v922, 64
  %v928 = vpop.permute.xlu0 %927
  %v929 = vsel %vm77, %v926, %v928
  %933 = vst.msk [vmem:[#allocation2 + $0x18] sm:$0xff] %vm659, %v926
  %934 = vst [vmem:[#allocation2 + $0x20] sm:$0xff] %v929
  %935 = vst.msk [vmem:[#allocation2 + $0x28] sm:$0xff] %vm77, %v928
  %v936 = vld [vmem:[#allocation2] sm:$0xff]
  %v937 = vld [vmem:[#allocation2 + $0x8] sm:$0xff]
  %v938 = vld [vmem:[#allocation2 + $0x10] sm:$0xff]
  %942 = vrot.lane.b32.xlu0 %v936, 98
  %v943 = vpop.permute.xlu0 %942
  %944 = vrot.lane.b32.xlu0 %v937, 98
  %v945 = vpop.permute.xlu0 %944
  %946 = vrot.lane.b32.xlu0 %v938, 98
  %v947 = vpop.permute.xlu0 %946
  %vm948 = vcmask 801792
  %v949 = vsel %vm948, %v943, %v945
  %v950 = vsel %vm948, %v945, %v947
  %v953 = vsel %vm44, %v949, 0.0
  %v954 = vsel %vm45, %v950, 0.0
  %955 = vst [vmem:[#allocation3] sm:$0xff] %v953
  %956 = vst [vmem:[#allocation3 + $0x8] sm:$0xff] %v954
  %v957 = vld [vmem:[#allocation2 + $0x18] sm:$0xff]
  %v958 = vld [vmem:[#allocation2 + $0x20] sm:$0xff]
  %v959 = vld [vmem:[#allocation2 + $0x28] sm:$0xff]
  %963 = vrot.lane.b32.xlu0 %v957, 98
  %v964 = vpop.permute.xlu0 %963
  %965 = vrot.lane.b32.xlu0 %v958, 98
  %v966 = vpop.permute.xlu0 %965
  %967 = vrot.lane.b32.xlu0 %v959, 98
  %v968 = vpop.permute.xlu0 %967
  %v969 = vsel %vm948, %v964, %v966
  %v970 = vsel %vm948, %v966, %v968
  %v973 = vsel %vm44, %v969, 0.0
  %v974 = vsel %vm45, %v970, 0.0
  %975 = vst [vmem:[#allocation3 + $0x10] sm:$0xff] %v973
  %976 = vst [vmem:[#allocation3 + $0x18] sm:$0xff] %v974
  %v977 = vld [vmem:[#allocation2] sm:$0xff]
  %v978 = vld [vmem:[#allocation2 + $0x8] sm:$0xff]
  %v979 = vld [vmem:[#allocation2 + $0x10] sm:$0xff]
  %983 = vrot.lane.b32.xlu0 %v977, 96
  %v984 = vpop.permute.xlu0 %983
  %985 = vrot.lane.b32.xlu0 %v978, 96
  %v986 = vpop.permute.xlu0 %985
  %987 = vrot.lane.b32.xlu0 %v979, 96
  %v988 = vpop.permute.xlu0 %987
  %vm989 = vcmask 785408
  %v990 = vsel %vm989, %v984, %v986
  %v991 = vsel %vm989, %v986, %v988
  %994 = vst [vmem:[#allocation3 + $0x20] sm:$0xff] %v990
  %995 = vst [vmem:[#allocation3 + $0x28] sm:$0xff] %v991
  %v996 = vld [vmem:[#allocation2 + $0x18] sm:$0xff]
  %v997 = vld [vmem:[#allocation2 + $0x20] sm:$0xff]
  %v998 = vld [vmem:[#allocation2 + $0x28] sm:$0xff]
  %1002 = vrot.lane.b32.xlu0 %v996, 96
  %v1003 = vpop.permute.xlu0 %1002
  %1004 = vrot.lane.b32.xlu0 %v997, 96
  %v1005 = vpop.permute.xlu0 %1004
  %1006 = vrot.lane.b32.xlu0 %v998, 96
  %v1007 = vpop.permute.xlu0 %1006
  %v1008 = vsel %vm989, %v1003, %v1005
  %v1009 = vsel %vm989, %v1005, %v1007
  %1012 = vst [vmem:[#allocation3 + $0x30] sm:$0xff] %v1008
  %1013 = vst [vmem:[#allocation3 + $0x38] sm:$0xff] %v1009
  %v1014 = vld [vmem:[#allocation2] sm:$0xff]
  %v1015 = vld [vmem:[#allocation2 + $0x8] sm:$0xff]
  %v1016 = vld [vmem:[#allocation2 + $0x10] sm:$0xff]
  %1020 = vrot.lane.b32.xlu0 %v1014, 94
  %v1021 = vpop.permute.xlu0 %1020
  %1022 = vrot.lane.b32.xlu0 %v1015, 94
  %v1023 = vpop.permute.xlu0 %1022
  %1024 = vrot.lane.b32.xlu0 %v1016, 94
  %v1025 = vpop.permute.xlu0 %1024
  %vm1026 = vcmask 769024
  %v1027 = vsel %vm1026, %v1021, %v1023
  %v1028 = vsel %vm1026, %v1023, %v1025
  %v1031 = vsel %vm50, %v1027, 0.0
  %v1032 = vsel %vm51, %v1028, 0.0
  %1033 = vst [vmem:[#allocation3 + $0x40] sm:$0xff] %v1031
  %1034 = vst [vmem:[#allocation3 + $0x48] sm:$0xff] %v1032
  %v1035 = vld [vmem:[#allocation2 + $0x18] sm:$0xff]
  %v1036 = vld [vmem:[#allocation2 + $0x20] sm:$0xff]
  %v1037 = vld [vmem:[#allocation2 + $0x28] sm:$0xff]
  %1041 = vrot.lane.b32.xlu0 %v1035, 94
  %v1042 = vpop.permute.xlu0 %1041
  %1043 = vrot.lane.b32.xlu0 %v1036, 94
  %v1044 = vpop.permute.xlu0 %1043
  %1045 = vrot.lane.b32.xlu0 %v1037, 94
  %v1046 = vpop.permute.xlu0 %1045
  %v1047 = vsel %vm1026, %v1042, %v1044
  %v1048 = vsel %vm1026, %v1044, %v1046
  %v1051 = vsel %vm50, %v1047, 0.0
  %v1052 = vsel %vm51, %v1048, 0.0
  %1053 = vst [vmem:[#allocation3 + $0x50] sm:$0xff] %v1051
  %1054 = vst [vmem:[#allocation3 + $0x58] sm:$0xff] %v1052
  %v1055 = vld [vmem:[#allocation2] sm:$0xff]
  %v1056 = vld [vmem:[#allocation2 + $0x8] sm:$0xff]
  %v1057 = vld [vmem:[#allocation2 + $0x10] sm:$0xff]
  %1061 = vrot.lane.b32.xlu0 %v1055, 66
  %v1062 = vpop.permute.xlu0 %1061
  %1063 = vrot.lane.b32.xlu0 %v1056, 66
  %v1064 = vpop.permute.xlu0 %1063
  %1065 = vrot.lane.b32.xlu0 %v1057, 66
  %v1066 = vpop.permute.xlu0 %1065
  %vm1067 = vcmask 539648
  %v1068 = vsel %vm1067, %v1062, %v1064
  %v1069 = vsel %vm1067, %v1064, %v1066
  %v1072 = vsel %vm44, %v1068, 0.0
  %v1073 = vsel %vm45, %v1069, 0.0
  %1074 = vst [vmem:[#allocation3 + $0x60] sm:$0xff] %v1072
  %1075 = vst [vmem:[#allocation3 + $0x68] sm:$0xff] %v1073
  %v1076 = vld [vmem:[#allocation2 + $0x18] sm:$0xff]
  %v1077 = vld [vmem:[#allocation2 + $0x20] sm:$0xff]
  %v1078 = vld [vmem:[#allocation2 + $0x28] sm:$0xff]
  %1082 = vrot.lane.b32.xlu0 %v1076, 66
  %v1083 = vpop.permute.xlu0 %1082
  %1084 = vrot.lane.b32.xlu0 %v1077, 66
  %v1085 = vpop.permute.xlu0 %1084
  %1086 = vrot.lane.b32.xlu0 %v1078, 66
  %v1087 = vpop.permute.xlu0 %1086
  %v1088 = vsel %vm1067, %v1083, %v1085
  %v1089 = vsel %vm1067, %v1085, %v1087
  %v1092 = vsel %vm44, %v1088, 0.0
  %v1093 = vsel %vm45, %v1089, 0.0
  %1094 = vst [vmem:[#allocation3 + $0x70] sm:$0xff] %v1092
  %1095 = vst [vmem:[#allocation3 + $0x78] sm:$0xff] %v1093
  %v1096 = vld [vmem:[#allocation2] sm:$0xff]
  %v1097 = vld [vmem:[#allocation2 + $0x8] sm:$0xff]
  %v1098 = vld [vmem:[#allocation2 + $0x10] sm:$0xff]
  %1102 = vrot.lane.b32.xlu0 %v1096, 64
  %v1103 = vpop.permute.xlu0 %1102
  %1104 = vrot.lane.b32.xlu0 %v1097, 64
  %v1105 = vpop.permute.xlu0 %1104
  %1106 = vrot.lane.b32.xlu0 %v1098, 64
  %v1107 = vpop.permute.xlu0 %1106
  %v1108 = vsel %vm77, %v1103, %v1105
  %v1109 = vsel %vm77, %v1105, %v1107
  %1112 = vst [vmem:[#allocation3 + $0x80] sm:$0xff] %v1108
  %1113 = vst [vmem:[#allocation3 + $0x88] sm:$0xff] %v1109
  %v1114 = vld [vmem:[#allocation2 + $0x18] sm:$0xff]
  %v1115 = vld [vmem:[#allocation2 + $0x20] sm:$0xff]
  %v1116 = vld [vmem:[#allocation2 + $0x28] sm:$0xff]
  %1120 = vrot.lane.b32.xlu0 %v1114, 64
  %v1121 = vpop.permute.xlu0 %1120
  %1122 = vrot.lane.b32.xlu0 %v1115, 64
  %v1123 = vpop.permute.xlu0 %1122
  %1124 = vrot.lane.b32.xlu0 %v1116, 64
  %v1125 = vpop.permute.xlu0 %1124
  %v1126 = vsel %vm77, %v1121, %v1123
  %v1127 = vsel %vm77, %v1123, %v1125
  %1130 = vst [vmem:[#allocation3 + $0x90] sm:$0xff] %v1126
  %1131 = vst [vmem:[#allocation3 + $0x98] sm:$0xff] %v1127
  %v1132 = vld [vmem:[#allocation2] sm:$0xff]
  %v1133 = vld [vmem:[#allocation2 + $0x8] sm:$0xff]
  %v1134 = vld [vmem:[#allocation2 + $0x10] sm:$0xff]
  %1138 = vrot.lane.b32.xlu0 %v1132, 62
  %v1139 = vpop.permute.xlu0 %1138
  %1140 = vrot.lane.b32.xlu0 %v1133, 62
  %v1141 = vpop.permute.xlu0 %1140
  %1142 = vrot.lane.b32.xlu0 %v1134, 62
  %v1143 = vpop.permute.xlu0 %1142
  %vm1144 = vcmask 506880
  %v1145 = vsel %vm1144, %v1139, %v1141
  %v1146 = vsel %vm1144, %v1141, %v1143
  %v1149 = vsel %vm50, %v1145, 0.0
  %v1150 = vsel %vm51, %v1146, 0.0
  %1151 = vst [vmem:[#allocation3 + $0xa0] sm:$0xff] %v1149
  %1152 = vst [vmem:[#allocation3 + $0xa8] sm:$0xff] %v1150
  %v1153 = vld [vmem:[#allocation2 + $0x18] sm:$0xff]
  %v1154 = vld [vmem:[#allocation2 + $0x20] sm:$0xff]
  %v1155 = vld [vmem:[#allocation2 + $0x28] sm:$0xff]
  %1159 = vrot.lane.b32.xlu0 %v1153, 62
  %v1160 = vpop.permute.xlu0 %1159
  %1161 = vrot.lane.b32.xlu0 %v1154, 62
  %v1162 = vpop.permute.xlu0 %1161
  %1163 = vrot.lane.b32.xlu0 %v1155, 62
  %v1164 = vpop.permute.xlu0 %1163
  %v1165 = vsel %vm1144, %v1160, %v1162
  %v1166 = vsel %vm1144, %v1162, %v1164
  %v1169 = vsel %vm50, %v1165, 0.0
  %v1170 = vsel %vm51, %v1166, 0.0
  %1171 = vst [vmem:[#allocation3 + $0xb0] sm:$0xff] %v1169
  %1172 = vst [vmem:[#allocation3 + $0xb8] sm:$0xff] %v1170
  %v1173 = vld [vmem:[#allocation2] sm:$0xff]
  %v1174 = vld [vmem:[#allocation2 + $0x8] sm:$0xff]
  %v1175 = vld [vmem:[#allocation2 + $0x10] sm:$0xff]
  %1179 = vrot.lane.b32.xlu0 %v1173, 34
  %v1180 = vpop.permute.xlu0 %1179
  %1181 = vrot.lane.b32.xlu0 %v1174, 34
  %v1182 = vpop.permute.xlu0 %1181
  %1183 = vrot.lane.b32.xlu0 %v1175, 34
  %v1184 = vpop.permute.xlu0 %1183
  %vm1185 = vcmask 277504
  %v1186 = vsel %vm1185, %v1180, %v1182
  %v1187 = vsel %vm1185, %v1182, %v1184
  %v1190 = vsel %vm44, %v1186, 0.0
  %v1191 = vsel %vm45, %v1187, 0.0
  %1192 = vst [vmem:[#allocation3 + $0xc0] sm:$0xff] %v1190
  %1193 = vst [vmem:[#allocation3 + $0xc8] sm:$0xff] %v1191
  %v1194 = vld [vmem:[#allocation2 + $0x18] sm:$0xff]
  %v1195 = vld [vmem:[#allocation2 + $0x20] sm:$0xff]
  %v1196 = vld [vmem:[#allocation2 + $0x28] sm:$0xff]
  %1200 = vrot.lane.b32.xlu0 %v1194, 34
  %v1201 = vpop.permute.xlu0 %1200
  %1202 = vrot.lane.b32.xlu0 %v1195, 34
  %v1203 = vpop.permute.xlu0 %1202
  %1204 = vrot.lane.b32.xlu0 %v1196, 34
  %v1205 = vpop.permute.xlu0 %1204
  %v1206 = vsel %vm1185, %v1201, %v1203
  %v1207 = vsel %vm1185, %v1203, %v1205
  %v1210 = vsel %vm44, %v1206, 0.0
  %v1211 = vsel %vm45, %v1207, 0.0
  %1212 = vst [vmem:[#allocation3 + $0xd0] sm:$0xff] %v1210
  %1213 = vst [vmem:[#allocation3 + $0xd8] sm:$0xff] %v1211
  %v1214 = vld [vmem:[#allocation2] sm:$0xff]
  %v1215 = vld [vmem:[#allocation2 + $0x8] sm:$0xff]
  %v1216 = vld [vmem:[#allocation2 + $0x10] sm:$0xff]
  %1220 = vrot.lane.b32.xlu0 %v1214, 32
  %v1221 = vpop.permute.xlu0 %1220
  %1222 = vrot.lane.b32.xlu0 %v1215, 32
  %v1223 = vpop.permute.xlu0 %1222
  %1224 = vrot.lane.b32.xlu0 %v1216, 32
  %v1225 = vpop.permute.xlu0 %1224
  %vm1226 = vcmask 261120
  %v1227 = vsel %vm1226, %v1221, %v1223
  %v1228 = vsel %vm1226, %v1223, %v1225
  %1231 = vst [vmem:[#allocation3 + $0xe0] sm:$0xff] %v1227
  %1232 = vst [vmem:[#allocation3 + $0xe8] sm:$0xff] %v1228
  %v1233 = vld [vmem:[#allocation2 + $0x18] sm:$0xff]
  %v1234 = vld [vmem:[#allocation2 + $0x20] sm:$0xff]
  %v1235 = vld [vmem:[#allocation2 + $0x28] sm:$0xff]
  %1239 = vrot.lane.b32.xlu0 %v1233, 32
  %v1240 = vpop.permute.xlu0 %1239
  %1241 = vrot.lane.b32.xlu0 %v1234, 32
  %v1242 = vpop.permute.xlu0 %1241
  %1243 = vrot.lane.b32.xlu0 %v1235, 32
  %v1244 = vpop.permute.xlu0 %1243
  %v1245 = vsel %vm1226, %v1240, %v1242
  %v1246 = vsel %vm1226, %v1242, %v1244
  %1249 = vst [vmem:[#allocation3 + $0xf0] sm:$0xff] %v1245
  %1250 = vst [vmem:[#allocation3 + $0xf8] sm:$0xff] %v1246
  %v1251 = vld [vmem:[#allocation2] sm:$0xff]
  %v1252 = vld [vmem:[#allocation2 + $0x8] sm:$0xff]
  %v1253 = vld [vmem:[#allocation2 + $0x10] sm:$0xff]
  %1257 = vrot.lane.b32.xlu0 %v1251, 30
  %v1258 = vpop.permute.xlu0 %1257
  %1259 = vrot.lane.b32.xlu0 %v1252, 30
  %v1260 = vpop.permute.xlu0 %1259
  %1261 = vrot.lane.b32.xlu0 %v1253, 30
  %v1262 = vpop.permute.xlu0 %1261
  %vm1263 = vcmask 244736
  %v1264 = vsel %vm1263, %v1258, %v1260
  %v1265 = vsel %vm1263, %v1260, %v1262
  %v1268 = vsel %vm50, %v1264, 0.0
  %v1269 = vsel %vm51, %v1265, 0.0
  %1270 = vst [vmem:[#allocation3 + $0x100] sm:$0xff] %v1268
  %1271 = vst [vmem:[#allocation3 + $0x108] sm:$0xff] %v1269
  %v1272 = vld [vmem:[#allocation2 + $0x18] sm:$0xff]
  %v1273 = vld [vmem:[#allocation2 + $0x20] sm:$0xff]
  %v1274 = vld [vmem:[#allocation2 + $0x28] sm:$0xff]
  %1278 = vrot.lane.b32.xlu0 %v1272, 30
  %v1279 = vpop.permute.xlu0 %1278
  %1280 = vrot.lane.b32.xlu0 %v1273, 30
  %v1281 = vpop.permute.xlu0 %1280
  %1282 = vrot.lane.b32.xlu0 %v1274, 30
  %v1283 = vpop.permute.xlu0 %1282
  %v1284 = vsel %vm1263, %v1279, %v1281
  %v1285 = vsel %vm1263, %v1281, %v1283
  %v1288 = vsel %vm50, %v1284, 0.0
  %v1289 = vsel %vm51, %v1285, 0.0
  %1290 = vst [vmem:[#allocation3 + $0x110] sm:$0xff] %v1288
  %1291 = vst [vmem:[#allocation3 + $0x118] sm:$0xff] %v1289
  %v1292 = vld [vmem:[%s1 + $0x10] sm:$0xff]
  %v1293 = vld [vmem:[#allocation3] sm:$0xff]
  %v1294 = vld [vmem:[#allocation3 + $0x8] sm:$0xff]
  %v1295 = vld [vmem:[#allocation3 + $0x10] sm:$0xff]
  %v1296 = vld [vmem:[#allocation3 + $0x18] sm:$0xff]
  %v1297 = vld [vmem:[#allocation3 + $0x20] sm:$0xff]
  %v1298 = vld [vmem:[#allocation3 + $0x28] sm:$0xff]
  %v1299 = vld [vmem:[#allocation3 + $0x30] sm:$0xff]
  %v1300 = vld [vmem:[#allocation3 + $0x38] sm:$0xff]
  %v1301 = vld [vmem:[#allocation3 + $0x40] sm:$0xff]
  %v1302 = vld [vmem:[#allocation3 + $0x48] sm:$0xff]
  %v1303 = vld [vmem:[#allocation3 + $0x50] sm:$0xff]
  %v1304 = vld [vmem:[#allocation3 + $0x58] sm:$0xff]
  %v1305 = vld [vmem:[#allocation3 + $0x60] sm:$0xff]
  %v1306 = vld [vmem:[#allocation3 + $0x68] sm:$0xff]
  %v1307 = vld [vmem:[#allocation3 + $0x70] sm:$0xff]
  %v1308 = vld [vmem:[#allocation3 + $0x78] sm:$0xff]
  %v1309 = vld [vmem:[#allocation3 + $0x80] sm:$0xff]
  %v1310 = vld [vmem:[#allocation3 + $0x88] sm:$0xff]
  %v1311 = vld [vmem:[#allocation3 + $0x90] sm:$0xff]
  %v1312 = vld [vmem:[#allocation3 + $0x98] sm:$0xff]
  %v1313 = vld [vmem:[#allocation3 + $0xa0] sm:$0xff]
  %v1314 = vld [vmem:[#allocation3 + $0xa8] sm:$0xff]
  %v1315 = vld [vmem:[#allocation3 + $0xb0] sm:$0xff]
  %v1316 = vld [vmem:[#allocation3 + $0xb8] sm:$0xff]
  %v1317 = vld [vmem:[#allocation3 + $0xc0] sm:$0xff]
  %v1318 = vld [vmem:[#allocation3 + $0xc8] sm:$0xff]
  %v1319 = vld [vmem:[#allocation3 + $0xd0] sm:$0xff]
  %v1320 = vld [vmem:[#allocation3 + $0xd8] sm:$0xff]
  %v1321 = vld [vmem:[#allocation3 + $0xe0] sm:$0xff]
  %v1322 = vld [vmem:[#allocation3 + $0xe8] sm:$0xff]
  %v1323 = vld [vmem:[#allocation3 + $0xf0] sm:$0xff]
  %v1324 = vld [vmem:[#allocation3 + $0xf8] sm:$0xff]
  %v1325 = vld [vmem:[#allocation3 + $0x100] sm:$0xff]
  %v1326 = vld [vmem:[#allocation3 + $0x108] sm:$0xff]
  %v1327 = vld [vmem:[#allocation3 + $0x110] sm:$0xff]
  %v1328 = vld [vmem:[#allocation3 + $0x118] sm:$0xff]
  %1330 = vset.pattern.permute.xlu0 72
  %1331 = vperm.xlu0 %1330, %v1292
  %v1332 = vpop.permute.xlu0 %1331
  %v1334 = vsel %vm500, %v1292, 0
  %1336 = vmatprep.subr.mxu0 0.0
  %1337 = vmatpush1.msra.mxu0 0.0
  %1338 = vmatprep.subr.mxu0 0.0
  %1339 = vmatpush1.msra.mxu0 0.0
  %1340 = vmatprep.subr.mxu0 0.0
  %1341 = vmatpush1.msra.mxu0 0.0
  %1342 = vmatprep.subr.mxu0 0.0
  %1343 = vmatpush1.msra.mxu0 0.0
  %1344 = vmatprep.subr.mxu0 0.0
  %1345 = vmatpush1.msra.mxu0 0.0
  %1346 = vmatprep.subr.mxu0 0.0
  %1347 = vmatpush1.msra.mxu0 0.0
  %1348 = vmatprep.subr.mxu0 0.0
  %1349 = vmatpush1.msra.mxu0 0.0
  %1350 = vmatprep.subr.mxu0 %v1326
  %1351 = vmatpush1.msra.mxu0 %v1325
  %1352 = vmatprep.subr.mxu0 %v1322
  %1353 = vmatpush1.msra.mxu0 %v1321
  %1354 = vmatprep.subr.mxu0 %v1318
  %1355 = vmatpush1.msra.mxu0 %v1317
  %1356 = vmatprep.subr.mxu0 %v1314
  %1357 = vmatpush1.msra.mxu0 %v1313
  %1358 = vmatprep.subr.mxu0 %v1310
  %1359 = vmatpush1.msra.mxu0 %v1309
  %1360 = vmatprep.subr.mxu0 %v1306
  %1361 = vmatpush1.msra.mxu0 %v1305
  %1362 = vmatprep.subr.mxu0 %v1302
  %1363 = vmatpush1.msra.mxu0 %v1301
  %1364 = vmatprep.subr.mxu0 %v1298
  %1365 = vmatpush1.msra.mxu0 %v1297
  %1366 = vmatprep.subr.mxu0 %v1294
  %1367 = vmatpush1.msra.mxu0 %v1293
  %1368 = vmatprep.subr.mxu0 0.0
  %1369 = vmatpush2.msra.mxu0 0.0
  %1370 = vmatprep.subr.mxu0 0.0
  %1371 = vmatpush2.msra.mxu0 0.0
  %1372 = vmatprep.subr.mxu0 0.0
  %1373 = vmatpush2.msra.mxu0 0.0
  %1374 = vmatprep.subr.mxu0 0.0
  %1375 = vmatpush2.msra.mxu0 0.0
  %1376 = vmatprep.subr.mxu0 0.0
  %1377 = vmatpush2.msra.mxu0 0.0
  %1378 = vmatprep.subr.mxu0 0.0
  %1379 = vmatpush2.msra.mxu0 0.0
  %1380 = vmatprep.subr.mxu0 0.0
  %1381 = vmatpush2.msra.mxu0 0.0
  %1382 = vmatprep.subr.mxu0 0.0
  %1383 = vmatpush2.msra.mxu0 0.0
  %1384 = vmatprep.subr.mxu0 0.0
  %1385 = vmatpush2.msra.mxu0 0.0
  %1386 = vmatprep.subr.mxu0 0.0
  %1387 = vmatpush2.msra.mxu0 0.0
  %1388 = vmatprep.subr.mxu0 0.0
  %1389 = vmatpush2.msra.mxu0 0.0
  %1390 = vmatprep.subr.mxu0 0.0
  %1391 = vmatpush2.msra.mxu0 0.0
  %1392 = vmatprep.subr.mxu0 0.0
  %1393 = vmatpush2.msra.mxu0 0.0
  %1394 = vmatprep.subr.mxu0 0.0
  %1395 = vmatpush2.msra.mxu0 0.0
  %1396 = vmatprep.subr.mxu0 0.0
  %1397 = vmatpush2.msra.mxu0 0.0
  %1398 = vmatprep.subr.mxu0 0.0
  %1399 = vmatpush2.msra.mxu0 0.0
  %1400 = vmatprep.mubr.f32.mxu0 0.0
  %1401 = vmatmul.mubr.f32.gmra.mxu0 %v1334
  %v1402 = vpop.f32.mrf.mxu0
  %v1403 = vadd.f32 %v1332, %v1402
  %v1404 = vpop.f32.mrf.mxu0
  %v1405 = vadd.f32 %v1332, %v1404
  %1406 = vdwg.mxu0
  %1407 = vmatprep.subr.mxu0 0.0
  %1408 = vmatpush1.msra.mxu0 0.0
  %1409 = vmatprep.subr.mxu0 0.0
  %1410 = vmatpush1.msra.mxu0 0.0
  %1411 = vmatprep.subr.mxu0 0.0
  %1412 = vmatpush1.msra.mxu0 0.0
  %1413 = vmatprep.subr.mxu0 0.0
  %1414 = vmatpush1.msra.mxu0 0.0
  %1415 = vmatprep.subr.mxu0 0.0
  %1416 = vmatpush1.msra.mxu0 0.0
  %1417 = vmatprep.subr.mxu0 0.0
  %1418 = vmatpush1.msra.mxu0 0.0
  %1419 = vmatprep.subr.mxu0 0.0
  %1420 = vmatpush1.msra.mxu0 0.0
  %1421 = vmatprep.subr.mxu0 %v1328
  %1422 = vmatpush1.msra.mxu0 %v1327
  %1423 = vmatprep.subr.mxu0 %v1324
  %1424 = vmatpush1.msra.mxu0 %v1323
  %1425 = vmatprep.subr.mxu0 %v1320
  %1426 = vmatpush1.msra.mxu0 %v1319
  %1427 = vmatprep.subr.mxu0 %v1316
  %1428 = vmatpush1.msra.mxu0 %v1315
  %1429 = vmatprep.subr.mxu0 %v1312
  %1430 = vmatpush1.msra.mxu0 %v1311
  %1431 = vmatprep.subr.mxu0 %v1308
  %1432 = vmatpush1.msra.mxu0 %v1307
  %1433 = vmatprep.subr.mxu0 %v1304
  %1434 = vmatpush1.msra.mxu0 %v1303
  %1435 = vmatprep.subr.mxu0 %v1300
  %1436 = vmatpush1.msra.mxu0 %v1299
  %1437 = vmatprep.subr.mxu0 %v1296
  %1438 = vmatpush1.msra.mxu0 %v1295
  %1439 = vmatprep.subr.mxu0 0.0
  %1440 = vmatpush2.msra.mxu0 0.0
  %1441 = vmatprep.subr.mxu0 0.0
  %1442 = vmatpush2.msra.mxu0 0.0
  %1443 = vmatprep.subr.mxu0 0.0
  %1444 = vmatpush2.msra.mxu0 0.0
  %1445 = vmatprep.subr.mxu0 0.0
  %1446 = vmatpush2.msra.mxu0 0.0
  %1447 = vmatprep.subr.mxu0 0.0
  %1448 = vmatpush2.msra.mxu0 0.0
  %1449 = vmatprep.subr.mxu0 0.0
  %1450 = vmatpush2.msra.mxu0 0.0
  %1451 = vmatprep.subr.mxu0 0.0
  %1452 = vmatpush2.msra.mxu0 0.0
  %1453 = vmatprep.subr.mxu0 0.0
  %1454 = vmatpush2.msra.mxu0 0.0
  %1455 = vmatprep.subr.mxu0 0.0
  %1456 = vmatpush2.msra.mxu0 0.0
  %1457 = vmatprep.subr.mxu0 0.0
  %1458 = vmatpush2.msra.mxu0 0.0
  %1459 = vmatprep.subr.mxu0 0.0
  %1460 = vmatpush2.msra.mxu0 0.0
  %1461 = vmatprep.subr.mxu0 0.0
  %1462 = vmatpush2.msra.mxu0 0.0
  %1463 = vmatprep.subr.mxu0 0.0
  %1464 = vmatpush2.msra.mxu0 0.0
  %1465 = vmatprep.subr.mxu0 0.0
  %1466 = vmatpush2.msra.mxu0 0.0
  %1467 = vmatprep.subr.mxu0 0.0
  %1468 = vmatpush2.msra.mxu0 0.0
  %1469 = vmatprep.subr.mxu0 0.0
  %1470 = vmatpush2.msra.mxu0 0.0
  %1471 = vmatprep.mubr.f32.mxu0 0.0
  %1472 = vmatmul.mubr.f32.gmra.mxu0 %v1334
  %v1473 = vpop.f32.mrf.mxu0
  %v1474 = vadd.f32 %v1332, %v1473
  %v1475 = vpop.f32.mrf.mxu0
  %v1476 = vadd.f32 %v1332, %v1475
  %1477 = vdwg.mxu0
  %v1478 = vmax.f32 %v1403, 0.0
  %v1479 = vmax.f32 %v1405, 0.0
  %v1480 = vmax.f32 %v1474, 0.0
  %v1481 = vmax.f32 %v1476, 0.0
  %1484 = vrot.lane.b32.xlu0 %v1478, 64
  %v1485 = vpop.permute.xlu0 %1484
  %1486 = vrot.lane.b32.xlu0 %v1479, 64
  %v1487 = vpop.permute.xlu0 %1486
  %v1488 = vsel %vm77, %v1485, %v1487
  %1492 = vst.msk [vmem:[#allocation2] sm:$0xff] %vm659, %v1485
  %1493 = vst [vmem:[#allocation2 + $0x8] sm:$0xff] %v1488
  %1494 = vst.msk [vmem:[#allocation2 + $0x10] sm:$0xff] %vm77, %v1487
  %1497 = vrot.lane.b32.xlu0 %v1480, 64
  %v1498 = vpop.permute.xlu0 %1497
  %1499 = vrot.lane.b32.xlu0 %v1481, 64
  %v1500 = vpop.permute.xlu0 %1499
  %v1501 = vsel %vm77, %v1498, %v1500
  %1505 = vst.msk [vmem:[#allocation2 + $0x18] sm:$0xff] %vm659, %v1498
  %1506 = vst [vmem:[#allocation2 + $0x20] sm:$0xff] %v1501
  %1507 = vst.msk [vmem:[#allocation2 + $0x28] sm:$0xff] %vm77, %v1500
  %v1508 = vld [vmem:[#allocation2] sm:$0xff]
  %v1509 = vld [vmem:[#allocation2 + $0x8] sm:$0xff]
  %v1510 = vld [vmem:[#allocation2 + $0x10] sm:$0xff]
  %v1511 = vld [vmem:[#allocation2 + $0x30] sm:$0xff]
  %v1512 = vld [vmem:[#allocation2 + $0x38] sm:$0xff]
  %v1513 = vld [vmem:[#allocation2 + $0x40] sm:$0xff]
  %1520 = vrot.lane.b32.xlu0 %v1508, 81
  %v1521 = vpop.permute.xlu0 %1520
  %1522 = vrot.lane.b32.xlu0 %v1509, 81
  %v1523 = vpop.permute.xlu0 %1522
  %1524 = vrot.lane.b32.xlu0 %v1510, 81
  %v1525 = vpop.permute.xlu0 %1524
  %1526 = vrot.lane.b32.xlu0 %v1511, 81
  %v1527 = vpop.permute.xlu0 %1526
  %1528 = vrot.lane.b32.xlu0 %v1512, 81
  %v1529 = vpop.permute.xlu0 %1528
  %1530 = vrot.lane.b32.xlu0 %v1513, 81
  %v1531 = vpop.permute.xlu0 %1530
  %v1532 = vsel %vm114, %v1521, %v1523
  %v1533 = vsel %vm114, %v1523, %v1525
  %v1534 = vsel %vm114, %v1527, %v1529
  %v1535 = vsel %vm114, %v1529, %v1531
  %v1540 = vsel %vm32, %v1532, 0.0
  %v1541 = vsel %vm33, %v1533, 0.0
  %v1542 = vsel %vm32, %v1534, 0.0
  %v1543 = vsel %vm33, %v1535, 0.0
  %1544 = vst [vmem:[#allocation3] sm:$0xff] %v1540
  %1545 = vst [vmem:[#allocation3 + $0x8] sm:$0xff] %v1541
  %1546 = vst [vmem:[#allocation3 + $0x20] sm:$0xff] %v1542
  %1547 = vst [vmem:[#allocation3 + $0x28] sm:$0xff] %v1543
  %v1548 = vld [vmem:[#allocation2 + $0x18] sm:$0xff]
  %v1549 = vld [vmem:[#allocation2 + $0x20] sm:$0xff]
  %v1550 = vld [vmem:[#allocation2 + $0x28] sm:$0xff]
  %v1551 = vld [vmem:[#allocation2 + $0x48] sm:$0xff]
  %v1552 = vld [vmem:[#allocation2 + $0x50] sm:$0xff]
  %v1553 = vld [vmem:[#allocation2 + $0x58] sm:$0xff]
  %1560 = vrot.lane.b32.xlu0 %v1548, 81
  %v1561 = vpop.permute.xlu0 %1560
  %1562 = vrot.lane.b32.xlu0 %v1549, 81
  %v1563 = vpop.permute.xlu0 %1562
  %1564 = vrot.lane.b32.xlu0 %v1550, 81
  %v1565 = vpop.permute.xlu0 %1564
  %1566 = vrot.lane.b32.xlu0 %v1551, 81
  %v1567 = vpop.permute.xlu0 %1566
  %1568 = vrot.lane.b32.xlu0 %v1552, 81
  %v1569 = vpop.permute.xlu0 %1568
  %1570 = vrot.lane.b32.xlu0 %v1553, 81
  %v1571 = vpop.permute.xlu0 %1570
  %v1572 = vsel %vm114, %v1561, %v1563
  %v1573 = vsel %vm114, %v1563, %v1565
  %v1574 = vsel %vm114, %v1567, %v1569
  %v1575 = vsel %vm114, %v1569, %v1571
  %v1580 = vsel %vm32, %v1572, 0.0
  %v1581 = vsel %vm33, %v1573, 0.0
  %v1582 = vsel %vm32, %v1574, 0.0
  %v1583 = vsel %vm33, %v1575, 0.0
  %1584 = vst [vmem:[#allocation3 + $0x10] sm:$0xff] %v1580
  %1585 = vst [vmem:[#allocation3 + $0x18] sm:$0xff] %v1581
  %1586 = vst [vmem:[#allocation3 + $0x30] sm:$0xff] %v1582
  %1587 = vst [vmem:[#allocation3 + $0x38] sm:$0xff] %v1583
  %v1588 = vld [vmem:[#allocation2] sm:$0xff]
  %v1589 = vld [vmem:[#allocation2 + $0x8] sm:$0xff]
  %v1590 = vld [vmem:[#allocation2 + $0x10] sm:$0xff]
  %v1591 = vld [vmem:[#allocation2 + $0x30] sm:$0xff]
  %v1592 = vld [vmem:[#allocation2 + $0x38] sm:$0xff]
  %v1593 = vld [vmem:[#allocation2 + $0x40] sm:$0xff]
  %1600 = vrot.lane.b32.xlu0 %v1588, 80
  %v1601 = vpop.permute.xlu0 %1600
  %1602 = vrot.lane.b32.xlu0 %v1589, 80
  %v1603 = vpop.permute.xlu0 %1602
  %1604 = vrot.lane.b32.xlu0 %v1590, 80
  %v1605 = vpop.permute.xlu0 %1604
  %1606 = vrot.lane.b32.xlu0 %v1591, 80
  %v1607 = vpop.permute.xlu0 %1606
  %1608 = vrot.lane.b32.xlu0 %v1592, 80
  %v1609 = vpop.permute.xlu0 %1608
  %1610 = vrot.lane.b32.xlu0 %v1593, 80
  %v1611 = vpop.permute.xlu0 %1610
  %v1612 = vsel %vm155, %v1601, %v1603
  %v1613 = vsel %vm155, %v1603, %v1605
  %v1614 = vsel %vm155, %v1607, %v1609
  %v1615 = vsel %vm155, %v1609, %v1611
  %1620 = vst [vmem:[#allocation3 + $0x40] sm:$0xff] %v1612
  %1621 = vst [vmem:[#allocation3 + $0x48] sm:$0xff] %v1613
  %1622 = vst [vmem:[#allocation3 + $0x60] sm:$0xff] %v1614
  %1623 = vst [vmem:[#allocation3 + $0x68] sm:$0xff] %v1615
  %v1624 = vld [vmem:[#allocation2 + $0x18] sm:$0xff]
  %v1625 = vld [vmem:[#allocation2 + $0x20] sm:$0xff]
  %v1626 = vld [vmem:[#allocation2 + $0x28] sm:$0xff]
  %v1627 = vld [vmem:[#allocation2 + $0x48] sm:$0xff]
  %v1628 = vld [vmem:[#allocation2 + $0x50] sm:$0xff]
  %v1629 = vld [vmem:[#allocation2 + $0x58] sm:$0xff]
  %1636 = vrot.lane.b32.xlu0 %v1624, 80
  %v1637 = vpop.permute.xlu0 %1636
  %1638 = vrot.lane.b32.xlu0 %v1625, 80
  %v1639 = vpop.permute.xlu0 %1638
  %1640 = vrot.lane.b32.xlu0 %v1626, 80
  %v1641 = vpop.permute.xlu0 %1640
  %1642 = vrot.lane.b32.xlu0 %v1627, 80
  %v1643 = vpop.permute.xlu0 %1642
  %1644 = vrot.lane.b32.xlu0 %v1628, 80
  %v1645 = vpop.permute.xlu0 %1644
  %1646 = vrot.lane.b32.xlu0 %v1629, 80
  %v1647 = vpop.permute.xlu0 %1646
  %v1648 = vsel %vm155, %v1637, %v1639
  %v1649 = vsel %vm155, %v1639, %v1641
  %v1650 = vsel %vm155, %v1643, %v1645
  %v1651 = vsel %vm155, %v1645, %v1647
  %1656 = vst [vmem:[#allocation3 + $0x50] sm:$0xff] %v1648
  %1657 = vst [vmem:[#allocation3 + $0x58] sm:$0xff] %v1649
  %1658 = vst [vmem:[#allocation3 + $0x70] sm:$0xff] %v1650
  %1659 = vst [vmem:[#allocation3 + $0x78] sm:$0xff] %v1651
  %v1660 = vld [vmem:[#allocation2] sm:$0xff]
  %v1661 = vld [vmem:[#allocation2 + $0x8] sm:$0xff]
  %v1662 = vld [vmem:[#allocation2 + $0x10] sm:$0xff]
  %v1663 = vld [vmem:[#allocation2 + $0x30] sm:$0xff]
  %v1664 = vld [vmem:[#allocation2 + $0x38] sm:$0xff]
  %v1665 = vld [vmem:[#allocation2 + $0x40] sm:$0xff]
  %1672 = vrot.lane.b32.xlu0 %v1660, 79
  %v1673 = vpop.permute.xlu0 %1672
  %1674 = vrot.lane.b32.xlu0 %v1661, 79
  %v1675 = vpop.permute.xlu0 %1674
  %1676 = vrot.lane.b32.xlu0 %v1662, 79
  %v1677 = vpop.permute.xlu0 %1676
  %1678 = vrot.lane.b32.xlu0 %v1663, 79
  %v1679 = vpop.permute.xlu0 %1678
  %1680 = vrot.lane.b32.xlu0 %v1664, 79
  %v1681 = vpop.permute.xlu0 %1680
  %1682 = vrot.lane.b32.xlu0 %v1665, 79
  %v1683 = vpop.permute.xlu0 %1682
  %v1684 = vsel %vm192, %v1673, %v1675
  %v1685 = vsel %vm192, %v1675, %v1677
  %v1686 = vsel %vm192, %v1679, %v1681
  %v1687 = vsel %vm192, %v1681, %v1683
  %v1692 = vsel %vm38, %v1684, 0.0
  %v1693 = vsel %vm39, %v1685, 0.0
  %v1694 = vsel %vm38, %v1686, 0.0
  %v1695 = vsel %vm39, %v1687, 0.0
  %1696 = vst [vmem:[#allocation3 + $0x80] sm:$0xff] %v1692
  %1697 = vst [vmem:[#allocation3 + $0x88] sm:$0xff] %v1693
  %1698 = vst [vmem:[#allocation3 + $0xa0] sm:$0xff] %v1694
  %1699 = vst [vmem:[#allocation3 + $0xa8] sm:$0xff] %v1695
  %v1700 = vld [vmem:[#allocation2 + $0x18] sm:$0xff]
  %v1701 = vld [vmem:[#allocation2 + $0x20] sm:$0xff]
  %v1702 = vld [vmem:[#allocation2 + $0x28] sm:$0xff]
  %v1703 = vld [vmem:[#allocation2 + $0x48] sm:$0xff]
  %v1704 = vld [vmem:[#allocation2 + $0x50] sm:$0xff]
  %v1705 = vld [vmem:[#allocation2 + $0x58] sm:$0xff]
  %1712 = vrot.lane.b32.xlu0 %v1700, 79
  %v1713 = vpop.permute.xlu0 %1712
  %1714 = vrot.lane.b32.xlu0 %v1701, 79
  %v1715 = vpop.permute.xlu0 %1714
  %1716 = vrot.lane.b32.xlu0 %v1702, 79
  %v1717 = vpop.permute.xlu0 %1716
  %1718 = vrot.lane.b32.xlu0 %v1703, 79
  %v1719 = vpop.permute.xlu0 %1718
  %1720 = vrot.lane.b32.xlu0 %v1704, 79
  %v1721 = vpop.permute.xlu0 %1720
  %1722 = vrot.lane.b32.xlu0 %v1705, 79
  %v1723 = vpop.permute.xlu0 %1722
  %v1724 = vsel %vm192, %v1713, %v1715
  %v1725 = vsel %vm192, %v1715, %v1717
  %v1726 = vsel %vm192, %v1719, %v1721
  %v1727 = vsel %vm192, %v1721, %v1723
  %v1732 = vsel %vm38, %v1724, 0.0
  %v1733 = vsel %vm39, %v1725, 0.0
  %v1734 = vsel %vm38, %v1726, 0.0
  %v1735 = vsel %vm39, %v1727, 0.0
  %1736 = vst [vmem:[#allocation3 + $0x90] sm:$0xff] %v1732
  %1737 = vst [vmem:[#allocation3 + $0x98] sm:$0xff] %v1733
  %1738 = vst [vmem:[#allocation3 + $0xb0] sm:$0xff] %v1734
  %1739 = vst [vmem:[#allocation3 + $0xb8] sm:$0xff] %v1735
  %v1740 = vld [vmem:[#allocation2] sm:$0xff]
  %v1741 = vld [vmem:[#allocation2 + $0x8] sm:$0xff]
  %v1742 = vld [vmem:[#allocation2 + $0x10] sm:$0xff]
  %v1743 = vld [vmem:[#allocation2 + $0x30] sm:$0xff]
  %v1744 = vld [vmem:[#allocation2 + $0x38] sm:$0xff]
  %v1745 = vld [vmem:[#allocation2 + $0x40] sm:$0xff]
  %1752 = vrot.lane.b32.xlu0 %v1740, 65
  %v1753 = vpop.permute.xlu0 %1752
  %1754 = vrot.lane.b32.xlu0 %v1741, 65
  %v1755 = vpop.permute.xlu0 %1754
  %1756 = vrot.lane.b32.xlu0 %v1742, 65
  %v1757 = vpop.permute.xlu0 %1756
  %1758 = vrot.lane.b32.xlu0 %v1743, 65
  %v1759 = vpop.permute.xlu0 %1758
  %1760 = vrot.lane.b32.xlu0 %v1744, 65
  %v1761 = vpop.permute.xlu0 %1760
  %1762 = vrot.lane.b32.xlu0 %v1745, 65
  %v1763 = vpop.permute.xlu0 %1762
  %v1764 = vsel %vm233, %v1753, %v1755
  %v1765 = vsel %vm233, %v1755, %v1757
  %v1766 = vsel %vm233, %v1759, %v1761
  %v1767 = vsel %vm233, %v1761, %v1763
  %v1772 = vsel %vm32, %v1764, 0.0
  %v1773 = vsel %vm33, %v1765, 0.0
  %v1774 = vsel %vm32, %v1766, 0.0
  %v1775 = vsel %vm33, %v1767, 0.0
  %1776 = vst [vmem:[#allocation3 + $0xc0] sm:$0xff] %v1772
  %1777 = vst [vmem:[#allocation3 + $0xc8] sm:$0xff] %v1773
  %1778 = vst [vmem:[#allocation3 + $0xe0] sm:$0xff] %v1774
  %1779 = vst [vmem:[#allocation3 + $0xe8] sm:$0xff] %v1775
  %v1780 = vld [vmem:[#allocation2 + $0x18] sm:$0xff]
  %v1781 = vld [vmem:[#allocation2 + $0x20] sm:$0xff]
  %v1782 = vld [vmem:[#allocation2 + $0x28] sm:$0xff]
  %v1783 = vld [vmem:[#allocation2 + $0x48] sm:$0xff]
  %v1784 = vld [vmem:[#allocation2 + $0x50] sm:$0xff]
  %v1785 = vld [vmem:[#allocation2 + $0x58] sm:$0xff]
  %1792 = vrot.lane.b32.xlu0 %v1780, 65
  %v1793 = vpop.permute.xlu0 %1792
  %1794 = vrot.lane.b32.xlu0 %v1781, 65
  %v1795 = vpop.permute.xlu0 %1794
  %1796 = vrot.lane.b32.xlu0 %v1782, 65
  %v1797 = vpop.permute.xlu0 %1796
  %1798 = vrot.lane.b32.xlu0 %v1783, 65
  %v1799 = vpop.permute.xlu0 %1798
  %1800 = vrot.lane.b32.xlu0 %v1784, 65
  %v1801 = vpop.permute.xlu0 %1800
  %1802 = vrot.lane.b32.xlu0 %v1785, 65
  %v1803 = vpop.permute.xlu0 %1802
  %v1804 = vsel %vm233, %v1793, %v1795
  %v1805 = vsel %vm233, %v1795, %v1797
  %v1806 = vsel %vm233, %v1799, %v1801
  %v1807 = vsel %vm233, %v1801, %v1803
  %v1812 = vsel %vm32, %v1804, 0.0
  %v1813 = vsel %vm33, %v1805, 0.0
  %v1814 = vsel %vm32, %v1806, 0.0
  %v1815 = vsel %vm33, %v1807, 0.0
  %1816 = vst [vmem:[#allocation3 + $0xd0] sm:$0xff] %v1812
  %1817 = vst [vmem:[#allocation3 + $0xd8] sm:$0xff] %v1813
  %1818 = vst [vmem:[#allocation3 + $0xf0] sm:$0xff] %v1814
  %1819 = vst [vmem:[#allocation3 + $0xf8] sm:$0xff] %v1815
  %v1820 = vld [vmem:[#allocation2] sm:$0xff]
  %v1821 = vld [vmem:[#allocation2 + $0x8] sm:$0xff]
  %v1822 = vld [vmem:[#allocation2 + $0x10] sm:$0xff]
  %v1823 = vld [vmem:[#allocation2 + $0x30] sm:$0xff]
  %v1824 = vld [vmem:[#allocation2 + $0x38] sm:$0xff]
  %v1825 = vld [vmem:[#allocation2 + $0x40] sm:$0xff]
  %1832 = vrot.lane.b32.xlu0 %v1820, 64
  %v1833 = vpop.permute.xlu0 %1832
  %1834 = vrot.lane.b32.xlu0 %v1821, 64
  %v1835 = vpop.permute.xlu0 %1834
  %1836 = vrot.lane.b32.xlu0 %v1822, 64
  %v1837 = vpop.permute.xlu0 %1836
  %1838 = vrot.lane.b32.xlu0 %v1823, 64
  %v1839 = vpop.permute.xlu0 %1838
  %1840 = vrot.lane.b32.xlu0 %v1824, 64
  %v1841 = vpop.permute.xlu0 %1840
  %1842 = vrot.lane.b32.xlu0 %v1825, 64
  %v1843 = vpop.permute.xlu0 %1842
  %v1844 = vsel %vm77, %v1833, %v1835
  %v1845 = vsel %vm77, %v1835, %v1837
  %v1846 = vsel %vm77, %v1839, %v1841
  %v1847 = vsel %vm77, %v1841, %v1843
  %1852 = vst [vmem:[#allocation3 + $0x100] sm:$0xff] %v1844
  %1853 = vst [vmem:[#allocation3 + $0x108] sm:$0xff] %v1845
  %1854 = vst [vmem:[#allocation3 + $0x120] sm:$0xff] %v1846
  %1855 = vst [vmem:[#allocation3 + $0x128] sm:$0xff] %v1847
  %v1856 = vld [vmem:[#allocation2 + $0x18] sm:$0xff]
  %v1857 = vld [vmem:[#allocation2 + $0x20] sm:$0xff]
  %v1858 = vld [vmem:[#allocation2 + $0x28] sm:$0xff]
  %v1859 = vld [vmem:[#allocation2 + $0x48] sm:$0xff]
  %v1860 = vld [vmem:[#allocation2 + $0x50] sm:$0xff]
  %v1861 = vld [vmem:[#allocation2 + $0x58] sm:$0xff]
  %1868 = vrot.lane.b32.xlu0 %v1856, 64
  %v1869 = vpop.permute.xlu0 %1868
  %1870 = vrot.lane.b32.xlu0 %v1857, 64
  %v1871 = vpop.permute.xlu0 %1870
  %1872 = vrot.lane.b32.xlu0 %v1858, 64
  %v1873 = vpop.permute.xlu0 %1872
  %1874 = vrot.lane.b32.xlu0 %v1859, 64
  %v1875 = vpop.permute.xlu0 %1874
  %1876 = vrot.lane.b32.xlu0 %v1860, 64
  %v1877 = vpop.permute.xlu0 %1876
  %1878 = vrot.lane.b32.xlu0 %v1861, 64
  %v1879 = vpop.permute.xlu0 %1878
  %v1880 = vsel %vm77, %v1869, %v1871
  %v1881 = vsel %vm77, %v1871, %v1873
  %v1882 = vsel %vm77, %v1875, %v1877
  %v1883 = vsel %vm77, %v1877, %v1879
  %1888 = vst [vmem:[#allocation3 + $0x110] sm:$0xff] %v1880
  %1889 = vst [vmem:[#allocation3 + $0x118] sm:$0xff] %v1881
  %1890 = vst [vmem:[#allocation3 + $0x130] sm:$0xff] %v1882
  %1891 = vst [vmem:[#allocation3 + $0x138] sm:$0xff] %v1883
  %v1892 = vld [vmem:[#allocation2] sm:$0xff]
  %v1893 = vld [vmem:[#allocation2 + $0x8] sm:$0xff]
  %v1894 = vld [vmem:[#allocation2 + $0x10] sm:$0xff]
  %v1895 = vld [vmem:[#allocation2 + $0x30] sm:$0xff]
  %v1896 = vld [vmem:[#allocation2 + $0x38] sm:$0xff]
  %v1897 = vld [vmem:[#allocation2 + $0x40] sm:$0xff]
  %1904 = vrot.lane.b32.xlu0 %v1892, 63
  %v1905 = vpop.permute.xlu0 %1904
  %1906 = vrot.lane.b32.xlu0 %v1893, 63
  %v1907 = vpop.permute.xlu0 %1906
  %1908 = vrot.lane.b32.xlu0 %v1894, 63
  %v1909 = vpop.permute.xlu0 %1908
  %1910 = vrot.lane.b32.xlu0 %v1895, 63
  %v1911 = vpop.permute.xlu0 %1910
  %1912 = vrot.lane.b32.xlu0 %v1896, 63
  %v1913 = vpop.permute.xlu0 %1912
  %1914 = vrot.lane.b32.xlu0 %v1897, 63
  %v1915 = vpop.permute.xlu0 %1914
  %v1916 = vsel %vm310, %v1905, %v1907
  %v1917 = vsel %vm310, %v1907, %v1909
  %v1918 = vsel %vm310, %v1911, %v1913
  %v1919 = vsel %vm310, %v1913, %v1915
  %v1924 = vsel %vm38, %v1916, 0.0
  %v1925 = vsel %vm39, %v1917, 0.0
  %v1926 = vsel %vm38, %v1918, 0.0
  %v1927 = vsel %vm39, %v1919, 0.0
  %1928 = vst [vmem:[#allocation3 + $0x140] sm:$0xff] %v1924
  %1929 = vst [vmem:[#allocation3 + $0x148] sm:$0xff] %v1925
  %1930 = vst [vmem:[#allocation3 + $0x160] sm:$0xff] %v1926
  %1931 = vst [vmem:[#allocation3 + $0x168] sm:$0xff] %v1927
  %v1932 = vld [vmem:[#allocation2 + $0x18] sm:$0xff]
  %v1933 = vld [vmem:[#allocation2 + $0x20] sm:$0xff]
  %v1934 = vld [vmem:[#allocation2 + $0x28] sm:$0xff]
  %v1935 = vld [vmem:[#allocation2 + $0x48] sm:$0xff]
  %v1936 = vld [vmem:[#allocation2 + $0x50] sm:$0xff]
  %v1937 = vld [vmem:[#allocation2 + $0x58] sm:$0xff]
  %1944 = vrot.lane.b32.xlu0 %v1932, 63
  %v1945 = vpop.permute.xlu0 %1944
  %1946 = vrot.lane.b32.xlu0 %v1933, 63
  %v1947 = vpop.permute.xlu0 %1946
  %1948 = vrot.lane.b32.xlu0 %v1934, 63
  %v1949 = vpop.permute.xlu0 %1948
  %1950 = vrot.lane.b32.xlu0 %v1935, 63
  %v1951 = vpop.permute.xlu0 %1950
  %1952 = vrot.lane.b32.xlu0 %v1936, 63
  %v1953 = vpop.permute.xlu0 %1952
  %1954 = vrot.lane.b32.xlu0 %v1937, 63
  %v1955 = vpop.permute.xlu0 %1954
  %v1956 = vsel %vm310, %v1945, %v1947
  %v1957 = vsel %vm310, %v1947, %v1949
  %v1958 = vsel %vm310, %v1951, %v1953
  %v1959 = vsel %vm310, %v1953, %v1955
  %v1964 = vsel %vm38, %v1956, 0.0
  %v1965 = vsel %vm39, %v1957, 0.0
  %v1966 = vsel %vm38, %v1958, 0.0
  %v1967 = vsel %vm39, %v1959, 0.0
  %1968 = vst [vmem:[#allocation3 + $0x150] sm:$0xff] %v1964
  %1969 = vst [vmem:[#allocation3 + $0x158] sm:$0xff] %v1965
  %1970 = vst [vmem:[#allocation3 + $0x170] sm:$0xff] %v1966
  %1971 = vst [vmem:[#allocation3 + $0x178] sm:$0xff] %v1967
  %v1972 = vld [vmem:[#allocation2] sm:$0xff]
  %v1973 = vld [vmem:[#allocation2 + $0x8] sm:$0xff]
  %v1974 = vld [vmem:[#allocation2 + $0x10] sm:$0xff]
  %v1975 = vld [vmem:[#allocation2 + $0x30] sm:$0xff]
  %v1976 = vld [vmem:[#allocation2 + $0x38] sm:$0xff]
  %v1977 = vld [vmem:[#allocation2 + $0x40] sm:$0xff]
  %1984 = vrot.lane.b32.xlu0 %v1972, 49
  %v1985 = vpop.permute.xlu0 %1984
  %1986 = vrot.lane.b32.xlu0 %v1973, 49
  %v1987 = vpop.permute.xlu0 %1986
  %1988 = vrot.lane.b32.xlu0 %v1974, 49
  %v1989 = vpop.permute.xlu0 %1988
  %1990 = vrot.lane.b32.xlu0 %v1975, 49
  %v1991 = vpop.permute.xlu0 %1990
  %1992 = vrot.lane.b32.xlu0 %v1976, 49
  %v1993 = vpop.permute.xlu0 %1992
  %1994 = vrot.lane.b32.xlu0 %v1977, 49
  %v1995 = vpop.permute.xlu0 %1994
  %v1996 = vsel %vm351, %v1985, %v1987
  %v1997 = vsel %vm351, %v1987, %v1989
  %v1998 = vsel %vm351, %v1991, %v1993
  %v1999 = vsel %vm351, %v1993, %v1995
  %v2004 = vsel %vm32, %v1996, 0.0
  %v2005 = vsel %vm33, %v1997, 0.0
  %v2006 = vsel %vm32, %v1998, 0.0
  %v2007 = vsel %vm33, %v1999, 0.0
  %2008 = vst [vmem:[#allocation3 + $0x180] sm:$0xff] %v2004
  %2009 = vst [vmem:[#allocation3 + $0x188] sm:$0xff] %v2005
  %2010 = vst [vmem:[#allocation3 + $0x1a0] sm:$0xff] %v2006
  %2011 = vst [vmem:[#allocation3 + $0x1a8] sm:$0xff] %v2007
  %v2012 = vld [vmem:[#allocation2 + $0x18] sm:$0xff]
  %v2013 = vld [vmem:[#allocation2 + $0x20] sm:$0xff]
  %v2014 = vld [vmem:[#allocation2 + $0x28] sm:$0xff]
  %v2015 = vld [vmem:[#allocation2 + $0x48] sm:$0xff]
  %v2016 = vld [vmem:[#allocation2 + $0x50] sm:$0xff]
  %v2017 = vld [vmem:[#allocation2 + $0x58] sm:$0xff]
  %2024 = vrot.lane.b32.xlu0 %v2012, 49
  %v2025 = vpop.permute.xlu0 %2024
  %2026 = vrot.lane.b32.xlu0 %v2013, 49
  %v2027 = vpop.permute.xlu0 %2026
  %2028 = vrot.lane.b32.xlu0 %v2014, 49
  %v2029 = vpop.permute.xlu0 %2028
  %2030 = vrot.lane.b32.xlu0 %v2015, 49
  %v2031 = vpop.permute.xlu0 %2030
  %2032 = vrot.lane.b32.xlu0 %v2016, 49
  %v2033 = vpop.permute.xlu0 %2032
  %2034 = vrot.lane.b32.xlu0 %v2017, 49
  %v2035 = vpop.permute.xlu0 %2034
  %v2036 = vsel %vm351, %v2025, %v2027
  %v2037 = vsel %vm351, %v2027, %v2029
  %v2038 = vsel %vm351, %v2031, %v2033
  %v2039 = vsel %vm351, %v2033, %v2035
  %v2044 = vsel %vm32, %v2036, 0.0
  %v2045 = vsel %vm33, %v2037, 0.0
  %v2046 = vsel %vm32, %v2038, 0.0
  %v2047 = vsel %vm33, %v2039, 0.0
  %2048 = vst [vmem:[#allocation3 + $0x190] sm:$0xff] %v2044
  %2049 = vst [vmem:[#allocation3 + $0x198] sm:$0xff] %v2045
  %2050 = vst [vmem:[#allocation3 + $0x1b0] sm:$0xff] %v2046
  %2051 = vst [vmem:[#allocation3 + $0x1b8] sm:$0xff] %v2047
  %v2052 = vld [vmem:[#allocation2] sm:$0xff]
  %v2053 = vld [vmem:[#allocation2 + $0x8] sm:$0xff]
  %v2054 = vld [vmem:[#allocation2 + $0x10] sm:$0xff]
  %v2055 = vld [vmem:[#allocation2 + $0x30] sm:$0xff]
  %v2056 = vld [vmem:[#allocation2 + $0x38] sm:$0xff]
  %v2057 = vld [vmem:[#allocation2 + $0x40] sm:$0xff]
  %2064 = vrot.lane.b32.xlu0 %v2052, 48
  %v2065 = vpop.permute.xlu0 %2064
  %2066 = vrot.lane.b32.xlu0 %v2053, 48
  %v2067 = vpop.permute.xlu0 %2066
  %2068 = vrot.lane.b32.xlu0 %v2054, 48
  %v2069 = vpop.permute.xlu0 %2068
  %2070 = vrot.lane.b32.xlu0 %v2055, 48
  %v2071 = vpop.permute.xlu0 %2070
  %2072 = vrot.lane.b32.xlu0 %v2056, 48
  %v2073 = vpop.permute.xlu0 %2072
  %2074 = vrot.lane.b32.xlu0 %v2057, 48
  %v2075 = vpop.permute.xlu0 %2074
  %v2076 = vsel %vm392, %v2065, %v2067
  %v2077 = vsel %vm392, %v2067, %v2069
  %v2078 = vsel %vm392, %v2071, %v2073
  %v2079 = vsel %vm392, %v2073, %v2075
  %2084 = vst [vmem:[#allocation3 + $0x1c0] sm:$0xff] %v2076
  %2085 = vst [vmem:[#allocation3 + $0x1c8] sm:$0xff] %v2077
  %2086 = vst [vmem:[#allocation3 + $0x1e0] sm:$0xff] %v2078
  %2087 = vst [vmem:[#allocation3 + $0x1e8] sm:$0xff] %v2079
  %v2088 = vld [vmem:[#allocation2 + $0x18] sm:$0xff]
  %v2089 = vld [vmem:[#allocation2 + $0x20] sm:$0xff]
  %v2090 = vld [vmem:[#allocation2 + $0x28] sm:$0xff]
  %v2091 = vld [vmem:[#allocation2 + $0x48] sm:$0xff]
  %v2092 = vld [vmem:[#allocation2 + $0x50] sm:$0xff]
  %v2093 = vld [vmem:[#allocation2 + $0x58] sm:$0xff]
  %2100 = vrot.lane.b32.xlu0 %v2088, 48
  %v2101 = vpop.permute.xlu0 %2100
  %2102 = vrot.lane.b32.xlu0 %v2089, 48
  %v2103 = vpop.permute.xlu0 %2102
  %2104 = vrot.lane.b32.xlu0 %v2090, 48
  %v2105 = vpop.permute.xlu0 %2104
  %2106 = vrot.lane.b32.xlu0 %v2091, 48
  %v2107 = vpop.permute.xlu0 %2106
  %2108 = vrot.lane.b32.xlu0 %v2092, 48
  %v2109 = vpop.permute.xlu0 %2108
  %2110 = vrot.lane.b32.xlu0 %v2093, 48
  %v2111 = vpop.permute.xlu0 %2110
  %v2112 = vsel %vm392, %v2101, %v2103
  %v2113 = vsel %vm392, %v2103, %v2105
  %v2114 = vsel %vm392, %v2107, %v2109
  %v2115 = vsel %vm392, %v2109, %v2111
  %2120 = vst [vmem:[#allocation3 + $0x1d0] sm:$0xff] %v2112
  %2121 = vst [vmem:[#allocation3 + $0x1d8] sm:$0xff] %v2113
  %2122 = vst [vmem:[#allocation3 + $0x1f0] sm:$0xff] %v2114
  %2123 = vst [vmem:[#allocation3 + $0x1f8] sm:$0xff] %v2115
  %v2124 = vld [vmem:[#allocation2] sm:$0xff]
  %v2125 = vld [vmem:[#allocation2 + $0x8] sm:$0xff]
  %v2126 = vld [vmem:[#allocation2 + $0x10] sm:$0xff]
  %v2127 = vld [vmem:[#allocation2 + $0x30] sm:$0xff]
  %v2128 = vld [vmem:[#allocation2 + $0x38] sm:$0xff]
  %v2129 = vld [vmem:[#allocation2 + $0x40] sm:$0xff]
  %2136 = vrot.lane.b32.xlu0 %v2124, 47
  %v2137 = vpop.permute.xlu0 %2136
  %2138 = vrot.lane.b32.xlu0 %v2125, 47
  %v2139 = vpop.permute.xlu0 %2138
  %2140 = vrot.lane.b32.xlu0 %v2126, 47
  %v2141 = vpop.permute.xlu0 %2140
  %2142 = vrot.lane.b32.xlu0 %v2127, 47
  %v2143 = vpop.permute.xlu0 %2142
  %2144 = vrot.lane.b32.xlu0 %v2128, 47
  %v2145 = vpop.permute.xlu0 %2144
  %2146 = vrot.lane.b32.xlu0 %v2129, 47
  %v2147 = vpop.permute.xlu0 %2146
  %v2148 = vsel %vm429, %v2137, %v2139
  %v2149 = vsel %vm429, %v2139, %v2141
  %v2150 = vsel %vm429, %v2143, %v2145
  %v2151 = vsel %vm429, %v2145, %v2147
  %v2156 = vsel %vm38, %v2148, 0.0
  %v2157 = vsel %vm39, %v2149, 0.0
  %v2158 = vsel %vm38, %v2150, 0.0
  %v2159 = vsel %vm39, %v2151, 0.0
  %2160 = vst [vmem:[#allocation3 + $0x200] sm:$0xff] %v2156
  %2161 = vst [vmem:[#allocation3 + $0x208] sm:$0xff] %v2157
  %2162 = vst [vmem:[#allocation3 + $0x220] sm:$0xff] %v2158
  %2163 = vst [vmem:[#allocation3 + $0x228] sm:$0xff] %v2159
  %v2164 = vld [vmem:[#allocation2 + $0x18] sm:$0xff]
  %v2165 = vld [vmem:[#allocation2 + $0x20] sm:$0xff]
  %v2166 = vld [vmem:[#allocation2 + $0x28] sm:$0xff]
  %v2167 = vld [vmem:[#allocation2 + $0x48] sm:$0xff]
  %v2168 = vld [vmem:[#allocation2 + $0x50] sm:$0xff]
  %v2169 = vld [vmem:[#allocation2 + $0x58] sm:$0xff]
  %2176 = vrot.lane.b32.xlu0 %v2164, 47
  %v2177 = vpop.permute.xlu0 %2176
  %2178 = vrot.lane.b32.xlu0 %v2165, 47
  %v2179 = vpop.permute.xlu0 %2178
  %2180 = vrot.lane.b32.xlu0 %v2166, 47
  %v2181 = vpop.permute.xlu0 %2180
  %2182 = vrot.lane.b32.xlu0 %v2167, 47
  %v2183 = vpop.permute.xlu0 %2182
  %2184 = vrot.lane.b32.xlu0 %v2168, 47
  %v2185 = vpop.permute.xlu0 %2184
  %2186 = vrot.lane.b32.xlu0 %v2169, 47
  %v2187 = vpop.permute.xlu0 %2186
  %v2188 = vsel %vm429, %v2177, %v2179
  %v2189 = vsel %vm429, %v2179, %v2181
  %v2190 = vsel %vm429, %v2183, %v2185
  %v2191 = vsel %vm429, %v2185, %v2187
  %v2196 = vsel %vm38, %v2188, 0.0
  %v2197 = vsel %vm39, %v2189, 0.0
  %v2198 = vsel %vm38, %v2190, 0.0
  %v2199 = vsel %vm39, %v2191, 0.0
  %2200 = vst [vmem:[#allocation3 + $0x210] sm:$0xff] %v2196
  %2201 = vst [vmem:[#allocation3 + $0x218] sm:$0xff] %v2197
  %2202 = vst [vmem:[#allocation3 + $0x230] sm:$0xff] %v2198
  %2203 = vst [vmem:[#allocation3 + $0x238] sm:$0xff] %v2199
  %v2204 = vld [vmem:[%s1 + $0x20] sm:$0xff]
  %v2205 = vld [vmem:[%s1 + $0x28] sm:$0xff]
  %v2206 = vld [vmem:[#allocation3] sm:$0xff]
  %v2207 = vld [vmem:[#allocation3 + $0x8] sm:$0xff]
  %v2208 = vld [vmem:[#allocation3 + $0x10] sm:$0xff]
  %v2209 = vld [vmem:[#allocation3 + $0x18] sm:$0xff]
  %v2210 = vld [vmem:[#allocation3 + $0x20] sm:$0xff]
  %v2211 = vld [vmem:[#allocation3 + $0x28] sm:$0xff]
  %v2212 = vld [vmem:[#allocation3 + $0x30] sm:$0xff]
  %v2213 = vld [vmem:[#allocation3 + $0x38] sm:$0xff]
  %v2214 = vld [vmem:[#allocation3 + $0x40] sm:$0xff]
  %v2215 = vld [vmem:[#allocation3 + $0x48] sm:$0xff]
  %v2216 = vld [vmem:[#allocation3 + $0x50] sm:$0xff]
  %v2217 = vld [vmem:[#allocation3 + $0x58] sm:$0xff]
  %v2218 = vld [vmem:[#allocation3 + $0x60] sm:$0xff]
  %v2219 = vld [vmem:[#allocation3 + $0x68] sm:$0xff]
  %v2220 = vld [vmem:[#allocation3 + $0x70] sm:$0xff]
  %v2221 = vld [vmem:[#allocation3 + $0x78] sm:$0xff]
  %v2222 = vld [vmem:[#allocation3 + $0x80] sm:$0xff]
  %v2223 = vld [vmem:[#allocation3 + $0x88] sm:$0xff]
  %v2224 = vld [vmem:[#allocation3 + $0x90] sm:$0xff]
  %v2225 = vld [vmem:[#allocation3 + $0x98] sm:$0xff]
  %v2226 = vld [vmem:[#allocation3 + $0xa0] sm:$0xff]
  %v2227 = vld [vmem:[#allocation3 + $0xa8] sm:$0xff]
  %v2228 = vld [vmem:[#allocation3 + $0xb0] sm:$0xff]
  %v2229 = vld [vmem:[#allocation3 + $0xb8] sm:$0xff]
  %v2230 = vld [vmem:[#allocation3 + $0xc0] sm:$0xff]
  %v2231 = vld [vmem:[#allocation3 + $0xc8] sm:$0xff]
  %v2232 = vld [vmem:[#allocation3 + $0xd0] sm:$0xff]
  %v2233 = vld [vmem:[#allocation3 + $0xd8] sm:$0xff]
  %v2234 = vld [vmem:[#allocation3 + $0xe0] sm:$0xff]
  %v2235 = vld [vmem:[#allocation3 + $0xe8] sm:$0xff]
  %v2236 = vld [vmem:[#allocation3 + $0xf0] sm:$0xff]
  %v2237 = vld [vmem:[#allocation3 + $0xf8] sm:$0xff]
  %v2238 = vld [vmem:[#allocation3 + $0x100] sm:$0xff]
  %v2239 = vld [vmem:[#allocation3 + $0x108] sm:$0xff]
  %v2240 = vld [vmem:[#allocation3 + $0x110] sm:$0xff]
  %v2241 = vld [vmem:[#allocation3 + $0x118] sm:$0xff]
  %v2242 = vld [vmem:[#allocation3 + $0x120] sm:$0xff]
  %v2243 = vld [vmem:[#allocation3 + $0x128] sm:$0xff]
  %v2244 = vld [vmem:[#allocation3 + $0x130] sm:$0xff]
  %v2245 = vld [vmem:[#allocation3 + $0x138] sm:$0xff]
  %v2246 = vld [vmem:[#allocation3 + $0x140] sm:$0xff]
  %v2247 = vld [vmem:[#allocation3 + $0x148] sm:$0xff]
  %v2248 = vld [vmem:[#allocation3 + $0x150] sm:$0xff]
  %v2249 = vld [vmem:[#allocation3 + $0x158] sm:$0xff]
  %v2250 = vld [vmem:[#allocation3 + $0x160] sm:$0xff]
  %v2251 = vld [vmem:[#allocation3 + $0x168] sm:$0xff]
  %v2252 = vld [vmem:[#allocation3 + $0x170] sm:$0xff]
  %v2253 = vld [vmem:[#allocation3 + $0x178] sm:$0xff]
  %v2254 = vld [vmem:[#allocation3 + $0x180] sm:$0xff]
  %v2255 = vld [vmem:[#allocation3 + $0x188] sm:$0xff]
  %v2256 = vld [vmem:[#allocation3 + $0x190] sm:$0xff]
  %v2257 = vld [vmem:[#allocation3 + $0x198] sm:$0xff]
  %v2258 = vld [vmem:[#allocation3 + $0x1a0] sm:$0xff]
  %v2259 = vld [vmem:[#allocation3 + $0x1a8] sm:$0xff]
  %v2260 = vld [vmem:[#allocation3 + $0x1b0] sm:$0xff]
  %v2261 = vld [vmem:[#allocation3 + $0x1b8] sm:$0xff]
  %v2262 = vld [vmem:[#allocation3 + $0x1c0] sm:$0xff]
  %v2263 = vld [vmem:[#allocation3 + $0x1c8] sm:$0xff]
  %v2264 = vld [vmem:[#allocation3 + $0x1d0] sm:$0xff]
  %v2265 = vld [vmem:[#allocation3 + $0x1d8] sm:$0xff]
  %v2266 = vld [vmem:[#allocation3 + $0x1e0] sm:$0xff]
  %v2267 = vld [vmem:[#allocation3 + $0x1e8] sm:$0xff]
  %v2268 = vld [vmem:[#allocation3 + $0x1f0] sm:$0xff]
  %v2269 = vld [vmem:[#allocation3 + $0x1f8] sm:$0xff]
  %v2270 = vld [vmem:[#allocation3 + $0x200] sm:$0xff]
  %v2271 = vld [vmem:[#allocation3 + $0x208] sm:$0xff]
  %v2272 = vld [vmem:[#allocation3 + $0x210] sm:$0xff]
  %v2273 = vld [vmem:[#allocation3 + $0x218] sm:$0xff]
  %v2274 = vld [vmem:[#allocation3 + $0x220] sm:$0xff]
  %v2275 = vld [vmem:[#allocation3 + $0x228] sm:$0xff]
  %v2276 = vld [vmem:[#allocation3 + $0x230] sm:$0xff]
  %v2277 = vld [vmem:[#allocation3 + $0x238] sm:$0xff]
  %2279 = vset.pattern.permute.xlu0 16
  %2280 = vperm.xlu0 %2279, %v2205
  %v2281 = vpop.permute.xlu0 %2280
  %vm2283 = vcmask 130048
  %v2284 = vsel %vm2283, %v2205, 0
  %2286 = vmatprep.subr.mxu0 %v2267
  %2287 = vmatpush1.msra.mxu0 %v2266
  %2288 = vmatprep.subr.mxu0 %v2263
  %2289 = vmatpush1.msra.mxu0 %v2262
  %2290 = vmatprep.subr.mxu0 %v2259
  %2291 = vmatpush1.msra.mxu0 %v2258
  %2292 = vmatprep.subr.mxu0 %v2255
  %2293 = vmatpush1.msra.mxu0 %v2254
  %2294 = vmatprep.subr.mxu0 %v2251
  %2295 = vmatpush1.msra.mxu0 %v2250
  %2296 = vmatprep.subr.mxu0 %v2247
  %2297 = vmatpush1.msra.mxu0 %v2246
  %2298 = vmatprep.subr.mxu0 %v2243
  %2299 = vmatpush1.msra.mxu0 %v2242
  %2300 = vmatprep.subr.mxu0 %v2239
  %2301 = vmatpush1.msra.mxu0 %v2238
  %2302 = vmatprep.subr.mxu0 %v2235
  %2303 = vmatpush1.msra.mxu0 %v2234
  %2304 = vmatprep.subr.mxu0 %v2231
  %2305 = vmatpush1.msra.mxu0 %v2230
  %2306 = vmatprep.subr.mxu0 %v2227
  %2307 = vmatpush1.msra.mxu0 %v2226
  %2308 = vmatprep.subr.mxu0 %v2223
  %2309 = vmatpush1.msra.mxu0 %v2222
  %2310 = vmatprep.subr.mxu0 %v2219
  %2311 = vmatpush1.msra.mxu0 %v2218
  %2312 = vmatprep.subr.mxu0 %v2215
  %2313 = vmatpush1.msra.mxu0 %v2214
  %2314 = vmatprep.subr.mxu0 %v2211
  %2315 = vmatpush1.msra.mxu0 %v2210
  %2316 = vmatprep.subr.mxu0 %v2207
  %2317 = vmatpush1.msra.mxu0 %v2206
  %2318 = vmatprep.subr.mxu0 0.0
  %2319 = vmatpush2.msra.mxu0 0.0
  %2320 = vmatprep.subr.mxu0 0.0
  %2321 = vmatpush2.msra.mxu0 0.0
  %2322 = vmatprep.subr.mxu0 0.0
  %2323 = vmatpush2.msra.mxu0 0.0
  %2324 = vmatprep.subr.mxu0 0.0
  %2325 = vmatpush2.msra.mxu0 0.0
  %2326 = vmatprep.subr.mxu0 0.0
  %2327 = vmatpush2.msra.mxu0 0.0
  %2328 = vmatprep.subr.mxu0 0.0
  %2329 = vmatpush2.msra.mxu0 0.0
  %2330 = vmatprep.subr.mxu0 0.0
  %2331 = vmatpush2.msra.mxu0 0.0
  %2332 = vmatprep.subr.mxu0 0.0
  %2333 = vmatpush2.msra.mxu0 0.0
  %2334 = vmatprep.subr.mxu0 0.0
  %2335 = vmatpush2.msra.mxu0 0.0
  %2336 = vmatprep.subr.mxu0 0.0
  %2337 = vmatpush2.msra.mxu0 0.0
  %2338 = vmatprep.subr.mxu0 0.0
  %2339 = vmatpush2.msra.mxu0 0.0
  %2340 = vmatprep.subr.mxu0 0.0
  %2341 = vmatpush2.msra.mxu0 0.0
  %2342 = vmatprep.subr.mxu0 0.0
  %2343 = vmatpush2.msra.mxu0 0.0
  %2344 = vmatprep.subr.mxu0 0.0
  %2345 = vmatpush2.msra.mxu0 0.0
  %2346 = vmatprep.subr.mxu0 %v2275
  %2347 = vmatpush2.msra.mxu0 %v2274
  %2348 = vmatprep.subr.mxu0 %v2271
  %2349 = vmatpush2.msra.mxu0 %v2270
  %2350 = vmatprep.mubr.f32.mxu0 %v2284
  %2351 = vmatmul.mubr.f32.gmra.mxu0 %v2204
  %v2352 = vpop.f32.mrf.mxu0
  %v2353 = vadd.f32 %v2281, %v2352
  %v2354 = vpop.f32.mrf.mxu0
  %v2355 = vadd.f32 %v2281, %v2354
  %2356 = vdwg.mxu0
  %2357 = vmatprep.subr.mxu0 %v2269
  %2358 = vmatpush1.msra.mxu0 %v2268
  %2359 = vmatprep.subr.mxu0 %v2265
  %2360 = vmatpush1.msra.mxu0 %v2264
  %2361 = vmatprep.subr.mxu0 %v2261
  %2362 = vmatpush1.msra.mxu0 %v2260
  %2363 = vmatprep.subr.mxu0 %v2257
  %2364 = vmatpush1.msra.mxu0 %v2256
  %2365 = vmatprep.subr.mxu0 %v2253
  %2366 = vmatpush1.msra.mxu0 %v2252
  %2367 = vmatprep.subr.mxu0 %v2249
  %2368 = vmatpush1.msra.mxu0 %v2248
  %2369 = vmatprep.subr.mxu0 %v2245
  %2370 = vmatpush1.msra.mxu0 %v2244
  %2371 = vmatprep.subr.mxu0 %v2241
  %2372 = vmatpush1.msra.mxu0 %v2240
  %2373 = vmatprep.subr.mxu0 %v2237
  %2374 = vmatpush1.msra.mxu0 %v2236
  %2375 = vmatprep.subr.mxu0 %v2233
  %2376 = vmatpush1.msra.mxu0 %v2232
  %2377 = vmatprep.subr.mxu0 %v2229
  %2378 = vmatpush1.msra.mxu0 %v2228
  %2379 = vmatprep.subr.mxu0 %v2225
  %2380 = vmatpush1.msra.mxu0 %v2224
  %2381 = vmatprep.subr.mxu0 %v2221
  %2382 = vmatpush1.msra.mxu0 %v2220
  %2383 = vmatprep.subr.mxu0 %v2217
  %2384 = vmatpush1.msra.mxu0 %v2216
  %2385 = vmatprep.subr.mxu0 %v2213
  %2386 = vmatpush1.msra.mxu0 %v2212
  %2387 = vmatprep.subr.mxu0 %v2209
  %2388 = vmatpush1.msra.mxu0 %v2208
  %2389 = vmatprep.subr.mxu0 0.0
  %2390 = vmatpush2.msra.mxu0 0.0
  %2391 = vmatprep.subr.mxu0 0.0
  %2392 = vmatpush2.msra.mxu0 0.0
  %2393 = vmatprep.subr.mxu0 0.0
  %2394 = vmatpush2.msra.mxu0 0.0
  %2395 = vmatprep.subr.mxu0 0.0
  %2396 = vmatpush2.msra.mxu0 0.0
  %2397 = vmatprep.subr.mxu0 0.0
  %2398 = vmatpush2.msra.mxu0 0.0
  %2399 = vmatprep.subr.mxu0 0.0
  %2400 = vmatpush2.msra.mxu0 0.0
  %2401 = vmatprep.subr.mxu0 0.0
  %2402 = vmatpush2.msra.mxu0 0.0
  %2403 = vmatprep.subr.mxu0 0.0
  %2404 = vmatpush2.msra.mxu0 0.0
  %2405 = vmatprep.subr.mxu0 0.0
  %2406 = vmatpush2.msra.mxu0 0.0
  %2407 = vmatprep.subr.mxu0 0.0
  %2408 = vmatpush2.msra.mxu0 0.0
  %2409 = vmatprep.subr.mxu0 0.0
  %2410 = vmatpush2.msra.mxu0 0.0
  %2411 = vmatprep.subr.mxu0 0.0
  %2412 = vmatpush2.msra.mxu0 0.0
  %2413 = vmatprep.subr.mxu0 0.0
  %2414 = vmatpush2.msra.mxu0 0.0
  %2415 = vmatprep.subr.mxu0 0.0
  %2416 = vmatpush2.msra.mxu0 0.0
  %2417 = vmatprep.subr.mxu0 %v2277
  %2418 = vmatpush2.msra.mxu0 %v2276
  %2419 = vmatprep.subr.mxu0 %v2273
  %2420 = vmatpush2.msra.mxu0 %v2272
  %2421 = vmatprep.mubr.f32.mxu0 %v2284
  %2422 = vmatmul.mubr.f32.gmra.mxu0 %v2204
  %v2423 = vpop.f32.mrf.mxu0
  %v2424 = vadd.f32 %v2281, %v2423
  %v2425 = vpop.f32.mrf.mxu0
  %v2426 = vadd.f32 %v2281, %v2425
  %2427 = vdwg.mxu0
  %2428 = vst [vmem:[%s2] sm:$0xff] %v2353
  %2429 = vst [vmem:[%s2 + $0x8] sm:$0xff] %v2355
  %2430 = vst [vmem:[%s2 + $0x10] sm:$0xff] %v2424
  %2431 = vst [vmem:[%s2 + $0x18] sm:$0xff] %v2426
  // Predicated region
  $region10: #{model2_forward.1} parent=0 // pred_check
    _
  $region11: #{model2_forward.1} parent=0 // pred_check_branch
    %2433 = sbr.rel (0) target = $region13
  $region12: #{model2_forward.1} parent=0 // pred_region
    _
  $region13: #{model2_forward.1} parent=0 // pred_fallthru
    _
  // Predicated region
  $region14: #{model2_forward.1} parent=0 // pred_check
    _
  $region15: #{model2_forward.1} parent=0 // pred_check_branch
    %2435 = sbr.rel (0) target = $region17
  $region16: #{model2_forward.1} parent=0 // pred_region
    _
  $region17: #{model2_forward.1} parent=0 // pred_fallthru
    _

</llo_original>
